<compile_context>
chip_gen: v5e
topology: v5e:2x2
jax: 0.10.0
libtpu: 0.0.40
codegen_flags: <defaults>
</compile_context>

<pallas_src>
import math

import jax
import jax.numpy as jnp
from jax import lax
from jax.experimental import pallas as pl
from jax.experimental.pallas import tpu as pltpu

# Small, lane-friendly dims consistent with the module (d_model, layers_num=2).
D_MODEL = 128
LAYERS = 2
VOCAB = 384        # stand-in for tokenizer.vocab_size
T_DEC = 8          # decoder input length (batch_first, batch=1)
S_Q = 8            # question (encoder) sequence length
LN_EPS = 1e-5      # nn.LayerNorm default eps


def _layer_norm(x, g, b):
    mu = jnp.mean(x, axis=-1, keepdims=True)
    var = jnp.mean((x - mu) ** 2, axis=-1, keepdims=True)
    return (x - mu) * lax.rsqrt(var + LN_EPS) * g + b


def decoder_kernel(ids_ref,                                   # SMEM (T,)
                   emb_hbm,                                   # ANY  (V, d) f32
                   ln_d_g_ref, ln_d_b_ref,
                   w_ih0_ref, b0_ref,
                   w_f_ref, b1_ref,
                   hc_in_ref,
                   ln_a_g_ref, ln_a_b_ref, b_proj_ref,
                   w_d_hbm, w_e_hbm, q_hbm, w_proj_hbm,       # ANY (late-use)
                   dout_ref, hc_out_ref, a_out_ref,           # outputs
                   emb_buf, wd_buf, we_buf, q_buf, wp_buf,    # VMEM scratch
                   emb_sem, late_sem):                        # DMA semaphores
    d = D_MODEL
    bf16 = jnp.bfloat16

    # ---- embedding lookup: 8 tiny dynamic-row DMAs (ids live in SMEM) ----
    emb_copies = []
    for t in range(T_DEC):
        cp = pltpu.make_async_copy(emb_hbm.at[pl.ds(ids_ref[t], 1), :],
                                   emb_buf.at[pl.ds(t, 1), :],
                                   emb_sem.at[t])
        cp.start()
        emb_copies.append(cp)

    # ---- late-use attention/projection tensors: overlap DMA with recurrence ----
    late_copies = [
        pltpu.make_async_copy(w_d_hbm, wd_buf, late_sem.at[0]),
        pltpu.make_async_copy(w_e_hbm, we_buf, late_sem.at[1]),
        pltpu.make_async_copy(q_hbm, q_buf, late_sem.at[2]),
        pltpu.make_async_copy(w_proj_hbm, wp_buf, late_sem.at[3]),
    ]
    for cp in late_copies:
        cp.start()

    for cp in emb_copies:
        cp.wait()

    # TODO(synk): nn.Dropout layers are treated as identity (inference mode).
    x_seq = _layer_norm(emb_buf[...], ln_d_g_ref[...], ln_d_b_ref[...])   # (T, d)

    # ---- layer-0 input projection hoisted out of the recurrence ----
    x_pre = jnp.dot(x_seq.astype(bf16), w_ih0_ref[...],
                    preferred_element_type=jnp.float32) + b0_ref[...]     # (T, 4d)

    w_f = w_f_ref[...]      # (2d, 8d) bf16: [[w_hh0|w_ih1],[0|w_hh1]], gate-permuted
    b1 = b1_ref[...]        # (1, 4d) f32

    def cell(gates, c):
        # gate order after wrapper-side row permutation: (i, f, o, g)
        s = jax.nn.sigmoid(gates[:, 0:3 * d])
        i = s[:, 0:d]
        f = s[:, d:2 * d]
        o = s[:, 2 * d:3 * d]
        g = jnp.tanh(gates[:, 3 * d:4 * d])
        c_new = f * c + i * g
        return o * jnp.tanh(c_new), c_new

    h0 = hc_in_ref[0:1, :]
    h1 = hc_in_ref[1:2, :]
    c0 = hc_in_ref[2:3, :]
    c1 = hc_in_ref[3:4, :]

    def fused_matmul(h0v, h1v):
        x = jnp.concatenate([h0v, h1v], axis=-1).astype(bf16)             # (1, 2d)
        return jnp.dot(x, w_f, preferred_element_type=jnp.float32)        # (1, 8d)

    # prologue: layer-0 recurrent pre-activation for step 0 (lower block is 0,
    # so the first 4d columns equal h0_in @ w_hh0 regardless of h1_in)
    r0 = fused_matmul(h0, h1)[:, 0:4 * d]

    # wavefront-fused recurrence: one MXU pass per timestep on the serial chain
    for t in range(T_DEC):            # short static trip count -> fully unrolled
        h0, c0 = cell(x_pre[t:t + 1, :] + r0, c0)       # layer 0, step t
        fused = fused_matmul(h0, h1)
        r0 = fused[:, 0:4 * d]                          # layer-0 recurrence, t+1
        h1, c1 = cell(fused[:, 4 * d:8 * d] + b1, c1)   # layer 1, step t

    # single lane-dense state slab: rows = [h0, h1, c0, c1]
    hc_out_ref[...] = jnp.concatenate([h0, h1, c0, c1], axis=0)           # (4, d)

    # ---- attention (late weights have had the whole recurrence to arrive) ----
    for cp in late_copies:
        cp.wait()

    ln_a_g, ln_a_b = ln_a_g_ref[...], ln_a_b_ref[...]
    h_cat = jnp.concatenate([h0, h1], axis=-1).astype(bf16)               # (1, 2d)
    hd = _layer_norm(jnp.dot(h_cat, wd_buf[...],
                             preferred_element_type=jnp.float32), ln_a_g, ln_a_b)
    q = _layer_norm(jnp.dot(q_buf[...].astype(bf16), we_buf[...],
                            preferred_element_type=jnp.float32), ln_a_g, ln_a_b)

    scores = lax.dot_general(hd * (1.0 / math.sqrt(d)), q,
                             (((1,), (1,)), ((), ())),
                             preferred_element_type=jnp.float32)          # (1, S_Q)
    scores = scores - jnp.max(scores, axis=-1, keepdims=True)
    e = jnp.exp(scores)
    a = e / jnp.sum(e, axis=-1, keepdims=True)
    # lane-pad the attention weights to a full 128-lane row (unmasked store)
    a_out_ref[...] = jnp.concatenate(
        [a, jnp.zeros((1, d - S_Q), jnp.float32)], axis=-1)

    context = jnp.dot(a, q, preferred_element_type=jnp.float32)           # (1, d)

    # ---- output projection ----
    dout_ref[...] = jnp.dot(context.astype(bf16), wp_buf[...],
                            preferred_element_type=jnp.float32) + b_proj_ref[...]


def preprocess_params(p):
    """Wrapper-side layout plumbing: gate reorder (i,f,g,o)->(i,f,o,g),
    wavefront fusion of both layers into one (2d,8d) stationary weight,
    pre-transposition of every weight to (in_dim,out_dim), bf16 casts for all
    MXU operands (biases / LN params stay f32)."""
    d = D_MODEL
    perm = jnp.concatenate([jnp.arange(0, 2 * d),
                            jnp.arange(3 * d, 4 * d),
                            jnp.arange(2 * d, 3 * d)])
    bf16 = jnp.bfloat16
    kp = {}
    kp['emb'] = p['emb']                                               # stays in HBM
    kp['ln_d_g'], kp['ln_d_b'] = p['ln_d_g'], p['ln_d_b']
    kp['w_ih0_t'] = jnp.transpose(p['w_ih0'][perm]).astype(bf16)       # (d, 4d)
    kp['b0'] = (p['b_ih0'] + p['b_hh0'])[:, perm]                      # (1, 4d)
    w_hh0_t = jnp.transpose(p['w_hh0'][perm])                          # (d, 4d)
    w_ih1_t = jnp.transpose(p['w_ih1'][perm])                          # (d, 4d)
    w_hh1_t = jnp.transpose(p['w_hh1'][perm])                          # (d, 4d)
    top = jnp.concatenate([w_hh0_t, w_ih1_t], axis=1)                  # (d, 8d)
    bot = jnp.concatenate([jnp.zeros((d, 4 * d), jnp.float32), w_hh1_t], axis=1)
    kp['w_fused'] = jnp.concatenate([top, bot], axis=0).astype(bf16)   # (2d, 8d)
    kp['b1'] = (p['b_ih1'] + p['b_hh1'])[:, perm]                      # (1, 4d)
    kp['w_d_t'] = jnp.transpose(p['w_d']).astype(bf16)                 # (2d, d)
    kp['w_e_t'] = jnp.transpose(p['w_e']).astype(bf16)                 # (2d, d)
    kp['ln_a_g'], kp['ln_a_b'] = p['ln_a_g'], p['ln_a_b']
    kp['w_proj_t'] = jnp.transpose(p['w_proj']).astype(bf16)           # (d, V)
    kp['b_proj'] = p['b_proj']
    return kp


def lstm_decoder_forward(kp, dec_input, question_hidden, h, c):
    """dec_input: (1,T) int32; question_hidden: (1,S_Q,2d); h, c: (LAYERS,1,d)."""
    dec_ids = dec_input.reshape(T_DEC).astype(jnp.int32)
    q_hid = question_hidden.reshape(S_Q, 2 * D_MODEL)
    hc_in = jnp.concatenate([h.reshape(LAYERS, D_MODEL),
                             c.reshape(LAYERS, D_MODEL)], axis=0)      # (4, d)

    smem = pl.BlockSpec(memory_space=pltpu.MemorySpace.SMEM)
    vmem = pl.BlockSpec(memory_space=pltpu.MemorySpace.VMEM)
    hbm = pl.BlockSpec(memory_space=pl.ANY)

    inputs = (dec_ids, kp['emb'],
              kp['ln_d_g'], kp['ln_d_b'],
              kp['w_ih0_t'], kp['b0'],
              kp['w_fused'], kp['b1'],
              hc_in,
              kp['ln_a_g'], kp['ln_a_b'], kp['b_proj'],
              kp['w_d_t'], kp['w_e_t'], q_hid, kp['w_proj_t'])
    in_specs = [smem, hbm,
                vmem, vmem,
                vmem, vmem,
                vmem, vmem,
                vmem,
                vmem, vmem, vmem,
                hbm, hbm, hbm, hbm]

    d_out, hc_out, a_pad = pl.pallas_call(
        decoder_kernel,
        out_shape=(jax.ShapeDtypeStruct((1, VOCAB), jnp.float32),
                   jax.ShapeDtypeStruct((2 * LAYERS, D_MODEL), jnp.float32),
                   jax.ShapeDtypeStruct((1, D_MODEL), jnp.float32)),
        in_specs=in_specs,
        out_specs=(vmem, vmem, vmem),
        scratch_shapes=[
            pltpu.VMEM((T_DEC, D_MODEL), jnp.float32),          # gathered emb rows
            pltpu.VMEM((2 * D_MODEL, D_MODEL), jnp.bfloat16),   # w_d
            pltpu.VMEM((2 * D_MODEL, D_MODEL), jnp.bfloat16),   # w_e
            pltpu.VMEM((S_Q, 2 * D_MODEL), jnp.float32),        # question_hidden
            pltpu.VMEM((D_MODEL, VOCAB), jnp.bfloat16),         # w_proj
            pltpu.SemaphoreType.DMA((T_DEC,)),
            pltpu.SemaphoreType.DMA((4,)),
        ],
    )(*inputs)

    h_out = hc_out[0:LAYERS].reshape(LAYERS, 1, D_MODEL)
    c_out = hc_out[LAYERS:].reshape(LAYERS, 1, D_MODEL)
    a = a_pad[:, :S_Q]
    return d_out.reshape(1, 1, VOCAB), (h_out, c_out), a.reshape(1, 1, S_Q)


def init_params(key):
    """Parameters in PyTorch layout (gate order i,f,g,o; weights (out,in))."""
    ks = jax.random.split(key, 17)

    def nrm(k, shape, s=0.05):
        return (s * jax.random.normal(k, shape)).astype(jnp.float32)

    p = {}
    p['emb'] = nrm(ks[0], (VOCAB, D_MODEL), 0.1)                 # nn.Embedding weight
    p['ln_d_g'] = (1.0 + nrm(ks[1], (1, D_MODEL), 0.1))          # decoder LayerNorm
    p['ln_d_b'] = nrm(ks[2], (1, D_MODEL), 0.1)
    p['w_ih0'] = nrm(ks[3], (4 * D_MODEL, D_MODEL))              # LSTM layer 0
    p['w_hh0'] = nrm(ks[4], (4 * D_MODEL, D_MODEL))
    p['b_ih0'] = nrm(ks[5], (1, 4 * D_MODEL))
    p['b_hh0'] = nrm(ks[6], (1, 4 * D_MODEL))
    p['w_ih1'] = nrm(ks[7], (4 * D_MODEL, D_MODEL))              # LSTM layer 1
    p['w_hh1'] = nrm(ks[8], (4 * D_MODEL, D_MODEL))
    p['b_ih1'] = nrm(ks[9], (1, 4 * D_MODEL))
    p['b_hh1'] = nrm(ks[10], (1, 4 * D_MODEL))
    p['w_d'] = nrm(ks[11], (D_MODEL, LAYERS * D_MODEL))          # Attention.w_d (no bias)
    p['w_e'] = nrm(ks[12], (D_MODEL, 2 * D_MODEL))               # Attention.w_e (no bias)
    p['ln_a_g'] = (1.0 + nrm(ks[13], (1, D_MODEL), 0.1))         # Attention LayerNorm
    p['ln_a_b'] = nrm(ks[14], (1, D_MODEL), 0.1)
    p['w_proj'] = nrm(ks[15], (VOCAB, D_MODEL))                  # projection
    p['b_proj'] = nrm(ks[16], (1, VOCAB))
    return p


def reference_forward(params, dec_input, question_hidden, h, c):
    """Pure-JAX f32 reference of the same math (inference mode), PyTorch layout."""
    d = D_MODEL
    hp = lax.Precision.HIGHEST
    mmt = lambda x, w: lax.dot_general(x, w, (((1,), (1,)), ((), ())), precision=hp)

    emb = params['emb'][dec_input.reshape(-1)]                   # (T, d)
    x_seq = _layer_norm(emb, params['ln_d_g'], params['ln_d_b'])

    b0 = params['b_ih0'] + params['b_hh0']
    b1 = params['b_ih1'] + params['b_hh1']

    def cell(x, hh, cc, w_ih, w_hh, b):
        gates = mmt(x, w_ih) + mmt(hh, w_hh) + b
        i = jax.nn.sigmoid(gates[:, 0:d])
        f = jax.nn.sigmoid(gates[:, d:2 * d])
        g = jnp.tanh(gates[:, 2 * d:3 * d])
        o = jax.nn.sigmoid(gates[:, 3 * d:4 * d])
        cn = f * cc + i * g
        return o * jnp.tanh(cn), cn

    h0_, c0_ = h[0], c[0]
    h1_, c1_ = h[1], c[1]
    for t in range(T_DEC):
        x_t = x_seq[t:t + 1]
        h0_, c0_ = cell(x_t, h0_, c0_, params['w_ih0'], params['w_hh0'], b0)
        h1_, c1_ = cell(h0_, h1_, c1_, params['w_ih1'], params['w_hh1'], b1)
    h_n = jnp.stack([h0_, h1_], 0)
    c_n = jnp.stack([c0_, c1_], 0)

    h_cat = jnp.concatenate([h0_, h1_], -1)
    hd = _layer_norm(mmt(h_cat, params['w_d']), params['ln_a_g'], params['ln_a_b'])
    q = _layer_norm(mmt(question_hidden.reshape(S_Q, 2 * d), params['w_e']),
                    params['ln_a_g'], params['ln_a_b'])
    scores = mmt(hd, q / math.sqrt(d))                           # (1, S_q)
    a = jax.nn.softmax(scores, axis=-1)
    context = jnp.dot(a, q, precision=hp)
    dout = mmt(context, params['w_proj']) + params['b_proj']
    return dout.reshape(1, 1, VOCAB), (h_n, c_n), a.reshape(1, 1, S_Q)


if __name__ == "__main__":
    key = jax.random.PRNGKey(0)
    kp_, k1, k2, k3, k4 = jax.random.split(key, 5)
    params = init_params(kp_)
    kparams = preprocess_params(params)       # one-time layout prep (wrapper side)

    dec_input = jax.random.randint(k1, (1, T_DEC), 0, VOCAB, dtype=jnp.int32)
    question_hidden = (0.1 * jax.random.normal(k2, (1, S_Q, 2 * D_MODEL))).astype(jnp.float32)
    h0 = (0.1 * jax.random.normal(k3, (LAYERS, 1, D_MODEL))).astype(jnp.float32)
    c0 = (0.1 * jax.random.normal(k4, (LAYERS, 1, D_MODEL))).astype(jnp.float32)

    d_out, (h_n, c_n), a = lstm_decoder_forward(kparams, dec_input, question_hidden, h0, c0)
    jax.block_until_ready((d_out, h_n, c_n, a))

    d_ref, (h_ref, c_ref), a_ref = reference_forward(params, dec_input, question_hidden, h0, c0)
    for got, want in ((d_out, d_ref), (h_n, h_ref), (c_n, c_ref), (a, a_ref)):
        assert got.shape == want.shape
        assert jnp.allclose(got, want, atol=2e-2, rtol=2e-2), "kernel/reference mismatch"

    print("KERNEL_OK")
</pallas_src>

<mosaic_0001>
module attributes {stable_mosaic.version = 11 : i64} {
  func.func @decoder_kernel(%arg0: memref<8xi32, #tpu.memory_space<smem>>, %arg1: memref<384x128xf32, #tpu.memory_space<any>>, %arg2: memref<1x128xf32, #tpu.memory_space<vmem>>, %arg3: memref<1x128xf32, #tpu.memory_space<vmem>>, %arg4: memref<128x512xbf16, #tpu.memory_space<vmem>>, %arg5: memref<1x512xf32, #tpu.memory_space<vmem>>, %arg6: memref<256x1024xbf16, #tpu.memory_space<vmem>>, %arg7: memref<1x512xf32, #tpu.memory_space<vmem>>, %arg8: memref<4x128xf32, #tpu.memory_space<vmem>>, %arg9: memref<1x128xf32, #tpu.memory_space<vmem>>, %arg10: memref<1x128xf32, #tpu.memory_space<vmem>>, %arg11: memref<1x384xf32, #tpu.memory_space<vmem>>, %arg12: memref<256x128xbf16, #tpu.memory_space<any>>, %arg13: memref<256x128xbf16, #tpu.memory_space<any>>, %arg14: memref<8x256xf32, #tpu.memory_space<any>>, %arg15: memref<128x384xbf16, #tpu.memory_space<any>>, %arg16: memref<1x384xf32, #tpu.memory_space<vmem>>, %arg17: memref<4x128xf32, #tpu.memory_space<vmem>>, %arg18: memref<1x128xf32, #tpu.memory_space<vmem>>, %arg19: memref<8x128xf32, #tpu.memory_space<vmem>>, %arg20: memref<256x128xbf16, #tpu.memory_space<vmem>>, %arg21: memref<256x128xbf16, #tpu.memory_space<vmem>>, %arg22: memref<8x256xf32, #tpu.memory_space<vmem>>, %arg23: memref<128x384xbf16, #tpu.memory_space<vmem>>, %arg24: memref<8x!tpu.dma_semaphore, #tpu.memory_space<semaphore_mem>>, %arg25: memref<4x!tpu.dma_semaphore, #tpu.memory_space<semaphore_mem>>) attributes {dimension_semantics = [], scalar_prefetch = 0 : i64, scratch_operands = 7 : i64, tpu.core_type = #tpu.core_type<tc>} {
    %c0 = arith.constant 0 : index
    %0 = memref.load %arg0[%c0] : memref<8xi32, #tpu.memory_space<smem>>
    %c0_i32 = arith.constant 0 : i32
    %c0_i32_0 = arith.constant 0 : i32
    %1 = tpu.memref_slice %arg1[%0, %c0_i32_0] : memref<384x128xf32, #tpu.memory_space<any>> -> memref<1x128xf32, #tpu.memory_space<any>>
    %c0_i32_1 = arith.constant 0 : i32
    %c0_i32_2 = arith.constant 0 : i32
    %2 = tpu.memref_slice %arg19[%c0_i32_1, %c0_i32_2] : memref<8x128xf32, #tpu.memory_space<vmem>> -> memref<1x128xf32, #tpu.memory_space<vmem>>
    %3 = tpu.memref_slice %arg24[%c0_i32] : memref<8x!tpu.dma_semaphore, #tpu.memory_space<semaphore_mem>> -> memref<1x!tpu.dma_semaphore, #tpu.memory_space<semaphore_mem>>
    %4 = tpu.memref_squeeze %3 : memref<1x!tpu.dma_semaphore, #tpu.memory_space<semaphore_mem>> -> memref<!tpu.dma_semaphore, #tpu.memory_space<semaphore_mem>>
    tpu.enqueue_dma source(%1 : memref<1x128xf32, #tpu.memory_space<any>>) target(%2 : memref<1x128xf32, #tpu.memory_space<vmem>>) target_semaphore(%4 : memref<!tpu.dma_semaphore, #tpu.memory_space<semaphore_mem>>)
    %c1 = arith.constant 1 : index
    %5 = memref.load %arg0[%c1] : memref<8xi32, #tpu.memory_space<smem>>
    %c1_i32 = arith.constant 1 : i32
    %c0_i32_3 = arith.constant 0 : i32
    %6 = tpu.memref_slice %arg1[%5, %c0_i32_3] : memref<384x128xf32, #tpu.memory_space<any>> -> memref<1x128xf32, #tpu.memory_space<any>>
    %c1_i32_4 = arith.constant 1 : i32
    %c0_i32_5 = arith.constant 0 : i32
    %7 = tpu.memref_slice %arg19[%c1_i32_4, %c0_i32_5] : memref<8x128xf32, #tpu.memory_space<vmem>> -> memref<1x128xf32, #tpu.memory_space<vmem>>
    %8 = tpu.memref_slice %arg24[%c1_i32] : memref<8x!tpu.dma_semaphore, #tpu.memory_space<semaphore_mem>> -> memref<1x!tpu.dma_semaphore, #tpu.memory_space<semaphore_mem>>
    %9 = tpu.memref_squeeze %8 : memref<1x!tpu.dma_semaphore, #tpu.memory_space<semaphore_mem>> -> memref<!tpu.dma_semaphore, #tpu.memory_space<semaphore_mem>>
    tpu.enqueue_dma source(%6 : memref<1x128xf32, #tpu.memory_space<any>>) target(%7 : memref<1x128xf32, #tpu.memory_space<vmem>>) target_semaphore(%9 : memref<!tpu.dma_semaphore, #tpu.memory_space<semaphore_mem>>)
    %c2 = arith.constant 2 : index
    %10 = memref.load %arg0[%c2] : memref<8xi32, #tpu.memory_space<smem>>
    %c2_i32 = arith.constant 2 : i32
    %c0_i32_6 = arith.constant 0 : i32
    %11 = tpu.memref_slice %arg1[%10, %c0_i32_6] : memref<384x128xf32, #tpu.memory_space<any>> -> memref<1x128xf32, #tpu.memory_space<any>>
    %c2_i32_7 = arith.constant 2 : i32
    %c0_i32_8 = arith.constant 0 : i32
    %12 = tpu.memref_slice %arg19[%c2_i32_7, %c0_i32_8] : memref<8x128xf32, #tpu.memory_space<vmem>> -> memref<1x128xf32, #tpu.memory_space<vmem>>
    %13 = tpu.memref_slice %arg24[%c2_i32] : memref<8x!tpu.dma_semaphore, #tpu.memory_space<semaphore_mem>> -> memref<1x!tpu.dma_semaphore, #tpu.memory_space<semaphore_mem>>
    %14 = tpu.memref_squeeze %13 : memref<1x!tpu.dma_semaphore, #tpu.memory_space<semaphore_mem>> -> memref<!tpu.dma_semaphore, #tpu.memory_space<semaphore_mem>>
    tpu.enqueue_dma source(%11 : memref<1x128xf32, #tpu.memory_space<any>>) target(%12 : memref<1x128xf32, #tpu.memory_space<vmem>>) target_semaphore(%14 : memref<!tpu.dma_semaphore, #tpu.memory_space<semaphore_mem>>)
    %c3 = arith.constant 3 : index
    %15 = memref.load %arg0[%c3] : memref<8xi32, #tpu.memory_space<smem>>
    %c3_i32 = arith.constant 3 : i32
    %c0_i32_9 = arith.constant 0 : i32
    %16 = tpu.memref_slice %arg1[%15, %c0_i32_9] : memref<384x128xf32, #tpu.memory_space<any>> -> memref<1x128xf32, #tpu.memory_space<any>>
    %c3_i32_10 = arith.constant 3 : i32
    %c0_i32_11 = arith.constant 0 : i32
    %17 = tpu.memref_slice %arg19[%c3_i32_10, %c0_i32_11] : memref<8x128xf32, #tpu.memory_space<vmem>> -> memref<1x128xf32, #tpu.memory_space<vmem>>
    %18 = tpu.memref_slice %arg24[%c3_i32] : memref<8x!tpu.dma_semaphore, #tpu.memory_space<semaphore_mem>> -> memref<1x!tpu.dma_semaphore, #tpu.memory_space<semaphore_mem>>
    %19 = tpu.memref_squeeze %18 : memref<1x!tpu.dma_semaphore, #tpu.memory_space<semaphore_mem>> -> memref<!tpu.dma_semaphore, #tpu.memory_space<semaphore_mem>>
    tpu.enqueue_dma source(%16 : memref<1x128xf32, #tpu.memory_space<any>>) target(%17 : memref<1x128xf32, #tpu.memory_space<vmem>>) target_semaphore(%19 : memref<!tpu.dma_semaphore, #tpu.memory_space<semaphore_mem>>)
    %c4 = arith.constant 4 : index
    %20 = memref.load %arg0[%c4] : memref<8xi32, #tpu.memory_space<smem>>
    %c4_i32 = arith.constant 4 : i32
    %c0_i32_12 = arith.constant 0 : i32
    %21 = tpu.memref_slice %arg1[%20, %c0_i32_12] : memref<384x128xf32, #tpu.memory_space<any>> -> memref<1x128xf32, #tpu.memory_space<any>>
    %c4_i32_13 = arith.constant 4 : i32
    %c0_i32_14 = arith.constant 0 : i32
    %22 = tpu.memref_slice %arg19[%c4_i32_13, %c0_i32_14] : memref<8x128xf32, #tpu.memory_space<vmem>> -> memref<1x128xf32, #tpu.memory_space<vmem>>
    %23 = tpu.memref_slice %arg24[%c4_i32] : memref<8x!tpu.dma_semaphore, #tpu.memory_space<semaphore_mem>> -> memref<1x!tpu.dma_semaphore, #tpu.memory_space<semaphore_mem>>
    %24 = tpu.memref_squeeze %23 : memref<1x!tpu.dma_semaphore, #tpu.memory_space<semaphore_mem>> -> memref<!tpu.dma_semaphore, #tpu.memory_space<semaphore_mem>>
    tpu.enqueue_dma source(%21 : memref<1x128xf32, #tpu.memory_space<any>>) target(%22 : memref<1x128xf32, #tpu.memory_space<vmem>>) target_semaphore(%24 : memref<!tpu.dma_semaphore, #tpu.memory_space<semaphore_mem>>)
    %c5 = arith.constant 5 : index
    %25 = memref.load %arg0[%c5] : memref<8xi32, #tpu.memory_space<smem>>
    %c5_i32 = arith.constant 5 : i32
    %c0_i32_15 = arith.constant 0 : i32
    %26 = tpu.memref_slice %arg1[%25, %c0_i32_15] : memref<384x128xf32, #tpu.memory_space<any>> -> memref<1x128xf32, #tpu.memory_space<any>>
    %c5_i32_16 = arith.constant 5 : i32
    %c0_i32_17 = arith.constant 0 : i32
    %27 = tpu.memref_slice %arg19[%c5_i32_16, %c0_i32_17] : memref<8x128xf32, #tpu.memory_space<vmem>> -> memref<1x128xf32, #tpu.memory_space<vmem>>
    %28 = tpu.memref_slice %arg24[%c5_i32] : memref<8x!tpu.dma_semaphore, #tpu.memory_space<semaphore_mem>> -> memref<1x!tpu.dma_semaphore, #tpu.memory_space<semaphore_mem>>
    %29 = tpu.memref_squeeze %28 : memref<1x!tpu.dma_semaphore, #tpu.memory_space<semaphore_mem>> -> memref<!tpu.dma_semaphore, #tpu.memory_space<semaphore_mem>>
    tpu.enqueue_dma source(%26 : memref<1x128xf32, #tpu.memory_space<any>>) target(%27 : memref<1x128xf32, #tpu.memory_space<vmem>>) target_semaphore(%29 : memref<!tpu.dma_semaphore, #tpu.memory_space<semaphore_mem>>)
    %c6 = arith.constant 6 : index
    %30 = memref.load %arg0[%c6] : memref<8xi32, #tpu.memory_space<smem>>
    %c6_i32 = arith.constant 6 : i32
    %c0_i32_18 = arith.constant 0 : i32
    %31 = tpu.memref_slice %arg1[%30, %c0_i32_18] : memref<384x128xf32, #tpu.memory_space<any>> -> memref<1x128xf32, #tpu.memory_space<any>>
    %c6_i32_19 = arith.constant 6 : i32
    %c0_i32_20 = arith.constant 0 : i32
    %32 = tpu.memref_slice %arg19[%c6_i32_19, %c0_i32_20] : memref<8x128xf32, #tpu.memory_space<vmem>> -> memref<1x128xf32, #tpu.memory_space<vmem>>
    %33 = tpu.memref_slice %arg24[%c6_i32] : memref<8x!tpu.dma_semaphore, #tpu.memory_space<semaphore_mem>> -> memref<1x!tpu.dma_semaphore, #tpu.memory_space<semaphore_mem>>
    %34 = tpu.memref_squeeze %33 : memref<1x!tpu.dma_semaphore, #tpu.memory_space<semaphore_mem>> -> memref<!tpu.dma_semaphore, #tpu.memory_space<semaphore_mem>>
    tpu.enqueue_dma source(%31 : memref<1x128xf32, #tpu.memory_space<any>>) target(%32 : memref<1x128xf32, #tpu.memory_space<vmem>>) target_semaphore(%34 : memref<!tpu.dma_semaphore, #tpu.memory_space<semaphore_mem>>)
    %c7 = arith.constant 7 : index
    %35 = memref.load %arg0[%c7] : memref<8xi32, #tpu.memory_space<smem>>
    %c7_i32 = arith.constant 7 : i32
    %c0_i32_21 = arith.constant 0 : i32
    %36 = tpu.memref_slice %arg1[%35, %c0_i32_21] : memref<384x128xf32, #tpu.memory_space<any>> -> memref<1x128xf32, #tpu.memory_space<any>>
    %c7_i32_22 = arith.constant 7 : i32
    %c0_i32_23 = arith.constant 0 : i32
    %37 = tpu.memref_slice %arg19[%c7_i32_22, %c0_i32_23] : memref<8x128xf32, #tpu.memory_space<vmem>> -> memref<1x128xf32, #tpu.memory_space<vmem>>
    %38 = tpu.memref_slice %arg24[%c7_i32] : memref<8x!tpu.dma_semaphore, #tpu.memory_space<semaphore_mem>> -> memref<1x!tpu.dma_semaphore, #tpu.memory_space<semaphore_mem>>
    %39 = tpu.memref_squeeze %38 : memref<1x!tpu.dma_semaphore, #tpu.memory_space<semaphore_mem>> -> memref<!tpu.dma_semaphore, #tpu.memory_space<semaphore_mem>>
    tpu.enqueue_dma source(%36 : memref<1x128xf32, #tpu.memory_space<any>>) target(%37 : memref<1x128xf32, #tpu.memory_space<vmem>>) target_semaphore(%39 : memref<!tpu.dma_semaphore, #tpu.memory_space<semaphore_mem>>)
    %c0_i32_24 = arith.constant 0 : i32
    %40 = tpu.memref_slice %arg25[%c0_i32_24] : memref<4x!tpu.dma_semaphore, #tpu.memory_space<semaphore_mem>> -> memref<1x!tpu.dma_semaphore, #tpu.memory_space<semaphore_mem>>
    %41 = tpu.memref_squeeze %40 : memref<1x!tpu.dma_semaphore, #tpu.memory_space<semaphore_mem>> -> memref<!tpu.dma_semaphore, #tpu.memory_space<semaphore_mem>>
    tpu.enqueue_dma source(%arg12 : memref<256x128xbf16, #tpu.memory_space<any>>) target(%arg20 : memref<256x128xbf16, #tpu.memory_space<vmem>>) target_semaphore(%41 : memref<!tpu.dma_semaphore, #tpu.memory_space<semaphore_mem>>)
    %c1_i32_25 = arith.constant 1 : i32
    %42 = tpu.memref_slice %arg25[%c1_i32_25] : memref<4x!tpu.dma_semaphore, #tpu.memory_space<semaphore_mem>> -> memref<1x!tpu.dma_semaphore, #tpu.memory_space<semaphore_mem>>
    %43 = tpu.memref_squeeze %42 : memref<1x!tpu.dma_semaphore, #tpu.memory_space<semaphore_mem>> -> memref<!tpu.dma_semaphore, #tpu.memory_space<semaphore_mem>>
    tpu.enqueue_dma source(%arg13 : memref<256x128xbf16, #tpu.memory_space<any>>) target(%arg21 : memref<256x128xbf16, #tpu.memory_space<vmem>>) target_semaphore(%43 : memref<!tpu.dma_semaphore, #tpu.memory_space<semaphore_mem>>)
    %c2_i32_26 = arith.constant 2 : i32
    %44 = tpu.memref_slice %arg25[%c2_i32_26] : memref<4x!tpu.dma_semaphore, #tpu.memory_space<semaphore_mem>> -> memref<1x!tpu.dma_semaphore, #tpu.memory_space<semaphore_mem>>
    %45 = tpu.memref_squeeze %44 : memref<1x!tpu.dma_semaphore, #tpu.memory_space<semaphore_mem>> -> memref<!tpu.dma_semaphore, #tpu.memory_space<semaphore_mem>>
    tpu.enqueue_dma source(%arg14 : memref<8x256xf32, #tpu.memory_space<any>>) target(%arg22 : memref<8x256xf32, #tpu.memory_space<vmem>>) target_semaphore(%45 : memref<!tpu.dma_semaphore, #tpu.memory_space<semaphore_mem>>)
    %c3_i32_27 = arith.constant 3 : i32
    %46 = tpu.memref_slice %arg25[%c3_i32_27] : memref<4x!tpu.dma_semaphore, #tpu.memory_space<semaphore_mem>> -> memref<1x!tpu.dma_semaphore, #tpu.memory_space<semaphore_mem>>
    %47 = tpu.memref_squeeze %46 : memref<1x!tpu.dma_semaphore, #tpu.memory_space<semaphore_mem>> -> memref<!tpu.dma_semaphore, #tpu.memory_space<semaphore_mem>>
    tpu.enqueue_dma source(%arg15 : memref<128x384xbf16, #tpu.memory_space<any>>) target(%arg23 : memref<128x384xbf16, #tpu.memory_space<vmem>>) target_semaphore(%47 : memref<!tpu.dma_semaphore, #tpu.memory_space<semaphore_mem>>)
    %c0_i32_28 = arith.constant 0 : i32
    %c0_i32_29 = arith.constant 0 : i32
    %48 = tpu.memref_slice %arg1[%0, %c0_i32_29] : memref<384x128xf32, #tpu.memory_space<any>> -> memref<1x128xf32, #tpu.memory_space<any>>
    %c0_i32_30 = arith.constant 0 : i32
    %c0_i32_31 = arith.constant 0 : i32
    %49 = tpu.memref_slice %arg19[%c0_i32_30, %c0_i32_31] : memref<8x128xf32, #tpu.memory_space<vmem>> -> memref<1x128xf32, #tpu.memory_space<vmem>>
    %50 = tpu.memref_slice %arg24[%c0_i32_28] : memref<8x!tpu.dma_semaphore, #tpu.memory_space<semaphore_mem>> -> memref<1x!tpu.dma_semaphore, #tpu.memory_space<semaphore_mem>>
    %51 = tpu.memref_squeeze %50 : memref<1x!tpu.dma_semaphore, #tpu.memory_space<semaphore_mem>> -> memref<!tpu.dma_semaphore, #tpu.memory_space<semaphore_mem>>
    tpu.wait_dma2 semaphore(%51 : memref<!tpu.dma_semaphore, #tpu.memory_space<semaphore_mem>>) src(%48 : memref<1x128xf32, #tpu.memory_space<any>>) dst(%49 : memref<1x128xf32, #tpu.memory_space<vmem>>)
    %c1_i32_32 = arith.constant 1 : i32
    %c0_i32_33 = arith.constant 0 : i32
    %52 = tpu.memref_slice %arg1[%5, %c0_i32_33] : memref<384x128xf32, #tpu.memory_space<any>> -> memref<1x128xf32, #tpu.memory_space<any>>
    %c1_i32_34 = arith.constant 1 : i32
    %c0_i32_35 = arith.constant 0 : i32
    %53 = tpu.memref_slice %arg19[%c1_i32_34, %c0_i32_35] : memref<8x128xf32, #tpu.memory_space<vmem>> -> memref<1x128xf32, #tpu.memory_space<vmem>>
    %54 = tpu.memref_slice %arg24[%c1_i32_32] : memref<8x!tpu.dma_semaphore, #tpu.memory_space<semaphore_mem>> -> memref<1x!tpu.dma_semaphore, #tpu.memory_space<semaphore_mem>>
    %55 = tpu.memref_squeeze %54 : memref<1x!tpu.dma_semaphore, #tpu.memory_space<semaphore_mem>> -> memref<!tpu.dma_semaphore, #tpu.memory_space<semaphore_mem>>
    tpu.wait_dma2 semaphore(%55 : memref<!tpu.dma_semaphore, #tpu.memory_space<semaphore_mem>>) src(%52 : memref<1x128xf32, #tpu.memory_space<any>>) dst(%53 : memref<1x128xf32, #tpu.memory_space<vmem>>)
    %c2_i32_36 = arith.constant 2 : i32
    %c0_i32_37 = arith.constant 0 : i32
    %56 = tpu.memref_slice %arg1[%10, %c0_i32_37] : memref<384x128xf32, #tpu.memory_space<any>> -> memref<1x128xf32, #tpu.memory_space<any>>
    %c2_i32_38 = arith.constant 2 : i32
    %c0_i32_39 = arith.constant 0 : i32
    %57 = tpu.memref_slice %arg19[%c2_i32_38, %c0_i32_39] : memref<8x128xf32, #tpu.memory_space<vmem>> -> memref<1x128xf32, #tpu.memory_space<vmem>>
    %58 = tpu.memref_slice %arg24[%c2_i32_36] : memref<8x!tpu.dma_semaphore, #tpu.memory_space<semaphore_mem>> -> memref<1x!tpu.dma_semaphore, #tpu.memory_space<semaphore_mem>>
    %59 = tpu.memref_squeeze %58 : memref<1x!tpu.dma_semaphore, #tpu.memory_space<semaphore_mem>> -> memref<!tpu.dma_semaphore, #tpu.memory_space<semaphore_mem>>
    tpu.wait_dma2 semaphore(%59 : memref<!tpu.dma_semaphore, #tpu.memory_space<semaphore_mem>>) src(%56 : memref<1x128xf32, #tpu.memory_space<any>>) dst(%57 : memref<1x128xf32, #tpu.memory_space<vmem>>)
    %c3_i32_40 = arith.constant 3 : i32
    %c0_i32_41 = arith.constant 0 : i32
    %60 = tpu.memref_slice %arg1[%15, %c0_i32_41] : memref<384x128xf32, #tpu.memory_space<any>> -> memref<1x128xf32, #tpu.memory_space<any>>
    %c3_i32_42 = arith.constant 3 : i32
    %c0_i32_43 = arith.constant 0 : i32
    %61 = tpu.memref_slice %arg19[%c3_i32_42, %c0_i32_43] : memref<8x128xf32, #tpu.memory_space<vmem>> -> memref<1x128xf32, #tpu.memory_space<vmem>>
    %62 = tpu.memref_slice %arg24[%c3_i32_40] : memref<8x!tpu.dma_semaphore, #tpu.memory_space<semaphore_mem>> -> memref<1x!tpu.dma_semaphore, #tpu.memory_space<semaphore_mem>>
    %63 = tpu.memref_squeeze %62 : memref<1x!tpu.dma_semaphore, #tpu.memory_space<semaphore_mem>> -> memref<!tpu.dma_semaphore, #tpu.memory_space<semaphore_mem>>
    tpu.wait_dma2 semaphore(%63 : memref<!tpu.dma_semaphore, #tpu.memory_space<semaphore_mem>>) src(%60 : memref<1x128xf32, #tpu.memory_space<any>>) dst(%61 : memref<1x128xf32, #tpu.memory_space<vmem>>)
    %c4_i32_44 = arith.constant 4 : i32
    %c0_i32_45 = arith.constant 0 : i32
    %64 = tpu.memref_slice %arg1[%20, %c0_i32_45] : memref<384x128xf32, #tpu.memory_space<any>> -> memref<1x128xf32, #tpu.memory_space<any>>
    %c4_i32_46 = arith.constant 4 : i32
    %c0_i32_47 = arith.constant 0 : i32
    %65 = tpu.memref_slice %arg19[%c4_i32_46, %c0_i32_47] : memref<8x128xf32, #tpu.memory_space<vmem>> -> memref<1x128xf32, #tpu.memory_space<vmem>>
    %66 = tpu.memref_slice %arg24[%c4_i32_44] : memref<8x!tpu.dma_semaphore, #tpu.memory_space<semaphore_mem>> -> memref<1x!tpu.dma_semaphore, #tpu.memory_space<semaphore_mem>>
    %67 = tpu.memref_squeeze %66 : memref<1x!tpu.dma_semaphore, #tpu.memory_space<semaphore_mem>> -> memref<!tpu.dma_semaphore, #tpu.memory_space<semaphore_mem>>
    tpu.wait_dma2 semaphore(%67 : memref<!tpu.dma_semaphore, #tpu.memory_space<semaphore_mem>>) src(%64 : memref<1x128xf32, #tpu.memory_space<any>>) dst(%65 : memref<1x128xf32, #tpu.memory_space<vmem>>)
    %c5_i32_48 = arith.constant 5 : i32
    %c0_i32_49 = arith.constant 0 : i32
    %68 = tpu.memref_slice %arg1[%25, %c0_i32_49] : memref<384x128xf32, #tpu.memory_space<any>> -> memref<1x128xf32, #tpu.memory_space<any>>
    %c5_i32_50 = arith.constant 5 : i32
    %c0_i32_51 = arith.constant 0 : i32
    %69 = tpu.memref_slice %arg19[%c5_i32_50, %c0_i32_51] : memref<8x128xf32, #tpu.memory_space<vmem>> -> memref<1x128xf32, #tpu.memory_space<vmem>>
    %70 = tpu.memref_slice %arg24[%c5_i32_48] : memref<8x!tpu.dma_semaphore, #tpu.memory_space<semaphore_mem>> -> memref<1x!tpu.dma_semaphore, #tpu.memory_space<semaphore_mem>>
    %71 = tpu.memref_squeeze %70 : memref<1x!tpu.dma_semaphore, #tpu.memory_space<semaphore_mem>> -> memref<!tpu.dma_semaphore, #tpu.memory_space<semaphore_mem>>
    tpu.wait_dma2 semaphore(%71 : memref<!tpu.dma_semaphore, #tpu.memory_space<semaphore_mem>>) src(%68 : memref<1x128xf32, #tpu.memory_space<any>>) dst(%69 : memref<1x128xf32, #tpu.memory_space<vmem>>)
    %c6_i32_52 = arith.constant 6 : i32
    %c0_i32_53 = arith.constant 0 : i32
    %72 = tpu.memref_slice %arg1[%30, %c0_i32_53] : memref<384x128xf32, #tpu.memory_space<any>> -> memref<1x128xf32, #tpu.memory_space<any>>
    %c6_i32_54 = arith.constant 6 : i32
    %c0_i32_55 = arith.constant 0 : i32
    %73 = tpu.memref_slice %arg19[%c6_i32_54, %c0_i32_55] : memref<8x128xf32, #tpu.memory_space<vmem>> -> memref<1x128xf32, #tpu.memory_space<vmem>>
    %74 = tpu.memref_slice %arg24[%c6_i32_52] : memref<8x!tpu.dma_semaphore, #tpu.memory_space<semaphore_mem>> -> memref<1x!tpu.dma_semaphore, #tpu.memory_space<semaphore_mem>>
    %75 = tpu.memref_squeeze %74 : memref<1x!tpu.dma_semaphore, #tpu.memory_space<semaphore_mem>> -> memref<!tpu.dma_semaphore, #tpu.memory_space<semaphore_mem>>
    tpu.wait_dma2 semaphore(%75 : memref<!tpu.dma_semaphore, #tpu.memory_space<semaphore_mem>>) src(%72 : memref<1x128xf32, #tpu.memory_space<any>>) dst(%73 : memref<1x128xf32, #tpu.memory_space<vmem>>)
    %c7_i32_56 = arith.constant 7 : i32
    %c0_i32_57 = arith.constant 0 : i32
    %76 = tpu.memref_slice %arg1[%35, %c0_i32_57] : memref<384x128xf32, #tpu.memory_space<any>> -> memref<1x128xf32, #tpu.memory_space<any>>
    %c7_i32_58 = arith.constant 7 : i32
    %c0_i32_59 = arith.constant 0 : i32
    %77 = tpu.memref_slice %arg19[%c7_i32_58, %c0_i32_59] : memref<8x128xf32, #tpu.memory_space<vmem>> -> memref<1x128xf32, #tpu.memory_space<vmem>>
    %78 = tpu.memref_slice %arg24[%c7_i32_56] : memref<8x!tpu.dma_semaphore, #tpu.memory_space<semaphore_mem>> -> memref<1x!tpu.dma_semaphore, #tpu.memory_space<semaphore_mem>>
    %79 = tpu.memref_squeeze %78 : memref<1x!tpu.dma_semaphore, #tpu.memory_space<semaphore_mem>> -> memref<!tpu.dma_semaphore, #tpu.memory_space<semaphore_mem>>
    tpu.wait_dma2 semaphore(%79 : memref<!tpu.dma_semaphore, #tpu.memory_space<semaphore_mem>>) src(%76 : memref<1x128xf32, #tpu.memory_space<any>>) dst(%77 : memref<1x128xf32, #tpu.memory_space<vmem>>)
    %c0_60 = arith.constant 0 : index
    %c0_61 = arith.constant 0 : index
    %80 = vector.load %arg19[%c0_60, %c0_61] : memref<8x128xf32, #tpu.memory_space<vmem>>, vector<8x128xf32>
    %c0_62 = arith.constant 0 : index
    %c0_63 = arith.constant 0 : index
    %81 = vector.load %arg2[%c0_62, %c0_63] : memref<1x128xf32, #tpu.memory_space<vmem>>, vector<1x128xf32>
    %c0_64 = arith.constant 0 : index
    %c0_65 = arith.constant 0 : index
    %82 = vector.load %arg3[%c0_64, %c0_65] : memref<1x128xf32, #tpu.memory_space<vmem>>, vector<1x128xf32>
    %cst = arith.constant dense<0.000000e+00> : vector<8xf32>
    %83 = vector.multi_reduction <add>, %80, %cst [1] : vector<8x128xf32> to vector<8xf32>
    %84 = vector.shape_cast %83 : vector<8xf32> to vector<8x1xf32>
    %cst_66 = arith.constant 1.280000e+02 : f32
    %85 = vector.broadcast %cst_66 : f32 to vector<8x1xf32>
    %86 = arith.divf %84, %85 : vector<8x1xf32>
    %87 = vector.broadcast %86 : vector<8x1xf32> to vector<8x128xf32>
    %88 = arith.subf %80, %87 : vector<8x128xf32>
    %89 = arith.mulf %88, %88 : vector<8x128xf32>
    %cst_67 = arith.constant dense<0.000000e+00> : vector<8xf32>
    %90 = vector.multi_reduction <add>, %89, %cst_67 [1] : vector<8x128xf32> to vector<8xf32>
    %91 = vector.shape_cast %90 : vector<8xf32> to vector<8x1xf32>
    %cst_68 = arith.constant 1.280000e+02 : f32
    %92 = vector.broadcast %cst_68 : f32 to vector<8x1xf32>
    %93 = arith.divf %91, %92 : vector<8x1xf32>
    %94 = vector.broadcast %86 : vector<8x1xf32> to vector<8x128xf32>
    %95 = arith.subf %80, %94 : vector<8x128xf32>
    %cst_69 = arith.constant 9.99999974E-6 : f32
    %96 = vector.broadcast %cst_69 : f32 to vector<8x1xf32>
    %97 = arith.addf %93, %96 : vector<8x1xf32>
    %98 = math.rsqrt %97 : vector<8x1xf32>
    %99 = vector.broadcast %98 : vector<8x1xf32> to vector<8x128xf32>
    %100 = arith.mulf %95, %99 : vector<8x128xf32>
    %101 = vector.broadcast %81 : vector<1x128xf32> to vector<8x128xf32>
    %102 = arith.mulf %100, %101 : vector<8x128xf32>
    %103 = vector.broadcast %82 : vector<1x128xf32> to vector<8x128xf32>
    %104 = arith.addf %102, %103 : vector<8x128xf32>
    %105 = arith.truncf %104 : vector<8x128xf32> to vector<8x128xbf16>
    %c0_70 = arith.constant 0 : index
    %c0_71 = arith.constant 0 : index
    %106 = vector.load %arg4[%c0_70, %c0_71] : memref<128x512xbf16, #tpu.memory_space<vmem>>, vector<128x512xbf16>
    %cst_72 = arith.constant dense<0.000000e+00> : vector<8x512xf32>
    %107 = tpu.matmul %105, %106, %cst_72 {dimension_numbers = #tpu.dot_dimension_numbers<[1], [0], [0], [1], [0, 0, 1, 1], [], []>} : vector<8x128xbf16>, vector<128x512xbf16>, vector<8x512xf32> -> vector<8x512xf32>
    %c0_73 = arith.constant 0 : index
    %c0_74 = arith.constant 0 : index
    %108 = vector.load %arg5[%c0_73, %c0_74] : memref<1x512xf32, #tpu.memory_space<vmem>>, vector<1x512xf32>
    %109 = vector.broadcast %108 : vector<1x512xf32> to vector<8x512xf32>
    %110 = arith.addf %107, %109 : vector<8x512xf32>
    %c0_75 = arith.constant 0 : index
    %c0_76 = arith.constant 0 : index
    %111 = vector.load %arg6[%c0_75, %c0_76] : memref<256x1024xbf16, #tpu.memory_space<vmem>>, vector<256x1024xbf16>
    %c0_77 = arith.constant 0 : index
    %c0_78 = arith.constant 0 : index
    %112 = vector.load %arg7[%c0_77, %c0_78] : memref<1x512xf32, #tpu.memory_space<vmem>>, vector<1x512xf32>
    %c0_79 = arith.constant 0 : index
    %c0_80 = arith.constant 0 : index
    %113 = vector.load %arg8[%c0_79, %c0_80] : memref<4x128xf32, #tpu.memory_space<vmem>>, vector<1x128xf32>
    %c1_81 = arith.constant 1 : index
    %c0_82 = arith.constant 0 : index
    %114 = vector.load %arg8[%c1_81, %c0_82] : memref<4x128xf32, #tpu.memory_space<vmem>>, vector<1x128xf32>
    %c2_83 = arith.constant 2 : index
    %c0_84 = arith.constant 0 : index
    %115 = vector.load %arg8[%c2_83, %c0_84] : memref<4x128xf32, #tpu.memory_space<vmem>>, vector<1x128xf32>
    %c3_85 = arith.constant 3 : index
    %c0_86 = arith.constant 0 : index
    %116 = vector.load %arg8[%c3_85, %c0_86] : memref<4x128xf32, #tpu.memory_space<vmem>>, vector<1x128xf32>
    %117 = tpu.concatenate %113, %114 in 1 : vector<1x128xf32>, vector<1x128xf32> -> vector<1x256xf32>
    %118 = arith.truncf %117 : vector<1x256xf32> to vector<1x256xbf16>
    %cst_87 = arith.constant dense<0.000000e+00> : vector<1x1024xf32>
    %119 = tpu.matmul %118, %111, %cst_87 {dimension_numbers = #tpu.dot_dimension_numbers<[1], [0], [0], [1], [0, 0, 1, 1], [], []>} : vector<1x256xbf16>, vector<256x1024xbf16>, vector<1x1024xf32> -> vector<1x1024xf32>
    %120 = vector.extract_strided_slice %119 {offsets = [0, 0], sizes = [1, 512], strides = [1, 1]} : vector<1x1024xf32> to vector<1x512xf32>
    %121 = vector.extract_strided_slice %110 {offsets = [0, 0], sizes = [1, 512], strides = [1, 1]} : vector<8x512xf32> to vector<1x512xf32>
    %122 = arith.addf %121, %120 : vector<1x512xf32>
    %123 = vector.extract_strided_slice %122 {offsets = [0, 0], sizes = [1, 384], strides = [1, 1]} : vector<1x512xf32> to vector<1x384xf32>
    %124 = arith.negf %123 : vector<1x384xf32>
    %125 = math.exp %124 : vector<1x384xf32>
    %cst_88 = arith.constant 1.000000e+00 : f32
    %126 = vector.broadcast %cst_88 : f32 to vector<1x384xf32>
    %127 = arith.addf %126, %125 : vector<1x384xf32>
    %128 = arith.divf %126, %127 : vector<1x384xf32>
    %129 = vector.extract_strided_slice %128 {offsets = [0, 0], sizes = [1, 128], strides = [1, 1]} : vector<1x384xf32> to vector<1x128xf32>
    %130 = vector.extract_strided_slice %128 {offsets = [0, 128], sizes = [1, 128], strides = [1, 1]} : vector<1x384xf32> to vector<1x128xf32>
    %131 = vector.extract_strided_slice %128 {offsets = [0, 256], sizes = [1, 128], strides = [1, 1]} : vector<1x384xf32> to vector<1x128xf32>
    %132 = vector.extract_strided_slice %122 {offsets = [0, 384], sizes = [1, 128], strides = [1, 1]} : vector<1x512xf32> to vector<1x128xf32>
    %133 = math.tanh %132 : vector<1x128xf32>
    %134 = arith.mulf %130, %115 : vector<1x128xf32>
    %135 = arith.mulf %129, %133 : vector<1x128xf32>
    %136 = arith.addf %134, %135 : vector<1x128xf32>
    %137 = math.tanh %136 : vector<1x128xf32>
    %138 = arith.mulf %131, %137 : vector<1x128xf32>
    %139 = tpu.concatenate %138, %114 in 1 : vector<1x128xf32>, vector<1x128xf32> -> vector<1x256xf32>
    %140 = arith.truncf %139 : vector<1x256xf32> to vector<1x256xbf16>
    %cst_89 = arith.constant dense<0.000000e+00> : vector<1x1024xf32>
    %141 = tpu.matmul %140, %111, %cst_89 {dimension_numbers = #tpu.dot_dimension_numbers<[1], [0], [0], [1], [0, 0, 1, 1], [], []>} : vector<1x256xbf16>, vector<256x1024xbf16>, vector<1x1024xf32> -> vector<1x1024xf32>
    %142 = vector.extract_strided_slice %141 {offsets = [0, 0], sizes = [1, 512], strides = [1, 1]} : vector<1x1024xf32> to vector<1x512xf32>
    %143 = vector.extract_strided_slice %141 {offsets = [0, 512], sizes = [1, 512], strides = [1, 1]} : vector<1x1024xf32> to vector<1x512xf32>
    %144 = arith.addf %143, %112 : vector<1x512xf32>
    %145 = vector.extract_strided_slice %144 {offsets = [0, 0], sizes = [1, 384], strides = [1, 1]} : vector<1x512xf32> to vector<1x384xf32>
    %146 = arith.negf %145 : vector<1x384xf32>
    %147 = math.exp %146 : vector<1x384xf32>
    %cst_90 = arith.constant 1.000000e+00 : f32
    %148 = vector.broadcast %cst_90 : f32 to vector<1x384xf32>
    %149 = arith.addf %148, %147 : vector<1x384xf32>
    %150 = arith.divf %148, %149 : vector<1x384xf32>
    %151 = vector.extract_strided_slice %150 {offsets = [0, 0], sizes = [1, 128], strides = [1, 1]} : vector<1x384xf32> to vector<1x128xf32>
    %152 = vector.extract_strided_slice %150 {offsets = [0, 128], sizes = [1, 128], strides = [1, 1]} : vector<1x384xf32> to vector<1x128xf32>
    %153 = vector.extract_strided_slice %150 {offsets = [0, 256], sizes = [1, 128], strides = [1, 1]} : vector<1x384xf32> to vector<1x128xf32>
    %154 = vector.extract_strided_slice %144 {offsets = [0, 384], sizes = [1, 128], strides = [1, 1]} : vector<1x512xf32> to vector<1x128xf32>
    %155 = math.tanh %154 : vector<1x128xf32>
    %156 = arith.mulf %152, %116 : vector<1x128xf32>
    %157 = arith.mulf %151, %155 : vector<1x128xf32>
    %158 = arith.addf %156, %157 : vector<1x128xf32>
    %159 = math.tanh %158 : vector<1x128xf32>
    %160 = arith.mulf %153, %159 : vector<1x128xf32>
    %161 = vector.extract_strided_slice %110 {offsets = [1, 0], sizes = [1, 512], strides = [1, 1]} : vector<8x512xf32> to vector<1x512xf32>
    %162 = arith.addf %161, %142 : vector<1x512xf32>
    %163 = vector.extract_strided_slice %162 {offsets = [0, 0], sizes = [1, 384], strides = [1, 1]} : vector<1x512xf32> to vector<1x384xf32>
    %164 = arith.negf %163 : vector<1x384xf32>
    %165 = math.exp %164 : vector<1x384xf32>
    %cst_91 = arith.constant 1.000000e+00 : f32
    %166 = vector.broadcast %cst_91 : f32 to vector<1x384xf32>
    %167 = arith.addf %166, %165 : vector<1x384xf32>
    %168 = arith.divf %166, %167 : vector<1x384xf32>
    %169 = vector.extract_strided_slice %168 {offsets = [0, 0], sizes = [1, 128], strides = [1, 1]} : vector<1x384xf32> to vector<1x128xf32>
    %170 = vector.extract_strided_slice %168 {offsets = [0, 128], sizes = [1, 128], strides = [1, 1]} : vector<1x384xf32> to vector<1x128xf32>
    %171 = vector.extract_strided_slice %168 {offsets = [0, 256], sizes = [1, 128], strides = [1, 1]} : vector<1x384xf32> to vector<1x128xf32>
    %172 = vector.extract_strided_slice %162 {offsets = [0, 384], sizes = [1, 128], strides = [1, 1]} : vector<1x512xf32> to vector<1x128xf32>
    %173 = math.tanh %172 : vector<1x128xf32>
    %174 = arith.mulf %170, %136 : vector<1x128xf32>
    %175 = arith.mulf %169, %173 : vector<1x128xf32>
    %176 = arith.addf %174, %175 : vector<1x128xf32>
    %177 = math.tanh %176 : vector<1x128xf32>
    %178 = arith.mulf %171, %177 : vector<1x128xf32>
    %179 = tpu.concatenate %178, %160 in 1 : vector<1x128xf32>, vector<1x128xf32> -> vector<1x256xf32>
    %180 = arith.truncf %179 : vector<1x256xf32> to vector<1x256xbf16>
    %cst_92 = arith.constant dense<0.000000e+00> : vector<1x1024xf32>
    %181 = tpu.matmul %180, %111, %cst_92 {dimension_numbers = #tpu.dot_dimension_numbers<[1], [0], [0], [1], [0, 0, 1, 1], [], []>} : vector<1x256xbf16>, vector<256x1024xbf16>, vector<1x1024xf32> -> vector<1x1024xf32>
    %182 = vector.extract_strided_slice %181 {offsets = [0, 0], sizes = [1, 512], strides = [1, 1]} : vector<1x1024xf32> to vector<1x512xf32>
    %183 = vector.extract_strided_slice %181 {offsets = [0, 512], sizes = [1, 512], strides = [1, 1]} : vector<1x1024xf32> to vector<1x512xf32>
    %184 = arith.addf %183, %112 : vector<1x512xf32>
    %185 = vector.extract_strided_slice %184 {offsets = [0, 0], sizes = [1, 384], strides = [1, 1]} : vector<1x512xf32> to vector<1x384xf32>
    %186 = arith.negf %185 : vector<1x384xf32>
    %187 = math.exp %186 : vector<1x384xf32>
    %cst_93 = arith.constant 1.000000e+00 : f32
    %188 = vector.broadcast %cst_93 : f32 to vector<1x384xf32>
    %189 = arith.addf %188, %187 : vector<1x384xf32>
    %190 = arith.divf %188, %189 : vector<1x384xf32>
    %191 = vector.extract_strided_slice %190 {offsets = [0, 0], sizes = [1, 128], strides = [1, 1]} : vector<1x384xf32> to vector<1x128xf32>
    %192 = vector.extract_strided_slice %190 {offsets = [0, 128], sizes = [1, 128], strides = [1, 1]} : vector<1x384xf32> to vector<1x128xf32>
    %193 = vector.extract_strided_slice %190 {offsets = [0, 256], sizes = [1, 128], strides = [1, 1]} : vector<1x384xf32> to vector<1x128xf32>
    %194 = vector.extract_strided_slice %184 {offsets = [0, 384], sizes = [1, 128], strides = [1, 1]} : vector<1x512xf32> to vector<1x128xf32>
    %195 = math.tanh %194 : vector<1x128xf32>
    %196 = arith.mulf %192, %158 : vector<1x128xf32>
    %197 = arith.mulf %191, %195 : vector<1x128xf32>
    %198 = arith.addf %196, %197 : vector<1x128xf32>
    %199 = math.tanh %198 : vector<1x128xf32>
    %200 = arith.mulf %193, %199 : vector<1x128xf32>
    %201 = vector.extract_strided_slice %110 {offsets = [2, 0], sizes = [1, 512], strides = [1, 1]} : vector<8x512xf32> to vector<1x512xf32>
    %202 = arith.addf %201, %182 : vector<1x512xf32>
    %203 = vector.extract_strided_slice %202 {offsets = [0, 0], sizes = [1, 384], strides = [1, 1]} : vector<1x512xf32> to vector<1x384xf32>
    %204 = arith.negf %203 : vector<1x384xf32>
    %205 = math.exp %204 : vector<1x384xf32>
    %cst_94 = arith.constant 1.000000e+00 : f32
    %206 = vector.broadcast %cst_94 : f32 to vector<1x384xf32>
    %207 = arith.addf %206, %205 : vector<1x384xf32>
    %208 = arith.divf %206, %207 : vector<1x384xf32>
    %209 = vector.extract_strided_slice %208 {offsets = [0, 0], sizes = [1, 128], strides = [1, 1]} : vector<1x384xf32> to vector<1x128xf32>
    %210 = vector.extract_strided_slice %208 {offsets = [0, 128], sizes = [1, 128], strides = [1, 1]} : vector<1x384xf32> to vector<1x128xf32>
    %211 = vector.extract_strided_slice %208 {offsets = [0, 256], sizes = [1, 128], strides = [1, 1]} : vector<1x384xf32> to vector<1x128xf32>
    %212 = vector.extract_strided_slice %202 {offsets = [0, 384], sizes = [1, 128], strides = [1, 1]} : vector<1x512xf32> to vector<1x128xf32>
    %213 = math.tanh %212 : vector<1x128xf32>
    %214 = arith.mulf %210, %176 : vector<1x128xf32>
    %215 = arith.mulf %209, %213 : vector<1x128xf32>
    %216 = arith.addf %214, %215 : vector<1x128xf32>
    %217 = math.tanh %216 : vector<1x128xf32>
    %218 = arith.mulf %211, %217 : vector<1x128xf32>
    %219 = tpu.concatenate %218, %200 in 1 : vector<1x128xf32>, vector<1x128xf32> -> vector<1x256xf32>
    %220 = arith.truncf %219 : vector<1x256xf32> to vector<1x256xbf16>
    %cst_95 = arith.constant dense<0.000000e+00> : vector<1x1024xf32>
    %221 = tpu.matmul %220, %111, %cst_95 {dimension_numbers = #tpu.dot_dimension_numbers<[1], [0], [0], [1], [0, 0, 1, 1], [], []>} : vector<1x256xbf16>, vector<256x1024xbf16>, vector<1x1024xf32> -> vector<1x1024xf32>
    %222 = vector.extract_strided_slice %221 {offsets = [0, 0], sizes = [1, 512], strides = [1, 1]} : vector<1x1024xf32> to vector<1x512xf32>
    %223 = vector.extract_strided_slice %221 {offsets = [0, 512], sizes = [1, 512], strides = [1, 1]} : vector<1x1024xf32> to vector<1x512xf32>
    %224 = arith.addf %223, %112 : vector<1x512xf32>
    %225 = vector.extract_strided_slice %224 {offsets = [0, 0], sizes = [1, 384], strides = [1, 1]} : vector<1x512xf32> to vector<1x384xf32>
    %226 = arith.negf %225 : vector<1x384xf32>
    %227 = math.exp %226 : vector<1x384xf32>
    %cst_96 = arith.constant 1.000000e+00 : f32
    %228 = vector.broadcast %cst_96 : f32 to vector<1x384xf32>
    %229 = arith.addf %228, %227 : vector<1x384xf32>
    %230 = arith.divf %228, %229 : vector<1x384xf32>
    %231 = vector.extract_strided_slice %230 {offsets = [0, 0], sizes = [1, 128], strides = [1, 1]} : vector<1x384xf32> to vector<1x128xf32>
    %232 = vector.extract_strided_slice %230 {offsets = [0, 128], sizes = [1, 128], strides = [1, 1]} : vector<1x384xf32> to vector<1x128xf32>
    %233 = vector.extract_strided_slice %230 {offsets = [0, 256], sizes = [1, 128], strides = [1, 1]} : vector<1x384xf32> to vector<1x128xf32>
    %234 = vector.extract_strided_slice %224 {offsets = [0, 384], sizes = [1, 128], strides = [1, 1]} : vector<1x512xf32> to vector<1x128xf32>
    %235 = math.tanh %234 : vector<1x128xf32>
    %236 = arith.mulf %232, %198 : vector<1x128xf32>
    %237 = arith.mulf %231, %235 : vector<1x128xf32>
    %238 = arith.addf %236, %237 : vector<1x128xf32>
    %239 = math.tanh %238 : vector<1x128xf32>
    %240 = arith.mulf %233, %239 : vector<1x128xf32>
    %241 = vector.extract_strided_slice %110 {offsets = [3, 0], sizes = [1, 512], strides = [1, 1]} : vector<8x512xf32> to vector<1x512xf32>
    %242 = arith.addf %241, %222 : vector<1x512xf32>
    %243 = vector.extract_strided_slice %242 {offsets = [0, 0], sizes = [1, 384], strides = [1, 1]} : vector<1x512xf32> to vector<1x384xf32>
    %244 = arith.negf %243 : vector<1x384xf32>
    %245 = math.exp %244 : vector<1x384xf32>
    %cst_97 = arith.constant 1.000000e+00 : f32
    %246 = vector.broadcast %cst_97 : f32 to vector<1x384xf32>
    %247 = arith.addf %246, %245 : vector<1x384xf32>
    %248 = arith.divf %246, %247 : vector<1x384xf32>
    %249 = vector.extract_strided_slice %248 {offsets = [0, 0], sizes = [1, 128], strides = [1, 1]} : vector<1x384xf32> to vector<1x128xf32>
    %250 = vector.extract_strided_slice %248 {offsets = [0, 128], sizes = [1, 128], strides = [1, 1]} : vector<1x384xf32> to vector<1x128xf32>
    %251 = vector.extract_strided_slice %248 {offsets = [0, 256], sizes = [1, 128], strides = [1, 1]} : vector<1x384xf32> to vector<1x128xf32>
    %252 = vector.extract_strided_slice %242 {offsets = [0, 384], sizes = [1, 128], strides = [1, 1]} : vector<1x512xf32> to vector<1x128xf32>
    %253 = math.tanh %252 : vector<1x128xf32>
    %254 = arith.mulf %250, %216 : vector<1x128xf32>
    %255 = arith.mulf %249, %253 : vector<1x128xf32>
    %256 = arith.addf %254, %255 : vector<1x128xf32>
    %257 = math.tanh %256 : vector<1x128xf32>
    %258 = arith.mulf %251, %257 : vector<1x128xf32>
    %259 = tpu.concatenate %258, %240 in 1 : vector<1x128xf32>, vector<1x128xf32> -> vector<1x256xf32>
    %260 = arith.truncf %259 : vector<1x256xf32> to vector<1x256xbf16>
    %cst_98 = arith.constant dense<0.000000e+00> : vector<1x1024xf32>
    %261 = tpu.matmul %260, %111, %cst_98 {dimension_numbers = #tpu.dot_dimension_numbers<[1], [0], [0], [1], [0, 0, 1, 1], [], []>} : vector<1x256xbf16>, vector<256x1024xbf16>, vector<1x1024xf32> -> vector<1x1024xf32>
    %262 = vector.extract_strided_slice %261 {offsets = [0, 0], sizes = [1, 512], strides = [1, 1]} : vector<1x1024xf32> to vector<1x512xf32>
    %263 = vector.extract_strided_slice %261 {offsets = [0, 512], sizes = [1, 512], strides = [1, 1]} : vector<1x1024xf32> to vector<1x512xf32>
    %264 = arith.addf %263, %112 : vector<1x512xf32>
    %265 = vector.extract_strided_slice %264 {offsets = [0, 0], sizes = [1, 384], strides = [1, 1]} : vector<1x512xf32> to vector<1x384xf32>
    %266 = arith.negf %265 : vector<1x384xf32>
    %267 = math.exp %266 : vector<1x384xf32>
    %cst_99 = arith.constant 1.000000e+00 : f32
    %268 = vector.broadcast %cst_99 : f32 to vector<1x384xf32>
    %269 = arith.addf %268, %267 : vector<1x384xf32>
    %270 = arith.divf %268, %269 : vector<1x384xf32>
    %271 = vector.extract_strided_slice %270 {offsets = [0, 0], sizes = [1, 128], strides = [1, 1]} : vector<1x384xf32> to vector<1x128xf32>
    %272 = vector.extract_strided_slice %270 {offsets = [0, 128], sizes = [1, 128], strides = [1, 1]} : vector<1x384xf32> to vector<1x128xf32>
    %273 = vector.extract_strided_slice %270 {offsets = [0, 256], sizes = [1, 128], strides = [1, 1]} : vector<1x384xf32> to vector<1x128xf32>
    %274 = vector.extract_strided_slice %264 {offsets = [0, 384], sizes = [1, 128], strides = [1, 1]} : vector<1x512xf32> to vector<1x128xf32>
    %275 = math.tanh %274 : vector<1x128xf32>
    %276 = arith.mulf %272, %238 : vector<1x128xf32>
    %277 = arith.mulf %271, %275 : vector<1x128xf32>
    %278 = arith.addf %276, %277 : vector<1x128xf32>
    %279 = math.tanh %278 : vector<1x128xf32>
    %280 = arith.mulf %273, %279 : vector<1x128xf32>
    %281 = vector.extract_strided_slice %110 {offsets = [4, 0], sizes = [1, 512], strides = [1, 1]} : vector<8x512xf32> to vector<1x512xf32>
    %282 = arith.addf %281, %262 : vector<1x512xf32>
    %283 = vector.extract_strided_slice %282 {offsets = [0, 0], sizes = [1, 384], strides = [1, 1]} : vector<1x512xf32> to vector<1x384xf32>
    %284 = arith.negf %283 : vector<1x384xf32>
    %285 = math.exp %284 : vector<1x384xf32>
    %cst_100 = arith.constant 1.000000e+00 : f32
    %286 = vector.broadcast %cst_100 : f32 to vector<1x384xf32>
    %287 = arith.addf %286, %285 : vector<1x384xf32>
    %288 = arith.divf %286, %287 : vector<1x384xf32>
    %289 = vector.extract_strided_slice %288 {offsets = [0, 0], sizes = [1, 128], strides = [1, 1]} : vector<1x384xf32> to vector<1x128xf32>
    %290 = vector.extract_strided_slice %288 {offsets = [0, 128], sizes = [1, 128], strides = [1, 1]} : vector<1x384xf32> to vector<1x128xf32>
    %291 = vector.extract_strided_slice %288 {offsets = [0, 256], sizes = [1, 128], strides = [1, 1]} : vector<1x384xf32> to vector<1x128xf32>
    %292 = vector.extract_strided_slice %282 {offsets = [0, 384], sizes = [1, 128], strides = [1, 1]} : vector<1x512xf32> to vector<1x128xf32>
    %293 = math.tanh %292 : vector<1x128xf32>
    %294 = arith.mulf %290, %256 : vector<1x128xf32>
    %295 = arith.mulf %289, %293 : vector<1x128xf32>
    %296 = arith.addf %294, %295 : vector<1x128xf32>
    %297 = math.tanh %296 : vector<1x128xf32>
    %298 = arith.mulf %291, %297 : vector<1x128xf32>
    %299 = tpu.concatenate %298, %280 in 1 : vector<1x128xf32>, vector<1x128xf32> -> vector<1x256xf32>
    %300 = arith.truncf %299 : vector<1x256xf32> to vector<1x256xbf16>
    %cst_101 = arith.constant dense<0.000000e+00> : vector<1x1024xf32>
    %301 = tpu.matmul %300, %111, %cst_101 {dimension_numbers = #tpu.dot_dimension_numbers<[1], [0], [0], [1], [0, 0, 1, 1], [], []>} : vector<1x256xbf16>, vector<256x1024xbf16>, vector<1x1024xf32> -> vector<1x1024xf32>
    %302 = vector.extract_strided_slice %301 {offsets = [0, 0], sizes = [1, 512], strides = [1, 1]} : vector<1x1024xf32> to vector<1x512xf32>
    %303 = vector.extract_strided_slice %301 {offsets = [0, 512], sizes = [1, 512], strides = [1, 1]} : vector<1x1024xf32> to vector<1x512xf32>
    %304 = arith.addf %303, %112 : vector<1x512xf32>
    %305 = vector.extract_strided_slice %304 {offsets = [0, 0], sizes = [1, 384], strides = [1, 1]} : vector<1x512xf32> to vector<1x384xf32>
    %306 = arith.negf %305 : vector<1x384xf32>
    %307 = math.exp %306 : vector<1x384xf32>
    %cst_102 = arith.constant 1.000000e+00 : f32
    %308 = vector.broadcast %cst_102 : f32 to vector<1x384xf32>
    %309 = arith.addf %308, %307 : vector<1x384xf32>
    %310 = arith.divf %308, %309 : vector<1x384xf32>
    %311 = vector.extract_strided_slice %310 {offsets = [0, 0], sizes = [1, 128], strides = [1, 1]} : vector<1x384xf32> to vector<1x128xf32>
    %312 = vector.extract_strided_slice %310 {offsets = [0, 128], sizes = [1, 128], strides = [1, 1]} : vector<1x384xf32> to vector<1x128xf32>
    %313 = vector.extract_strided_slice %310 {offsets = [0, 256], sizes = [1, 128], strides = [1, 1]} : vector<1x384xf32> to vector<1x128xf32>
    %314 = vector.extract_strided_slice %304 {offsets = [0, 384], sizes = [1, 128], strides = [1, 1]} : vector<1x512xf32> to vector<1x128xf32>
    %315 = math.tanh %314 : vector<1x128xf32>
    %316 = arith.mulf %312, %278 : vector<1x128xf32>
    %317 = arith.mulf %311, %315 : vector<1x128xf32>
    %318 = arith.addf %316, %317 : vector<1x128xf32>
    %319 = math.tanh %318 : vector<1x128xf32>
    %320 = arith.mulf %313, %319 : vector<1x128xf32>
    %321 = vector.extract_strided_slice %110 {offsets = [5, 0], sizes = [1, 512], strides = [1, 1]} : vector<8x512xf32> to vector<1x512xf32>
    %322 = arith.addf %321, %302 : vector<1x512xf32>
    %323 = vector.extract_strided_slice %322 {offsets = [0, 0], sizes = [1, 384], strides = [1, 1]} : vector<1x512xf32> to vector<1x384xf32>
    %324 = arith.negf %323 : vector<1x384xf32>
    %325 = math.exp %324 : vector<1x384xf32>
    %cst_103 = arith.constant 1.000000e+00 : f32
    %326 = vector.broadcast %cst_103 : f32 to vector<1x384xf32>
    %327 = arith.addf %326, %325 : vector<1x384xf32>
    %328 = arith.divf %326, %327 : vector<1x384xf32>
    %329 = vector.extract_strided_slice %328 {offsets = [0, 0], sizes = [1, 128], strides = [1, 1]} : vector<1x384xf32> to vector<1x128xf32>
    %330 = vector.extract_strided_slice %328 {offsets = [0, 128], sizes = [1, 128], strides = [1, 1]} : vector<1x384xf32> to vector<1x128xf32>
    %331 = vector.extract_strided_slice %328 {offsets = [0, 256], sizes = [1, 128], strides = [1, 1]} : vector<1x384xf32> to vector<1x128xf32>
    %332 = vector.extract_strided_slice %322 {offsets = [0, 384], sizes = [1, 128], strides = [1, 1]} : vector<1x512xf32> to vector<1x128xf32>
    %333 = math.tanh %332 : vector<1x128xf32>
    %334 = arith.mulf %330, %296 : vector<1x128xf32>
    %335 = arith.mulf %329, %333 : vector<1x128xf32>
    %336 = arith.addf %334, %335 : vector<1x128xf32>
    %337 = math.tanh %336 : vector<1x128xf32>
    %338 = arith.mulf %331, %337 : vector<1x128xf32>
    %339 = tpu.concatenate %338, %320 in 1 : vector<1x128xf32>, vector<1x128xf32> -> vector<1x256xf32>
    %340 = arith.truncf %339 : vector<1x256xf32> to vector<1x256xbf16>
    %cst_104 = arith.constant dense<0.000000e+00> : vector<1x1024xf32>
    %341 = tpu.matmul %340, %111, %cst_104 {dimension_numbers = #tpu.dot_dimension_numbers<[1], [0], [0], [1], [0, 0, 1, 1], [], []>} : vector<1x256xbf16>, vector<256x1024xbf16>, vector<1x1024xf32> -> vector<1x1024xf32>
    %342 = vector.extract_strided_slice %341 {offsets = [0, 0], sizes = [1, 512], strides = [1, 1]} : vector<1x1024xf32> to vector<1x512xf32>
    %343 = vector.extract_strided_slice %341 {offsets = [0, 512], sizes = [1, 512], strides = [1, 1]} : vector<1x1024xf32> to vector<1x512xf32>
    %344 = arith.addf %343, %112 : vector<1x512xf32>
    %345 = vector.extract_strided_slice %344 {offsets = [0, 0], sizes = [1, 384], strides = [1, 1]} : vector<1x512xf32> to vector<1x384xf32>
    %346 = arith.negf %345 : vector<1x384xf32>
    %347 = math.exp %346 : vector<1x384xf32>
    %cst_105 = arith.constant 1.000000e+00 : f32
    %348 = vector.broadcast %cst_105 : f32 to vector<1x384xf32>
    %349 = arith.addf %348, %347 : vector<1x384xf32>
    %350 = arith.divf %348, %349 : vector<1x384xf32>
    %351 = vector.extract_strided_slice %350 {offsets = [0, 0], sizes = [1, 128], strides = [1, 1]} : vector<1x384xf32> to vector<1x128xf32>
    %352 = vector.extract_strided_slice %350 {offsets = [0, 128], sizes = [1, 128], strides = [1, 1]} : vector<1x384xf32> to vector<1x128xf32>
    %353 = vector.extract_strided_slice %350 {offsets = [0, 256], sizes = [1, 128], strides = [1, 1]} : vector<1x384xf32> to vector<1x128xf32>
    %354 = vector.extract_strided_slice %344 {offsets = [0, 384], sizes = [1, 128], strides = [1, 1]} : vector<1x512xf32> to vector<1x128xf32>
    %355 = math.tanh %354 : vector<1x128xf32>
    %356 = arith.mulf %352, %318 : vector<1x128xf32>
    %357 = arith.mulf %351, %355 : vector<1x128xf32>
    %358 = arith.addf %356, %357 : vector<1x128xf32>
    %359 = math.tanh %358 : vector<1x128xf32>
    %360 = arith.mulf %353, %359 : vector<1x128xf32>
    %361 = vector.extract_strided_slice %110 {offsets = [6, 0], sizes = [1, 512], strides = [1, 1]} : vector<8x512xf32> to vector<1x512xf32>
    %362 = arith.addf %361, %342 : vector<1x512xf32>
    %363 = vector.extract_strided_slice %362 {offsets = [0, 0], sizes = [1, 384], strides = [1, 1]} : vector<1x512xf32> to vector<1x384xf32>
    %364 = arith.negf %363 : vector<1x384xf32>
    %365 = math.exp %364 : vector<1x384xf32>
    %cst_106 = arith.constant 1.000000e+00 : f32
    %366 = vector.broadcast %cst_106 : f32 to vector<1x384xf32>
    %367 = arith.addf %366, %365 : vector<1x384xf32>
    %368 = arith.divf %366, %367 : vector<1x384xf32>
    %369 = vector.extract_strided_slice %368 {offsets = [0, 0], sizes = [1, 128], strides = [1, 1]} : vector<1x384xf32> to vector<1x128xf32>
    %370 = vector.extract_strided_slice %368 {offsets = [0, 128], sizes = [1, 128], strides = [1, 1]} : vector<1x384xf32> to vector<1x128xf32>
    %371 = vector.extract_strided_slice %368 {offsets = [0, 256], sizes = [1, 128], strides = [1, 1]} : vector<1x384xf32> to vector<1x128xf32>
    %372 = vector.extract_strided_slice %362 {offsets = [0, 384], sizes = [1, 128], strides = [1, 1]} : vector<1x512xf32> to vector<1x128xf32>
    %373 = math.tanh %372 : vector<1x128xf32>
    %374 = arith.mulf %370, %336 : vector<1x128xf32>
    %375 = arith.mulf %369, %373 : vector<1x128xf32>
    %376 = arith.addf %374, %375 : vector<1x128xf32>
    %377 = math.tanh %376 : vector<1x128xf32>
    %378 = arith.mulf %371, %377 : vector<1x128xf32>
    %379 = tpu.concatenate %378, %360 in 1 : vector<1x128xf32>, vector<1x128xf32> -> vector<1x256xf32>
    %380 = arith.truncf %379 : vector<1x256xf32> to vector<1x256xbf16>
    %cst_107 = arith.constant dense<0.000000e+00> : vector<1x1024xf32>
    %381 = tpu.matmul %380, %111, %cst_107 {dimension_numbers = #tpu.dot_dimension_numbers<[1], [0], [0], [1], [0, 0, 1, 1], [], []>} : vector<1x256xbf16>, vector<256x1024xbf16>, vector<1x1024xf32> -> vector<1x1024xf32>
    %382 = vector.extract_strided_slice %381 {offsets = [0, 0], sizes = [1, 512], strides = [1, 1]} : vector<1x1024xf32> to vector<1x512xf32>
    %383 = vector.extract_strided_slice %381 {offsets = [0, 512], sizes = [1, 512], strides = [1, 1]} : vector<1x1024xf32> to vector<1x512xf32>
    %384 = arith.addf %383, %112 : vector<1x512xf32>
    %385 = vector.extract_strided_slice %384 {offsets = [0, 0], sizes = [1, 384], strides = [1, 1]} : vector<1x512xf32> to vector<1x384xf32>
    %386 = arith.negf %385 : vector<1x384xf32>
    %387 = math.exp %386 : vector<1x384xf32>
    %cst_108 = arith.constant 1.000000e+00 : f32
    %388 = vector.broadcast %cst_108 : f32 to vector<1x384xf32>
    %389 = arith.addf %388, %387 : vector<1x384xf32>
    %390 = arith.divf %388, %389 : vector<1x384xf32>
    %391 = vector.extract_strided_slice %390 {offsets = [0, 0], sizes = [1, 128], strides = [1, 1]} : vector<1x384xf32> to vector<1x128xf32>
    %392 = vector.extract_strided_slice %390 {offsets = [0, 128], sizes = [1, 128], strides = [1, 1]} : vector<1x384xf32> to vector<1x128xf32>
    %393 = vector.extract_strided_slice %390 {offsets = [0, 256], sizes = [1, 128], strides = [1, 1]} : vector<1x384xf32> to vector<1x128xf32>
    %394 = vector.extract_strided_slice %384 {offsets = [0, 384], sizes = [1, 128], strides = [1, 1]} : vector<1x512xf32> to vector<1x128xf32>
    %395 = math.tanh %394 : vector<1x128xf32>
    %396 = arith.mulf %392, %358 : vector<1x128xf32>
    %397 = arith.mulf %391, %395 : vector<1x128xf32>
    %398 = arith.addf %396, %397 : vector<1x128xf32>
    %399 = math.tanh %398 : vector<1x128xf32>
    %400 = arith.mulf %393, %399 : vector<1x128xf32>
    %401 = vector.extract_strided_slice %110 {offsets = [7, 0], sizes = [1, 512], strides = [1, 1]} : vector<8x512xf32> to vector<1x512xf32>
    %402 = arith.addf %401, %382 : vector<1x512xf32>
    %403 = vector.extract_strided_slice %402 {offsets = [0, 0], sizes = [1, 384], strides = [1, 1]} : vector<1x512xf32> to vector<1x384xf32>
    %404 = arith.negf %403 : vector<1x384xf32>
    %405 = math.exp %404 : vector<1x384xf32>
    %cst_109 = arith.constant 1.000000e+00 : f32
    %406 = vector.broadcast %cst_109 : f32 to vector<1x384xf32>
    %407 = arith.addf %406, %405 : vector<1x384xf32>
    %408 = arith.divf %406, %407 : vector<1x384xf32>
    %409 = vector.extract_strided_slice %408 {offsets = [0, 0], sizes = [1, 128], strides = [1, 1]} : vector<1x384xf32> to vector<1x128xf32>
    %410 = vector.extract_strided_slice %408 {offsets = [0, 128], sizes = [1, 128], strides = [1, 1]} : vector<1x384xf32> to vector<1x128xf32>
    %411 = vector.extract_strided_slice %408 {offsets = [0, 256], sizes = [1, 128], strides = [1, 1]} : vector<1x384xf32> to vector<1x128xf32>
    %412 = vector.extract_strided_slice %402 {offsets = [0, 384], sizes = [1, 128], strides = [1, 1]} : vector<1x512xf32> to vector<1x128xf32>
    %413 = math.tanh %412 : vector<1x128xf32>
    %414 = arith.mulf %410, %376 : vector<1x128xf32>
    %415 = arith.mulf %409, %413 : vector<1x128xf32>
    %416 = arith.addf %414, %415 : vector<1x128xf32>
    %417 = math.tanh %416 : vector<1x128xf32>
    %418 = arith.mulf %411, %417 : vector<1x128xf32>
    %419 = tpu.concatenate %418, %400 in 1 : vector<1x128xf32>, vector<1x128xf32> -> vector<1x256xf32>
    %420 = arith.truncf %419 : vector<1x256xf32> to vector<1x256xbf16>
    %cst_110 = arith.constant dense<0.000000e+00> : vector<1x1024xf32>
    %421 = tpu.matmul %420, %111, %cst_110 {dimension_numbers = #tpu.dot_dimension_numbers<[1], [0], [0], [1], [0, 0, 1, 1], [], []>} : vector<1x256xbf16>, vector<256x1024xbf16>, vector<1x1024xf32> -> vector<1x1024xf32>
    %422 = vector.extract_strided_slice %421 {offsets = [0, 512], sizes = [1, 512], strides = [1, 1]} : vector<1x1024xf32> to vector<1x512xf32>
    %423 = arith.addf %422, %112 : vector<1x512xf32>
    %424 = vector.extract_strided_slice %423 {offsets = [0, 0], sizes = [1, 384], strides = [1, 1]} : vector<1x512xf32> to vector<1x384xf32>
    %425 = arith.negf %424 : vector<1x384xf32>
    %426 = math.exp %425 : vector<1x384xf32>
    %cst_111 = arith.constant 1.000000e+00 : f32
    %427 = vector.broadcast %cst_111 : f32 to vector<1x384xf32>
    %428 = arith.addf %427, %426 : vector<1x384xf32>
    %429 = arith.divf %427, %428 : vector<1x384xf32>
    %430 = vector.extract_strided_slice %429 {offsets = [0, 0], sizes = [1, 128], strides = [1, 1]} : vector<1x384xf32> to vector<1x128xf32>
    %431 = vector.extract_strided_slice %429 {offsets = [0, 128], sizes = [1, 128], strides = [1, 1]} : vector<1x384xf32> to vector<1x128xf32>
    %432 = vector.extract_strided_slice %429 {offsets = [0, 256], sizes = [1, 128], strides = [1, 1]} : vector<1x384xf32> to vector<1x128xf32>
    %433 = vector.extract_strided_slice %423 {offsets = [0, 384], sizes = [1, 128], strides = [1, 1]} : vector<1x512xf32> to vector<1x128xf32>
    %434 = math.tanh %433 : vector<1x128xf32>
    %435 = arith.mulf %431, %398 : vector<1x128xf32>
    %436 = arith.mulf %430, %434 : vector<1x128xf32>
    %437 = arith.addf %435, %436 : vector<1x128xf32>
    %438 = math.tanh %437 : vector<1x128xf32>
    %439 = arith.mulf %432, %438 : vector<1x128xf32>
    %440 = tpu.concatenate %418, %439, %416, %437 in 0 : vector<1x128xf32>, vector<1x128xf32>, vector<1x128xf32>, vector<1x128xf32> -> vector<4x128xf32>
    %c0_112 = arith.constant 0 : index
    %c0_113 = arith.constant 0 : index
    %441 = vector.load %arg17[%c0_112, %c0_113] : memref<4x128xf32, #tpu.memory_space<vmem>>, vector<4x128xf32>
    tpu.vector_store %arg17[%c0_112, %c0_113], %440 {strides = array<i32>} : memref<4x128xf32, #tpu.memory_space<vmem>>, vector<4x128xf32>,
    %c0_i32_114 = arith.constant 0 : i32
    %442 = tpu.memref_slice %arg25[%c0_i32_114] : memref<4x!tpu.dma_semaphore, #tpu.memory_space<semaphore_mem>> -> memref<1x!tpu.dma_semaphore, #tpu.memory_space<semaphore_mem>>
    %443 = tpu.memref_squeeze %442 : memref<1x!tpu.dma_semaphore, #tpu.memory_space<semaphore_mem>> -> memref<!tpu.dma_semaphore, #tpu.memory_space<semaphore_mem>>
    tpu.wait_dma2 semaphore(%443 : memref<!tpu.dma_semaphore, #tpu.memory_space<semaphore_mem>>) src(%arg12 : memref<256x128xbf16, #tpu.memory_space<any>>) dst(%arg20 : memref<256x128xbf16, #tpu.memory_space<vmem>>)
    %c1_i32_115 = arith.constant 1 : i32
    %444 = tpu.memref_slice %arg25[%c1_i32_115] : memref<4x!tpu.dma_semaphore, #tpu.memory_space<semaphore_mem>> -> memref<1x!tpu.dma_semaphore, #tpu.memory_space<semaphore_mem>>
    %445 = tpu.memref_squeeze %444 : memref<1x!tpu.dma_semaphore, #tpu.memory_space<semaphore_mem>> -> memref<!tpu.dma_semaphore, #tpu.memory_space<semaphore_mem>>
    tpu.wait_dma2 semaphore(%445 : memref<!tpu.dma_semaphore, #tpu.memory_space<semaphore_mem>>) src(%arg13 : memref<256x128xbf16, #tpu.memory_space<any>>) dst(%arg21 : memref<256x128xbf16, #tpu.memory_space<vmem>>)
    %c2_i32_116 = arith.constant 2 : i32
    %446 = tpu.memref_slice %arg25[%c2_i32_116] : memref<4x!tpu.dma_semaphore, #tpu.memory_space<semaphore_mem>> -> memref<1x!tpu.dma_semaphore, #tpu.memory_space<semaphore_mem>>
    %447 = tpu.memref_squeeze %446 : memref<1x!tpu.dma_semaphore, #tpu.memory_space<semaphore_mem>> -> memref<!tpu.dma_semaphore, #tpu.memory_space<semaphore_mem>>
    tpu.wait_dma2 semaphore(%447 : memref<!tpu.dma_semaphore, #tpu.memory_space<semaphore_mem>>) src(%arg14 : memref<8x256xf32, #tpu.memory_space<any>>) dst(%arg22 : memref<8x256xf32, #tpu.memory_space<vmem>>)
    %c3_i32_117 = arith.constant 3 : i32
    %448 = tpu.memref_slice %arg25[%c3_i32_117] : memref<4x!tpu.dma_semaphore, #tpu.memory_space<semaphore_mem>> -> memref<1x!tpu.dma_semaphore, #tpu.memory_space<semaphore_mem>>
    %449 = tpu.memref_squeeze %448 : memref<1x!tpu.dma_semaphore, #tpu.memory_space<semaphore_mem>> -> memref<!tpu.dma_semaphore, #tpu.memory_space<semaphore_mem>>
    tpu.wait_dma2 semaphore(%449 : memref<!tpu.dma_semaphore, #tpu.memory_space<semaphore_mem>>) src(%arg15 : memref<128x384xbf16, #tpu.memory_space<any>>) dst(%arg23 : memref<128x384xbf16, #tpu.memory_space<vmem>>)
    %c0_118 = arith.constant 0 : index
    %c0_119 = arith.constant 0 : index
    %450 = vector.load %arg9[%c0_118, %c0_119] : memref<1x128xf32, #tpu.memory_space<vmem>>, vector<1x128xf32>
    %c0_120 = arith.constant 0 : index
    %c0_121 = arith.constant 0 : index
    %451 = vector.load %arg10[%c0_120, %c0_121] : memref<1x128xf32, #tpu.memory_space<vmem>>, vector<1x128xf32>
    %452 = tpu.concatenate %418, %439 in 1 : vector<1x128xf32>, vector<1x128xf32> -> vector<1x256xf32>
    %453 = arith.truncf %452 : vector<1x256xf32> to vector<1x256xbf16>
    %c0_122 = arith.constant 0 : index
    %c0_123 = arith.constant 0 : index
    %454 = vector.load %arg20[%c0_122, %c0_123] : memref<256x128xbf16, #tpu.memory_space<vmem>>, vector<256x128xbf16>
    %cst_124 = arith.constant dense<0.000000e+00> : vector<1x128xf32>
    %455 = tpu.matmul %453, %454, %cst_124 {dimension_numbers = #tpu.dot_dimension_numbers<[1], [0], [0], [1], [0, 0, 1, 1], [], []>} : vector<1x256xbf16>, vector<256x128xbf16>, vector<1x128xf32> -> vector<1x128xf32>
    %cst_125 = arith.constant dense<0.000000e+00> : vector<1xf32>
    %456 = vector.multi_reduction <add>, %455, %cst_125 [1] : vector<1x128xf32> to vector<1xf32>
    %457 = vector.shape_cast %456 : vector<1xf32> to vector<1x1xf32>
    %cst_126 = arith.constant 1.280000e+02 : f32
    %458 = vector.broadcast %cst_126 : f32 to vector<1x1xf32>
    %459 = arith.divf %457, %458 : vector<1x1xf32>
    %460 = vector.broadcast %459 : vector<1x1xf32> to vector<1x128xf32>
    %461 = arith.subf %455, %460 : vector<1x128xf32>
    %462 = arith.mulf %461, %461 : vector<1x128xf32>
    %cst_127 = arith.constant dense<0.000000e+00> : vector<1xf32>
    %463 = vector.multi_reduction <add>, %462, %cst_127 [1] : vector<1x128xf32> to vector<1xf32>
    %464 = vector.shape_cast %463 : vector<1xf32> to vector<1x1xf32>
    %cst_128 = arith.constant 1.280000e+02 : f32
    %465 = vector.broadcast %cst_128 : f32 to vector<1x1xf32>
    %466 = arith.divf %464, %465 : vector<1x1xf32>
    %467 = vector.broadcast %459 : vector<1x1xf32> to vector<1x128xf32>
    %468 = arith.subf %455, %467 : vector<1x128xf32>
    %cst_129 = arith.constant 9.99999974E-6 : f32
    %469 = vector.broadcast %cst_129 : f32 to vector<1x1xf32>
    %470 = arith.addf %466, %469 : vector<1x1xf32>
    %471 = math.rsqrt %470 : vector<1x1xf32>
    %472 = vector.broadcast %471 : vector<1x1xf32> to vector<1x128xf32>
    %473 = arith.mulf %468, %472 : vector<1x128xf32>
    %474 = arith.mulf %473, %450 : vector<1x128xf32>
    %475 = arith.addf %474, %451 : vector<1x128xf32>
    %c0_130 = arith.constant 0 : index
    %c0_131 = arith.constant 0 : index
    %476 = vector.load %arg22[%c0_130, %c0_131] : memref<8x256xf32, #tpu.memory_space<vmem>>, vector<8x256xf32>
    %477 = arith.truncf %476 : vector<8x256xf32> to vector<8x256xbf16>
    %c0_132 = arith.constant 0 : index
    %c0_133 = arith.constant 0 : index
    %478 = vector.load %arg21[%c0_132, %c0_133] : memref<256x128xbf16, #tpu.memory_space<vmem>>, vector<256x128xbf16>
    %cst_134 = arith.constant dense<0.000000e+00> : vector<8x128xf32>
    %479 = tpu.matmul %477, %478, %cst_134 {dimension_numbers = #tpu.dot_dimension_numbers<[1], [0], [0], [1], [0, 0, 1, 1], [], []>} : vector<8x256xbf16>, vector<256x128xbf16>, vector<8x128xf32> -> vector<8x128xf32>
    %cst_135 = arith.constant dense<0.000000e+00> : vector<8xf32>
    %480 = vector.multi_reduction <add>, %479, %cst_135 [1] : vector<8x128xf32> to vector<8xf32>
    %481 = vector.shape_cast %480 : vector<8xf32> to vector<8x1xf32>
    %cst_136 = arith.constant 1.280000e+02 : f32
    %482 = vector.broadcast %cst_136 : f32 to vector<8x1xf32>
    %483 = arith.divf %481, %482 : vector<8x1xf32>
    %484 = vector.broadcast %483 : vector<8x1xf32> to vector<8x128xf32>
    %485 = arith.subf %479, %484 : vector<8x128xf32>
    %486 = arith.mulf %485, %485 : vector<8x128xf32>
    %cst_137 = arith.constant dense<0.000000e+00> : vector<8xf32>
    %487 = vector.multi_reduction <add>, %486, %cst_137 [1] : vector<8x128xf32> to vector<8xf32>
    %488 = vector.shape_cast %487 : vector<8xf32> to vector<8x1xf32>
    %cst_138 = arith.constant 1.280000e+02 : f32
    %489 = vector.broadcast %cst_138 : f32 to vector<8x1xf32>
    %490 = arith.divf %488, %489 : vector<8x1xf32>
    %491 = vector.broadcast %483 : vector<8x1xf32> to vector<8x128xf32>
    %492 = arith.subf %479, %491 : vector<8x128xf32>
    %cst_139 = arith.constant 9.99999974E-6 : f32
    %493 = vector.broadcast %cst_139 : f32 to vector<8x1xf32>
    %494 = arith.addf %490, %493 : vector<8x1xf32>
    %495 = math.rsqrt %494 : vector<8x1xf32>
    %496 = vector.broadcast %495 : vector<8x1xf32> to vector<8x128xf32>
    %497 = arith.mulf %492, %496 : vector<8x128xf32>
    %498 = vector.broadcast %450 : vector<1x128xf32> to vector<8x128xf32>
    %499 = arith.mulf %497, %498 : vector<8x128xf32>
    %500 = vector.broadcast %451 : vector<1x128xf32> to vector<8x128xf32>
    %501 = arith.addf %499, %500 : vector<8x128xf32>
    %cst_140 = arith.constant 0.0883883461 : f32
    %502 = vector.broadcast %cst_140 : f32 to vector<1x128xf32>
    %503 = arith.mulf %475, %502 : vector<1x128xf32>
    %cst_141 = arith.constant dense<0.000000e+00> : vector<1x8xf32>
    %504 = tpu.matmul %503, %501, %cst_141 {dimension_numbers = #tpu.dot_dimension_numbers<[1], [1], [0], [0], [0, 0, 1, 0], [], []>} : vector<1x128xf32>, vector<8x128xf32>, vector<1x8xf32> -> vector<1x8xf32>
    %cst_142 = arith.constant dense<0xFF800000> : vector<1xf32>
    %505 = vector.multi_reduction <maximumf>, %504, %cst_142 [1] : vector<1x8xf32> to vector<1xf32>
    %506 = vector.shape_cast %505 : vector<1xf32> to vector<1x1xf32>
    %507 = vector.broadcast %506 : vector<1x1xf32> to vector<1x8xf32>
    %508 = arith.subf %504, %507 : vector<1x8xf32>
    %509 = math.exp %508 : vector<1x8xf32>
    %cst_143 = arith.constant dense<0.000000e+00> : vector<1xf32>
    %510 = vector.multi_reduction <add>, %509, %cst_143 [1] : vector<1x8xf32> to vector<1xf32>
    %511 = vector.shape_cast %510 : vector<1xf32> to vector<1x1xf32>
    %512 = vector.broadcast %511 : vector<1x1xf32> to vector<1x8xf32>
    %513 = arith.divf %509, %512 : vector<1x8xf32>
    %cst_144 = arith.constant 0.000000e+00 : f32
    %514 = vector.broadcast %cst_144 : f32 to vector<1x120xf32>
    %515 = tpu.concatenate %513, %514 in 1 : vector<1x8xf32>, vector<1x120xf32> -> vector<1x128xf32>
    %c0_145 = arith.constant 0 : index
    %c0_146 = arith.constant 0 : index
    %516 = vector.load %arg18[%c0_145, %c0_146] : memref<1x128xf32, #tpu.memory_space<vmem>>, vector<1x128xf32>
    tpu.vector_store %arg18[%c0_145, %c0_146], %515 {strides = array<i32>} : memref<1x128xf32, #tpu.memory_space<vmem>>, vector<1x128xf32>,
    %cst_147 = arith.constant dense<0.000000e+00> : vector<1x128xf32>
    %517 = tpu.matmul %513, %501, %cst_147 {dimension_numbers = #tpu.dot_dimension_numbers<[1], [0], [0], [1], [0, 0, 1, 1], [], []>} : vector<1x8xf32>, vector<8x128xf32>, vector<1x128xf32> -> vector<1x128xf32>
    %518 = arith.truncf %517 : vector<1x128xf32> to vector<1x128xbf16>
    %c0_148 = arith.constant 0 : index
    %c0_149 = arith.constant 0 : index
    %519 = vector.load %arg23[%c0_148, %c0_149] : memref<128x384xbf16, #tpu.memory_space<vmem>>, vector<128x384xbf16>
    %cst_150 = arith.constant dense<0.000000e+00> : vector<1x384xf32>
    %520 = tpu.matmul %518, %519, %cst_150 {dimension_numbers = #tpu.dot_dimension_numbers<[1], [0], [0], [1], [0, 0, 1, 1], [], []>} : vector<1x128xbf16>, vector<128x384xbf16>, vector<1x384xf32> -> vector<1x384xf32>
    %c0_151 = arith.constant 0 : index
    %c0_152 = arith.constant 0 : index
    %521 = vector.load %arg11[%c0_151, %c0_152] : memref<1x384xf32, #tpu.memory_space<vmem>>, vector<1x384xf32>
    %522 = arith.addf %520, %521 : vector<1x384xf32>
    %c0_153 = arith.constant 0 : index
    %c0_154 = arith.constant 0 : index
    %523 = vector.load %arg16[%c0_153, %c0_154] : memref<1x384xf32, #tpu.memory_space<vmem>>, vector<1x384xf32>
    tpu.vector_store %arg16[%c0_153, %c0_154], %522 {strides = array<i32>} : memref<1x384xf32, #tpu.memory_space<vmem>>, vector<1x384xf32>,
    return
  }
}

</mosaic_0001>

<llo_original>
// kernel: tpu_custom_call.1
$region0: #{tpu_custom_call.1}
  #allocation0 [shape = 'u32[]', space=smem, size = 0x4, offset = 0x4, fixed_abs, tag = 'smem constant byte address 0x4 - core index']
  #allocation1 [shape = 'u32[72,128]{1,0:T(1,128)}', space=vmem, size = 0x9000, scoped, tag = 'internal scratch']
  #allocation2 [shape = 'f32[8,128]{1,0:T(8,128)}', space=vmem, size = 0x1000, scoped, tag = 'scratch operand']
  #allocation3 [shape = 'bf16[256,128]{1,0:T(8,128)(2,1)}', space=vmem, size = 0x10000, scoped, tag = 'scratch operand']
  #allocation4 [shape = 'bf16[256,128]{1,0:T(8,128)(2,1)}', space=vmem, size = 0x10000, scoped, tag = 'scratch operand']
  #allocation5 [shape = 'f32[8,256]{1,0:T(8,128)}', space=vmem, size = 0x2000, scoped, tag = 'scratch operand']
  #allocation6 [shape = 'bf16[128,384]{1,0:T(8,128)(2,1)}', space=vmem, size = 0x18000, scoped, tag = 'scratch operand']
  #allocation7 [shape = 's32[8]{0}', space=sflag, size = 0x20, scoped, tag = 'scratch operand']
  #allocation8 [shape = 's32[4]{0}', space=sflag, size = 0x10, scoped, tag = 'scratch operand']
  #allocation26 [shape = 's32[]', space=sflag, size = 0x4, offset = 0, fixed_abs, tag = 'sflag constant byte address 0x0 - dummy sync flag']
  #allocation27 [shape = 's32[]', space=sflag, size = 0x4, offset = 0, fixed_abs, tag = 'sflag constant byte address 0x0 - dummy sync flag']
  #allocation28 [shape = 'u32[]', space=smem, size = 0x4, offset = 0x44, fixed_abs, tag = 'smem constant byte address 0x44 - assertion arg 0']
  #allocation29 [shape = 'u32[]', space=smem, size = 0x4, offset = 0x48, fixed_abs, tag = 'smem constant byte address 0x48 - assertion arg 1']
  #allocation30 [shape = 's32[]', space=sflag, size = 0x4, offset = 0, fixed_abs, tag = 'sflag constant byte address 0x0 - dummy sync flag']
  #allocation31 [shape = 's32[]', space=sflag, size = 0x4, offset = 0, fixed_abs, tag = 'sflag constant byte address 0x0 - dummy sync flag']
  #allocation32 [shape = 's32[]', space=sflag, size = 0x4, offset = 0, fixed_abs, tag = 'sflag constant byte address 0x0 - dummy sync flag']
  #allocation33 [shape = 's32[]', space=sflag, size = 0x4, offset = 0, fixed_abs, tag = 'sflag constant byte address 0x0 - dummy sync flag']
  #allocation34 [shape = 's32[]', space=sflag, size = 0x4, offset = 0, fixed_abs, tag = 'sflag constant byte address 0x0 - dummy sync flag']
  #allocation35 [shape = 's32[]', space=sflag, size = 0x4, offset = 0, fixed_abs, tag = 'sflag constant byte address 0x0 - dummy sync flag']
  #allocation36 [shape = 's32[]', space=sflag, size = 0x4, offset = 0, fixed_abs, tag = 'sflag constant byte address 0x0 - dummy sync flag']
  #allocation37 [shape = 's32[]', space=sflag, size = 0x4, offset = 0, fixed_abs, tag = 'sflag constant byte address 0x0 - dummy sync flag']
  #allocation38 [shape = 's32[]', space=sflag, size = 0x4, offset = 0, fixed_abs, tag = 'sflag constant byte address 0x0 - dummy sync flag']
  #allocation39 [shape = 's32[]', space=sflag, size = 0x4, offset = 0, fixed_abs, tag = 'sflag constant byte address 0x0 - dummy sync flag']
  #allocation40 [shape = 's32[]', space=sflag, size = 0x4, offset = 0, fixed_abs, tag = 'sflag constant byte address 0x0 - dummy sync flag']
  #allocation41 [shape = 's32[]', space=sflag, size = 0x4, offset = 0, fixed_abs, tag = 'sflag constant byte address 0x0 - dummy sync flag']
  #allocation42 [shape = 's32[]', space=sflag, size = 0x4, offset = 0, fixed_abs, tag = 'sflag constant byte address 0x0 - dummy sync flag']
  #allocation43 [shape = 's32[]', space=sflag, size = 0x4, offset = 0, fixed_abs, tag = 'sflag constant byte address 0x0 - dummy sync flag']
  #allocation44 [shape = 's32[]', space=sflag, size = 0x4, offset = 0, fixed_abs, tag = 'sflag constant byte address 0x0 - dummy sync flag']
  #allocation45 [shape = 's32[]', space=sflag, size = 0x4, offset = 0, fixed_abs, tag = 'sflag constant byte address 0x0 - dummy sync flag']
  #allocation46 [shape = 's32[]', space=sflag, size = 0x4, offset = 0, fixed_abs, tag = 'sflag constant byte address 0x0 - dummy sync flag']
  #allocation47 [shape = 's32[]', space=sflag, size = 0x4, offset = 0, fixed_abs, tag = 'sflag constant byte address 0x0 - dummy sync flag']
  #allocation48 [shape = 's32[]', space=sflag, size = 0x4, offset = 0, fixed_abs, tag = 'sflag constant byte address 0x0 - dummy sync flag']
  #allocation49 [shape = 's32[]', space=sflag, size = 0x4, offset = 0, fixed_abs, tag = 'sflag constant byte address 0x0 - dummy sync flag']
  #allocation50 [shape = 's32[]', space=sflag, size = 0x4, offset = 0, fixed_abs, tag = 'sflag constant byte address 0x0 - dummy sync flag']
  #allocation51 [shape = 's32[]', space=sflag, size = 0x4, offset = 0, fixed_abs, tag = 'sflag constant byte address 0x0 - dummy sync flag']
  %s0 = inlined_call_operand.hbm [shape: s32[8], index: 0, kind: input, shape index: {}]
  %s1 = inlined_call_operand.hbm [shape: f32[384,128], index: 1, kind: input, shape index: {}]
  %s2 = inlined_call_operand.hbm [shape: f32[1,128], index: 2, kind: input, shape index: {}]
  %s3 = inlined_call_operand.hbm [shape: f32[1,128], index: 3, kind: input, shape index: {}]
  %s4 = inlined_call_operand.hbm [shape: bf16[128,512], index: 4, kind: input, shape index: {}]
  %s5 = inlined_call_operand.vmem [shape: f32[1,512], index: 5, kind: input, shape index: {}]
  %s6 = inlined_call_operand.hbm [shape: bf16[256,1024], index: 6, kind: input, shape index: {}]
  %s7 = inlined_call_operand.hbm [shape: f32[1,512], index: 7, kind: input, shape index: {}]
  %s8 = inlined_call_operand.hbm [shape: f32[4,128], index: 8, kind: input, shape index: {}]
  %s9 = inlined_call_operand.vmem [shape: f32[1,128], index: 9, kind: input, shape index: {}]
  %s10 = inlined_call_operand.vmem [shape: f32[1,128], index: 10, kind: input, shape index: {}]
  %s11 = inlined_call_operand.vmem [shape: f32[1,384], index: 11, kind: input, shape index: {}]
  %s12 = inlined_call_operand.hbm [shape: bf16[256,128], index: 12, kind: input, shape index: {}]
  %s13 = inlined_call_operand.hbm [shape: bf16[256,128], index: 13, kind: input, shape index: {}]
  %s14 = inlined_call_operand.hbm [shape: f32[8,256], index: 14, kind: input, shape index: {}]
  %s15 = inlined_call_operand.hbm [shape: bf16[128,384], index: 15, kind: input, shape index: {}]
  %s16 = inlined_call_operand.hbm [shape: f32[1,384], index: 16, kind: output, shape index: {0}]
  %s17 = inlined_call_operand.hbm [shape: f32[4,128], index: 17, kind: output, shape index: {1}]
  %s18 = inlined_call_operand.hbm [shape: f32[1,128], index: 18, kind: output, shape index: {2}]
  %19 = xla_tuple %s16, %s17, %s18
  %s20 = sld [smem:[#allocation0]]
  $region146: #{tpu_custom_call.1} parent=0
    _
  %s22 = ssub.s32 1, %s20
  %s23 = scalar_select 0, %s22, %s20
  $region1: #{tpu_custom_call.1} parent=0
    #allocation9 [shape = 'u8[512]{0}', space=smem, size = 0x200, scoped, tag = 'input window, operand 0, single buffered']
    #allocation10 [shape = 's32[1]{0}', space=sflag, size = 0x4, scoped, tag = 'scoped memory for tpu_custom_call.1']
    #allocation11 [shape = 's32[1]{0}', space=sflag, size = 0x4, scoped, tag = 'scoped memory for tpu_custom_call.1']
    #allocation12 [shape = 's32[1]{0}', space=sflag, size = 0x4, scoped, tag = 'scoped memory for tpu_custom_call.1']
    #allocation13 [shape = 'u8[512]{0}', space=vmem, size = 0x400, scoped, tag = 'input window, operand 2, single buffered']
    #allocation14 [shape = 'u8[512]{0}', space=vmem, size = 0x400, scoped, tag = 'input window, operand 3, single buffered']
    #allocation15 [shape = 's32[1]{0}', space=sflag, size = 0x4, scoped, tag = 'scoped memory for tpu_custom_call.1']
    #allocation16 [shape = 'u8[131072]{0}', space=vmem, size = 0x20000, scoped, tag = 'input window, operand 4, single buffered']
    #allocation17 [shape = 'u8[524288]{0}', space=vmem, size = 0x80000, scoped, tag = 'input window, operand 6, single buffered']
    #allocation18 [shape = 's32[1]{0}', space=sflag, size = 0x4, scoped, tag = 'scoped memory for tpu_custom_call.1']
    #allocation19 [shape = 'u8[2048]{0}', space=vmem, size = 0x800, scoped, tag = 'input window, operand 7, single buffered']
    #allocation20 [shape = 'u8[2048]{0}', space=vmem, size = 0x800, scoped, tag = 'input window, operand 8, single buffered']
    #allocation21 [shape = 's32[1]{0}', space=sflag, size = 0x4, scoped, tag = 'scoped memory for tpu_custom_call.1']
    #allocation22 [shape = 'u8[1536]{0}', space=vmem, size = 0x800, scoped, tag = 'output window, operand 0, single buffered']
    #allocation23 [shape = 'u8[2048]{0}', space=vmem, size = 0x800, scoped, tag = 'output window, operand 1, single buffered']
    #allocation24 [shape = 's32[1]{0}', space=sflag, size = 0x4, scoped, tag = 'scoped memory for tpu_custom_call.1']
    #allocation25 [shape = 'u8[512]{0}', space=vmem, size = 0x400, scoped, tag = 'output window, operand 2, single buffered']
    %24 = vsyncpa [#allocation12], 0
    %25 = vsyncpa [#allocation10], 0
    %26 = vsyncpa [#allocation15], 0
    %27 = vsyncpa [#allocation18], 0
    %28 = vsyncpa [#allocation21], 0
    %29 = vsyncpa [#allocation11], 0
    %30 = vsyncpa [#allocation24], 0
    // Predicated region
    $region2: #{tpu_custom_call.1} parent=1 // pred_check
      _
    $region3: #{tpu_custom_call.1} parent=1 // pred_check_branch
      %32 = sbr.rel (0) target = $region5
    $region4: #{tpu_custom_call.1} parent=1 // pred_region
      %34 = vsyncadd [#allocation12], 0
      %s36 = sshll.u32 %s0, 4
      %s37 = int_to_ptr.hbm [resolvable:$true] %s36
      %39 = dma.hbm_to_smem %s37, 16, [#allocation9], [#allocation12]
    $region5: #{tpu_custom_call.1} parent=1 // pred_fallthru
      _
    // Predicated region
    $region6: #{tpu_custom_call.1} parent=1 // pred_check
      _
    $region7: #{tpu_custom_call.1} parent=1 // pred_check_branch
      %41 = sbr.rel (0) target = $region9
    $region8: #{tpu_custom_call.1} parent=1 // pred_region
      %43 = vsyncadd [#allocation10], 0
      %s45 = sshll.u32 %s2, 4
      %s46 = int_to_ptr.hbm [resolvable:$true] %s45
      %s47 = sshll.u32 [#allocation13], 4
      %s48 = int_to_ptr.vmem [resolvable:$true] %s47
      %50 = dma.hbm_to_vmem [thread:$0]  %s46, 16, %s48, [#allocation10]
    $region9: #{tpu_custom_call.1} parent=1 // pred_fallthru
      _
    // Predicated region
    $region10: #{tpu_custom_call.1} parent=1 // pred_check
      _
    $region11: #{tpu_custom_call.1} parent=1 // pred_check_branch
      %52 = sbr.rel (0) target = $region13
    $region12: #{tpu_custom_call.1} parent=1 // pred_region
      %54 = vsyncadd [#allocation15], 0
      %s56 = sshll.u32 %s3, 4
      %s57 = int_to_ptr.hbm [resolvable:$true] %s56
      %s58 = sshll.u32 [#allocation14], 4
      %s59 = int_to_ptr.vmem [resolvable:$true] %s58
      %61 = dma.hbm_to_vmem [thread:$0]  %s57, 16, %s59, [#allocation15]
    $region13: #{tpu_custom_call.1} parent=1 // pred_fallthru
      _
    // Predicated region
    $region14: #{tpu_custom_call.1} parent=1 // pred_check
      _
    $region15: #{tpu_custom_call.1} parent=1 // pred_check_branch
      %63 = sbr.rel (0) target = $region17
    $region16: #{tpu_custom_call.1} parent=1 // pred_region
      %65 = vsyncadd [#allocation15], 0
      %s66 = sshll.u32 %s4, 4
      %s67 = int_to_ptr.hbm [resolvable:$true] %s66
      %s68 = sshll.u32 [#allocation16], 4
      %s69 = int_to_ptr.vmem [resolvable:$true] %s68
      %74 = dma.hbm_to_vmem [thread:$0]  %s67, 4096, %s69, [#allocation15], 256, 256, 16
    $region17: #{tpu_custom_call.1} parent=1 // pred_fallthru
      _
    // Predicated region
    $region18: #{tpu_custom_call.1} parent=1 // pred_check
      _
    $region19: #{tpu_custom_call.1} parent=1 // pred_check_branch
      %76 = sbr.rel (0) target = $region21
    $region20: #{tpu_custom_call.1} parent=1 // pred_region
      _
    $region21: #{tpu_custom_call.1} parent=1 // pred_fallthru
      _
    // Predicated region
    $region22: #{tpu_custom_call.1} parent=1 // pred_check
      _
    $region23: #{tpu_custom_call.1} parent=1 // pred_check_branch
      %78 = sbr.rel (0) target = $region25
    $region24: #{tpu_custom_call.1} parent=1 // pred_region
      %80 = vsyncadd [#allocation18], 0
      %s81 = sshll.u32 %s6, 4
      %s82 = int_to_ptr.hbm [resolvable:$true] %s81
      %s83 = sshll.u32 [#allocation17], 4
      %s84 = int_to_ptr.vmem [resolvable:$true] %s83
      %89 = dma.hbm_to_vmem [thread:$0]  %s82, 16384, %s84, [#allocation18], 512, 512, 32
    $region25: #{tpu_custom_call.1} parent=1 // pred_fallthru
      _
    // Predicated region
    $region26: #{tpu_custom_call.1} parent=1 // pred_check
      _
    $region27: #{tpu_custom_call.1} parent=1 // pred_check_branch
      %91 = sbr.rel (0) target = $region29
    $region28: #{tpu_custom_call.1} parent=1 // pred_region
      %93 = vsyncadd [#allocation18], 0
      %s95 = sshll.u32 %s7, 4
      %s96 = int_to_ptr.hbm [resolvable:$true] %s95
      %s97 = sshll.u32 [#allocation19], 4
      %s98 = int_to_ptr.vmem [resolvable:$true] %s97
      %100 = dma.hbm_to_vmem [thread:$0]  %s96, 64, %s98, [#allocation18]
    $region29: #{tpu_custom_call.1} parent=1 // pred_fallthru
      _
    // Predicated region
    $region30: #{tpu_custom_call.1} parent=1 // pred_check
      _
    $region31: #{tpu_custom_call.1} parent=1 // pred_check_branch
      %102 = sbr.rel (0) target = $region33
    $region32: #{tpu_custom_call.1} parent=1 // pred_region
      %104 = vsyncadd [#allocation21], 0
      %s106 = sshll.u32 %s8, 4
      %s107 = int_to_ptr.hbm [resolvable:$true] %s106
      %s108 = sshll.u32 [#allocation20], 4
      %s109 = int_to_ptr.vmem [resolvable:$true] %s108
      %111 = dma.hbm_to_vmem [thread:$0]  %s107, 64, %s109, [#allocation21]
    $region33: #{tpu_custom_call.1} parent=1 // pred_fallthru
      _
    // Predicated region
    $region34: #{tpu_custom_call.1} parent=1 // pred_check
      _
    $region35: #{tpu_custom_call.1} parent=1 // pred_check_branch
      %113 = sbr.rel (0) target = $region37
    $region36: #{tpu_custom_call.1} parent=1 // pred_region
      _
    $region37: #{tpu_custom_call.1} parent=1 // pred_fallthru
      _
    // Predicated region
    $region38: #{tpu_custom_call.1} parent=1 // pred_check
      _
    $region39: #{tpu_custom_call.1} parent=1 // pred_check_branch
      %115 = sbr.rel (0) target = $region41
    $region40: #{tpu_custom_call.1} parent=1 // pred_region
      _
    $region41: #{tpu_custom_call.1} parent=1 // pred_fallthru
      _
    // Predicated region
    $region42: #{tpu_custom_call.1} parent=1 // pred_check
      _
    $region43: #{tpu_custom_call.1} parent=1 // pred_check_branch
      %117 = sbr.rel (0) target = $region45
    $region44: #{tpu_custom_call.1} parent=1 // pred_region
      _
    $region45: #{tpu_custom_call.1} parent=1 // pred_fallthru
      _
    // Predicated region
    $region46: #{tpu_custom_call.1} parent=1 // pred_check
      _
    $region47: #{tpu_custom_call.1} parent=1 // pred_check_branch
      %119 = sbr.rel (0) target = $region49
    $region48: #{tpu_custom_call.1} parent=1 // pred_region
      %121 = dma.done [#allocation12], 16
    $region49: #{tpu_custom_call.1} parent=1 // pred_fallthru
      _
    // Predicated region
    $region50: #{tpu_custom_call.1} parent=1 // pred_check
      _
    $region51: #{tpu_custom_call.1} parent=1 // pred_check_branch
      %123 = sbr.rel (0) target = $region53
    $region52: #{tpu_custom_call.1} parent=1 // pred_region
      %125 = dma.done [#allocation10], 16
    $region53: #{tpu_custom_call.1} parent=1 // pred_fallthru
      _
    // Predicated region
    $region54: #{tpu_custom_call.1} parent=1 // pred_check
      _
    $region55: #{tpu_custom_call.1} parent=1 // pred_check_branch
      %127 = sbr.rel (0) target = $region57
    $region56: #{tpu_custom_call.1} parent=1 // pred_region
      %129 = dma.done [#allocation15], 16
    $region57: #{tpu_custom_call.1} parent=1 // pred_fallthru
      _
    // Predicated region
    $region58: #{tpu_custom_call.1} parent=1 // pred_check
      _
    $region59: #{tpu_custom_call.1} parent=1 // pred_check_branch
      %131 = sbr.rel (0) target = $region61
    $region60: #{tpu_custom_call.1} parent=1 // pred_region
      %133 = dma.done [#allocation15], 4096
    $region61: #{tpu_custom_call.1} parent=1 // pred_fallthru
      _
    // Predicated region
    $region62: #{tpu_custom_call.1} parent=1 // pred_check
      _
    $region63: #{tpu_custom_call.1} parent=1 // pred_check_branch
      %135 = sbr.rel (0) target = $region65
    $region64: #{tpu_custom_call.1} parent=1 // pred_region
      %137 = dma.done [#allocation18], 16384
    $region65: #{tpu_custom_call.1} parent=1 // pred_fallthru
      _
    // Predicated region
    $region66: #{tpu_custom_call.1} parent=1 // pred_check
      _
    $region67: #{tpu_custom_call.1} parent=1 // pred_check_branch
      %139 = sbr.rel (0) target = $region69
    $region68: #{tpu_custom_call.1} parent=1 // pred_region
      %141 = dma.done [#allocation18], 64
    $region69: #{tpu_custom_call.1} parent=1 // pred_fallthru
      _
    // Predicated region
    $region70: #{tpu_custom_call.1} parent=1 // pred_check
      _
    $region71: #{tpu_custom_call.1} parent=1 // pred_check_branch
      %143 = sbr.rel (0) target = $region73
    $region72: #{tpu_custom_call.1} parent=1 // pred_region
      %145 = dma.done [#allocation21], 64
    $region73: #{tpu_custom_call.1} parent=1 // pred_fallthru
      _
    %146 = sfence
    %s147 = sld [smem:[#allocation9]]
    %s148 = scalar_lea.hbm %s1, %s147
    // Predicated region
    $region74: #{tpu_custom_call.1} parent=1 // pred_check
      _
    $region75: #{tpu_custom_call.1} parent=1 // pred_check_branch
      %150 = sbr.rel target = $region77
    $region76: #{tpu_custom_call.1} parent=1 // pred_region
      %151 = sst [smem:[#allocation28]] [#allocation27]
      %152 = sst [smem:[#allocation29]] [#allocation26]
    $region77: #{tpu_custom_call.1} parent=1 // pred_fallthru
      _
    %154 = shalt.err (0)
    %s156 = sshll.u32 %s148, 4
    %s157 = int_to_ptr.hbm [resolvable:$true] %s156
    %s158 = sshll.u32 [#allocation2], 4
    %s159 = int_to_ptr.vmem [resolvable:$true] %s158
    %161 = dma.hbm_to_vmem [thread:$0]  %s157, 16, %s159, [#allocation7]
    %s162 = sld [smem:[#allocation9 + $0x1]]
    %s163 = scalar_lea.hbm %s1, %s162
    %s164 = scalar_lea.vmem [#allocation2], 1
    %s165 = scalar_lea.sflag [#allocation7], 1
    // Predicated region
    $region78: #{tpu_custom_call.1} parent=1 // pred_check
      _
    $region79: #{tpu_custom_call.1} parent=1 // pred_check_branch
      %167 = sbr.rel target = $region81
    $region80: #{tpu_custom_call.1} parent=1 // pred_region
      %168 = sst [smem:[#allocation28]] [#allocation31]
      %169 = sst [smem:[#allocation29]] [#allocation30]
    $region81: #{tpu_custom_call.1} parent=1 // pred_fallthru
      _
    %171 = shalt.err (0)
    %s173 = sshll.u32 %s163, 4
    %s174 = int_to_ptr.hbm [resolvable:$true] %s173
    %s175 = sshll.u32 %s164, 4
    %s176 = int_to_ptr.vmem [resolvable:$true] %s175
    %178 = dma.hbm_to_vmem [thread:$0]  %s174, 16, %s176, %s165
    %s179 = sld [smem:[#allocation9 + $0x2]]
    %s180 = scalar_lea.hbm %s1, %s179
    %s181 = scalar_lea.vmem [#allocation2], 2
    %s182 = scalar_lea.sflag [#allocation7], 2
    // Predicated region
    $region82: #{tpu_custom_call.1} parent=1 // pred_check
      _
    $region83: #{tpu_custom_call.1} parent=1 // pred_check_branch
      %184 = sbr.rel target = $region85
    $region84: #{tpu_custom_call.1} parent=1 // pred_region
      %185 = sst [smem:[#allocation28]] [#allocation33]
      %186 = sst [smem:[#allocation29]] [#allocation32]
    $region85: #{tpu_custom_call.1} parent=1 // pred_fallthru
      _
    %188 = shalt.err (0)
    %s190 = sshll.u32 %s180, 4
    %s191 = int_to_ptr.hbm [resolvable:$true] %s190
    %s192 = sshll.u32 %s181, 4
    %s193 = int_to_ptr.vmem [resolvable:$true] %s192
    %195 = dma.hbm_to_vmem [thread:$0]  %s191, 16, %s193, %s182
    %s196 = sld [smem:[#allocation9 + $0x3]]
    %s197 = scalar_lea.hbm %s1, %s196
    %s198 = scalar_lea.vmem [#allocation2], 3
    %s199 = scalar_lea.sflag [#allocation7], 3
    // Predicated region
    $region86: #{tpu_custom_call.1} parent=1 // pred_check
      _
    $region87: #{tpu_custom_call.1} parent=1 // pred_check_branch
      %201 = sbr.rel target = $region89
    $region88: #{tpu_custom_call.1} parent=1 // pred_region
      %202 = sst [smem:[#allocation28]] [#allocation35]
      %203 = sst [smem:[#allocation29]] [#allocation34]
    $region89: #{tpu_custom_call.1} parent=1 // pred_fallthru
      _
    %205 = shalt.err (0)
    %s207 = sshll.u32 %s197, 4
    %s208 = int_to_ptr.hbm [resolvable:$true] %s207
    %s209 = sshll.u32 %s198, 4
    %s210 = int_to_ptr.vmem [resolvable:$true] %s209
    %212 = dma.hbm_to_vmem [thread:$0]  %s208, 16, %s210, %s199
    %s213 = sld [smem:[#allocation9 + $0x4]]
    %s214 = scalar_lea.hbm %s1, %s213
    %s215 = scalar_lea.vmem [#allocation2], 4
    %s216 = scalar_lea.sflag [#allocation7], 4
    // Predicated region
    $region90: #{tpu_custom_call.1} parent=1 // pred_check
      _
    $region91: #{tpu_custom_call.1} parent=1 // pred_check_branch
      %218 = sbr.rel target = $region93
    $region92: #{tpu_custom_call.1} parent=1 // pred_region
      %219 = sst [smem:[#allocation28]] [#allocation37]
      %220 = sst [smem:[#allocation29]] [#allocation36]
    $region93: #{tpu_custom_call.1} parent=1 // pred_fallthru
      _
    %222 = shalt.err (0)
    %s224 = sshll.u32 %s214, 4
    %s225 = int_to_ptr.hbm [resolvable:$true] %s224
    %s226 = sshll.u32 %s215, 4
    %s227 = int_to_ptr.vmem [resolvable:$true] %s226
    %229 = dma.hbm_to_vmem [thread:$0]  %s225, 16, %s227, %s216
    %s230 = sld [smem:[#allocation9 + $0x5]]
    %s231 = scalar_lea.hbm %s1, %s230
    %s232 = scalar_lea.vmem [#allocation2], 5
    %s233 = scalar_lea.sflag [#allocation7], 5
    // Predicated region
    $region94: #{tpu_custom_call.1} parent=1 // pred_check
      _
    $region95: #{tpu_custom_call.1} parent=1 // pred_check_branch
      %235 = sbr.rel target = $region97
    $region96: #{tpu_custom_call.1} parent=1 // pred_region
      %236 = sst [smem:[#allocation28]] [#allocation39]
      %237 = sst [smem:[#allocation29]] [#allocation38]
    $region97: #{tpu_custom_call.1} parent=1 // pred_fallthru
      _
    %239 = shalt.err (0)
    %s241 = sshll.u32 %s231, 4
    %s242 = int_to_ptr.hbm [resolvable:$true] %s241
    %s243 = sshll.u32 %s232, 4
    %s244 = int_to_ptr.vmem [resolvable:$true] %s243
    %246 = dma.hbm_to_vmem [thread:$0]  %s242, 16, %s244, %s233
    %s247 = sld [smem:[#allocation9 + $0x6]]
    %s248 = scalar_lea.hbm %s1, %s247
    %s249 = scalar_lea.vmem [#allocation2], 6
    %s250 = scalar_lea.sflag [#allocation7], 6
    // Predicated region
    $region98: #{tpu_custom_call.1} parent=1 // pred_check
      _
    $region99: #{tpu_custom_call.1} parent=1 // pred_check_branch
      %252 = sbr.rel target = $region101
    $region100: #{tpu_custom_call.1} parent=1 // pred_region
      %253 = sst [smem:[#allocation28]] [#allocation41]
      %254 = sst [smem:[#allocation29]] [#allocation40]
    $region101: #{tpu_custom_call.1} parent=1 // pred_fallthru
      _
    %256 = shalt.err (0)
    %s258 = sshll.u32 %s248, 4
    %s259 = int_to_ptr.hbm [resolvable:$true] %s258
    %s260 = sshll.u32 %s249, 4
    %s261 = int_to_ptr.vmem [resolvable:$true] %s260
    %263 = dma.hbm_to_vmem [thread:$0]  %s259, 16, %s261, %s250
    %s264 = sld [smem:[#allocation9 + $0x7]]
    %s265 = scalar_lea.hbm %s1, %s264
    %s266 = scalar_lea.vmem [#allocation2], 7
    %s267 = scalar_lea.sflag [#allocation7], 7
    // Predicated region
    $region102: #{tpu_custom_call.1} parent=1 // pred_check
      _
    $region103: #{tpu_custom_call.1} parent=1 // pred_check_branch
      %269 = sbr.rel target = $region105
    $region104: #{tpu_custom_call.1} parent=1 // pred_region
      %270 = sst [smem:[#allocation28]] [#allocation43]
      %271 = sst [smem:[#allocation29]] [#allocation42]
    $region105: #{tpu_custom_call.1} parent=1 // pred_fallthru
      _
    %273 = shalt.err (0)
    %s275 = sshll.u32 %s265, 4
    %s276 = int_to_ptr.hbm [resolvable:$true] %s275
    %s277 = sshll.u32 %s266, 4
    %s278 = int_to_ptr.vmem [resolvable:$true] %s277
    %280 = dma.hbm_to_vmem [thread:$0]  %s276, 16, %s278, %s267
    // Predicated region
    $region106: #{tpu_custom_call.1} parent=1 // pred_check
      _
    $region107: #{tpu_custom_call.1} parent=1 // pred_check_branch
      %282 = sbr.rel target = $region109
    $region108: #{tpu_custom_call.1} parent=1 // pred_region
      %283 = sst [smem:[#allocation28]] [#allocation45]
      %284 = sst [smem:[#allocation29]] [#allocation44]
    $region109: #{tpu_custom_call.1} parent=1 // pred_fallthru
      _
    %286 = shalt.err (0)
    %s288 = sshll.u32 %s12, 4
    %s289 = int_to_ptr.hbm [resolvable:$true] %s288
    %s290 = sshll.u32 [#allocation3], 4
    %s291 = int_to_ptr.vmem [resolvable:$true] %s290
    %293 = dma.hbm_to_vmem [thread:$0]  %s289, 2048, %s291, [#allocation8]
    %s294 = scalar_lea.sflag [#allocation8], 1
    // Predicated region
    $region110: #{tpu_custom_call.1} parent=1 // pred_check
      _
    $region111: #{tpu_custom_call.1} parent=1 // pred_check_branch
      %296 = sbr.rel target = $region113
    $region112: #{tpu_custom_call.1} parent=1 // pred_region
      %297 = sst [smem:[#allocation28]] [#allocation47]
      %298 = sst [smem:[#allocation29]] [#allocation46]
    $region113: #{tpu_custom_call.1} parent=1 // pred_fallthru
      _
    %300 = shalt.err (0)
    %s302 = sshll.u32 %s13, 4
    %s303 = int_to_ptr.hbm [resolvable:$true] %s302
    %s304 = sshll.u32 [#allocation4], 4
    %s305 = int_to_ptr.vmem [resolvable:$true] %s304
    %307 = dma.hbm_to_vmem [thread:$0]  %s303, 2048, %s305, %s294
    %s308 = scalar_lea.sflag [#allocation8], 2
    // Predicated region
    $region114: #{tpu_custom_call.1} parent=1 // pred_check
      _
    $region115: #{tpu_custom_call.1} parent=1 // pred_check_branch
      %310 = sbr.rel target = $region117
    $region116: #{tpu_custom_call.1} parent=1 // pred_region
      %311 = sst [smem:[#allocation28]] [#allocation49]
      %312 = sst [smem:[#allocation29]] [#allocation48]
    $region117: #{tpu_custom_call.1} parent=1 // pred_fallthru
      _
    %314 = shalt.err (0)
    %s316 = sshll.u32 %s14, 4
    %s317 = int_to_ptr.hbm [resolvable:$true] %s316
    %s318 = sshll.u32 [#allocation5], 4
    %s319 = int_to_ptr.vmem [resolvable:$true] %s318
    %321 = dma.hbm_to_vmem [thread:$0]  %s317, 256, %s319, %s308
    %s322 = scalar_lea.sflag [#allocation8], 3
    // Predicated region
    $region118: #{tpu_custom_call.1} parent=1 // pred_check
      _
    $region119: #{tpu_custom_call.1} parent=1 // pred_check_branch
      %324 = sbr.rel target = $region121
    $region120: #{tpu_custom_call.1} parent=1 // pred_region
      %325 = sst [smem:[#allocation28]] [#allocation51]
      %326 = sst [smem:[#allocation29]] [#allocation50]
    $region121: #{tpu_custom_call.1} parent=1 // pred_fallthru
      _
    %328 = shalt.err (0)
    %s330 = sshll.u32 %s15, 4
    %s331 = int_to_ptr.hbm [resolvable:$true] %s330
    %s332 = sshll.u32 [#allocation6], 4
    %s333 = int_to_ptr.vmem [resolvable:$true] %s332
    %335 = dma.hbm_to_vmem [thread:$0]  %s331, 3072, %s333, %s322
    %s336 = smul.u32 1, 1
    %s337 = sshll.u32 %s336, 4
    %338 = dma.done [#allocation7], %s337
    %s339 = sshll.u32 %s336, 4
    %340 = dma.done %s165, %s339
    %s341 = sshll.u32 %s336, 4
    %342 = dma.done %s182, %s341
    %s343 = sshll.u32 %s336, 4
    %344 = dma.done %s199, %s343
    %s345 = sshll.u32 %s336, 4
    %346 = dma.done %s216, %s345
    %s347 = sshll.u32 %s336, 4
    %348 = dma.done %s233, %s347
    %s349 = sshll.u32 %s336, 4
    %350 = dma.done %s250, %s349
    %s351 = sshll.u32 %s336, 4
    %352 = dma.done %s267, %s351
    %v353 = vld [vmem:[#allocation2] sm:$0xff]
    %v354 = vld [vmem:[#allocation13] sm:$0x1]
    %v355 = vld [vmem:[#allocation14] sm:$0x1]
    %356 = vadd.xlane.f32.xlu0 %v353
    %v357 = vpop.xlane.xlu0 %356
    %v358 = vrcp.pop 128.0
    %v359 = vmul.f32 128.0, %v358
    %v360 = vsub.f32 1.0, %v359
    %v361 = vmul.f32 %v358, %v360
    %v362 = vadd.f32 %v358, %v361
    %vm363 = vweird.f32 %v358
    %v364 = vsel %vm363, %v358, %v362
    %v365 = vmul.f32 %v357, %v364
    %v366 = vsub.f32 %v353, %v365
    %v367 = vmul.f32 %v366, %v366
    %368 = vadd.xlane.f32.xlu0 %v367
    %v369 = vpop.xlane.xlu0 %368
    %v370 = vmul.f32 %v369, %v364
    %v371 = vadd.f32 %v370, 1e-05
    %v372 = vrsqrt.pop %v371
    %v373 = vmul.f32 %v372, %v371
    %v374 = vmul.f32 %v373, %v372
    %v375 = vmul.f32 0.5, %v374
    %v376 = vsub.f32 1.5, %v375
    %v377 = vmul.f32 %v372, %v376
    %vm378 = vweird.f32 %v371
    %vm379 = vweird.f32 %v372
    %vm380 = vmor %vm378, %vm379
    %v381 = vsel %vm380, %v372, %v377
    %v382 = vmul.f32 %v366, %v381
    %v384 = vperm.slane %v354, 0
    %v386 = vmul.f32 %v382, %v384
    %v388 = vperm.slane %v355, 0
    %v390 = vadd.f32 %v386, %v388
    %v391 = vpack.c.bf16 %v390, %v390
    %v392 = vld [vmem:[#allocation16] sm:$0xff]
    %v393 = vld [vmem:[#allocation16 + $0x8] sm:$0xff]
    %v394 = vld [vmem:[#allocation16 + $0x10] sm:$0xff]
    %v395 = vld [vmem:[#allocation16 + $0x18] sm:$0xff]
    %v396 = vld [vmem:[#allocation16 + $0x20] sm:$0xff]
    %v397 = vld [vmem:[#allocation16 + $0x28] sm:$0xff]
    %v398 = vld [vmem:[#allocation16 + $0x30] sm:$0xff]
    %v399 = vld [vmem:[#allocation16 + $0x38] sm:$0xff]
    %v400 = vld [vmem:[#allocation16 + $0x40] sm:$0xff]
    %v401 = vld [vmem:[#allocation16 + $0x48] sm:$0xff]
    %v402 = vld [vmem:[#allocation16 + $0x50] sm:$0xff]
    %v403 = vld [vmem:[#allocation16 + $0x58] sm:$0xff]
    %v404 = vld [vmem:[#allocation16 + $0x60] sm:$0xff]
    %v405 = vld [vmem:[#allocation16 + $0x68] sm:$0xff]
    %v406 = vld [vmem:[#allocation16 + $0x70] sm:$0xff]
    %v407 = vld [vmem:[#allocation16 + $0x78] sm:$0xff]
    %v408 = vld [vmem:[#allocation16 + $0x80] sm:$0xff]
    %v409 = vld [vmem:[#allocation16 + $0x88] sm:$0xff]
    %v410 = vld [vmem:[#allocation16 + $0x90] sm:$0xff]
    %v411 = vld [vmem:[#allocation16 + $0x98] sm:$0xff]
    %v412 = vld [vmem:[#allocation16 + $0xa0] sm:$0xff]
    %v413 = vld [vmem:[#allocation16 + $0xa8] sm:$0xff]
    %v414 = vld [vmem:[#allocation16 + $0xb0] sm:$0xff]
    %v415 = vld [vmem:[#allocation16 + $0xb8] sm:$0xff]
    %v416 = vld [vmem:[#allocation16 + $0xc0] sm:$0xff]
    %v417 = vld [vmem:[#allocation16 + $0xc8] sm:$0xff]
    %v418 = vld [vmem:[#allocation16 + $0xd0] sm:$0xff]
    %v419 = vld [vmem:[#allocation16 + $0xd8] sm:$0xff]
    %v420 = vld [vmem:[#allocation16 + $0xe0] sm:$0xff]
    %v421 = vld [vmem:[#allocation16 + $0xe8] sm:$0xff]
    %v422 = vld [vmem:[#allocation16 + $0xf0] sm:$0xff]
    %v423 = vld [vmem:[#allocation16 + $0xf8] sm:$0xff]
    %v424 = vld [vmem:[%s5] sm:$0xf]
    %v426 = vperm.slane %v424, 0
    %v427 = vperm.slane %v424, 1
    %v428 = vperm.slane %v424, 2
    %v429 = vperm.slane %v424, 3
    %v466 = vunpack.c.l.b16 %v392
    %v467 = vunpack.c.h.b16 %v392
    %v468 = vunpack.c.l.b16 %v393
    %v469 = vunpack.c.h.b16 %v393
    %v470 = vunpack.c.l.b16 %v394
    %v471 = vunpack.c.h.b16 %v394
    %v472 = vunpack.c.l.b16 %v395
    %v473 = vunpack.c.h.b16 %v395
    %v474 = vunpack.c.l.b16 %v396
    %v475 = vunpack.c.h.b16 %v396
    %v476 = vunpack.c.l.b16 %v397
    %v477 = vunpack.c.h.b16 %v397
    %v478 = vunpack.c.l.b16 %v398
    %v479 = vunpack.c.h.b16 %v398
    %v480 = vunpack.c.l.b16 %v399
    %v481 = vunpack.c.h.b16 %v399
    %v482 = vunpack.c.l.b16 %v400
    %v483 = vunpack.c.h.b16 %v400
    %v484 = vunpack.c.l.b16 %v401
    %v485 = vunpack.c.h.b16 %v401
    %v486 = vunpack.c.l.b16 %v402
    %v487 = vunpack.c.h.b16 %v402
    %v488 = vunpack.c.l.b16 %v403
    %v489 = vunpack.c.h.b16 %v403
    %v490 = vunpack.c.l.b16 %v404
    %v491 = vunpack.c.h.b16 %v404
    %v492 = vunpack.c.l.b16 %v405
    %v493 = vunpack.c.h.b16 %v405
    %v494 = vunpack.c.l.b16 %v406
    %v495 = vunpack.c.h.b16 %v406
    %v496 = vunpack.c.l.b16 %v407
    %v497 = vunpack.c.h.b16 %v407
    %v498 = vunpack.c.l.b16 %v408
    %v499 = vunpack.c.h.b16 %v408
    %v500 = vunpack.c.l.b16 %v409
    %v501 = vunpack.c.h.b16 %v409
    %v502 = vunpack.c.l.b16 %v410
    %v503 = vunpack.c.h.b16 %v410
    %v504 = vunpack.c.l.b16 %v411
    %v505 = vunpack.c.h.b16 %v411
    %v506 = vunpack.c.l.b16 %v412
    %v507 = vunpack.c.h.b16 %v412
    %v508 = vunpack.c.l.b16 %v413
    %v509 = vunpack.c.h.b16 %v413
    %v510 = vunpack.c.l.b16 %v414
    %v511 = vunpack.c.h.b16 %v414
    %v512 = vunpack.c.l.b16 %v415
    %v513 = vunpack.c.h.b16 %v415
    %v514 = vunpack.c.l.b16 %v416
    %v515 = vunpack.c.h.b16 %v416
    %v516 = vunpack.c.l.b16 %v417
    %v517 = vunpack.c.h.b16 %v417
    %v518 = vunpack.c.l.b16 %v418
    %v519 = vunpack.c.h.b16 %v418
    %v520 = vunpack.c.l.b16 %v419
    %v521 = vunpack.c.h.b16 %v419
    %v522 = vunpack.c.l.b16 %v420
    %v523 = vunpack.c.h.b16 %v420
    %v524 = vunpack.c.l.b16 %v421
    %v525 = vunpack.c.h.b16 %v421
    %v526 = vunpack.c.l.b16 %v422
    %v527 = vunpack.c.h.b16 %v422
    %v528 = vunpack.c.l.b16 %v423
    %v529 = vunpack.c.h.b16 %v423
    %v530 = vpack.c.b16 %v470, %v466
    %v531 = vpack.c.b16 %v471, %v467
    %v532 = vpack.c.b16 %v472, %v468
    %v533 = vpack.c.b16 %v473, %v469
    %v534 = vpack.c.b16 %v478, %v474
    %v535 = vpack.c.b16 %v479, %v475
    %v536 = vpack.c.b16 %v480, %v476
    %v537 = vpack.c.b16 %v481, %v477
    %v538 = vpack.c.b16 %v486, %v482
    %v539 = vpack.c.b16 %v487, %v483
    %v540 = vpack.c.b16 %v488, %v484
    %v541 = vpack.c.b16 %v489, %v485
    %v542 = vpack.c.b16 %v494, %v490
    %v543 = vpack.c.b16 %v495, %v491
    %v544 = vpack.c.b16 %v496, %v492
    %v545 = vpack.c.b16 %v497, %v493
    %v546 = vpack.c.b16 %v502, %v498
    %v547 = vpack.c.b16 %v503, %v499
    %v548 = vpack.c.b16 %v504, %v500
    %v549 = vpack.c.b16 %v505, %v501
    %v550 = vpack.c.b16 %v510, %v506
    %v551 = vpack.c.b16 %v511, %v507
    %v552 = vpack.c.b16 %v512, %v508
    %v553 = vpack.c.b16 %v513, %v509
    %v554 = vpack.c.b16 %v518, %v514
    %v555 = vpack.c.b16 %v519, %v515
    %v556 = vpack.c.b16 %v520, %v516
    %v557 = vpack.c.b16 %v521, %v517
    %v558 = vpack.c.b16 %v526, %v522
    %v559 = vpack.c.b16 %v527, %v523
    %v560 = vpack.c.b16 %v528, %v524
    %v561 = vpack.c.b16 %v529, %v525
    %594 = vmatpush.bf16.msra.mxu0 %v558
    %595 = vmatpush.bf16.msra.mxu0 %v554
    %596 = vmatpush.bf16.msra.mxu0 %v550
    %597 = vmatpush.bf16.msra.mxu0 %v546
    %598 = vmatpush.bf16.msra.mxu0 %v542
    %599 = vmatpush.bf16.msra.mxu0 %v538
    %600 = vmatpush.bf16.msra.mxu0 %v534
    %601 = vmatpush.bf16.msra.mxu0 %v530
    %602 = vmatmul.bf16.gmra.mxu0 %v391
    %v603 = vpop.f32.mrf.mxu0
    %v604 = vadd.f32 %v426, %v603
    %v605 = vpop.f32.mrf.mxu0
    %606 = vdwg.mxu0
    %607 = vmatpush.bf16.msra.mxu0 %v559
    %608 = vmatpush.bf16.msra.mxu0 %v555
    %609 = vmatpush.bf16.msra.mxu0 %v551
    %610 = vmatpush.bf16.msra.mxu0 %v547
    %611 = vmatpush.bf16.msra.mxu0 %v543
    %612 = vmatpush.bf16.msra.mxu0 %v539
    %613 = vmatpush.bf16.msra.mxu0 %v535
    %614 = vmatpush.bf16.msra.mxu0 %v531
    %615 = vmatmul.bf16.gmra.mxu0 %v391
    %v616 = vpop.f32.mrf.mxu0
    %v617 = vadd.f32 %v427, %v616
    %v618 = vpop.f32.mrf.mxu0
    %619 = vdwg.mxu0
    %620 = vmatpush.bf16.msra.mxu0 %v560
    %621 = vmatpush.bf16.msra.mxu0 %v556
    %622 = vmatpush.bf16.msra.mxu0 %v552
    %623 = vmatpush.bf16.msra.mxu0 %v548
    %624 = vmatpush.bf16.msra.mxu0 %v544
    %625 = vmatpush.bf16.msra.mxu0 %v540
    %626 = vmatpush.bf16.msra.mxu0 %v536
    %627 = vmatpush.bf16.msra.mxu0 %v532
    %628 = vmatmul.bf16.gmra.mxu0 %v391
    %v629 = vpop.f32.mrf.mxu0
    %v630 = vadd.f32 %v428, %v629
    %v631 = vpop.f32.mrf.mxu0
    %632 = vdwg.mxu0
    %633 = vmatpush.bf16.msra.mxu0 %v561
    %634 = vmatpush.bf16.msra.mxu0 %v557
    %635 = vmatpush.bf16.msra.mxu0 %v553
    %636 = vmatpush.bf16.msra.mxu0 %v549
    %637 = vmatpush.bf16.msra.mxu0 %v545
    %638 = vmatpush.bf16.msra.mxu0 %v541
    %639 = vmatpush.bf16.msra.mxu0 %v537
    %640 = vmatpush.bf16.msra.mxu0 %v533
    %641 = vmatmul.bf16.gmra.mxu0 %v391
    %v642 = vpop.f32.mrf.mxu0
    %v643 = vadd.f32 %v429, %v642
    %v644 = vpop.f32.mrf.mxu0
    %645 = vdwg.mxu0
    %v646 = vld [vmem:[#allocation17] sm:$0xff]
    %v647 = vld [vmem:[#allocation17 + $0x8] sm:$0xff]
    %v648 = vld [vmem:[#allocation17 + $0x10] sm:$0xff]
    %v649 = vld [vmem:[#allocation17 + $0x18] sm:$0xff]
    %v650 = vld [vmem:[#allocation17 + $0x20] sm:$0xff]
    %v651 = vld [vmem:[#allocation17 + $0x28] sm:$0xff]
    %v652 = vld [vmem:[#allocation17 + $0x30] sm:$0xff]
    %v653 = vld [vmem:[#allocation17 + $0x38] sm:$0xff]
    %v654 = vld [vmem:[#allocation17 + $0x40] sm:$0xff]
    %v655 = vld [vmem:[#allocation17 + $0x48] sm:$0xff]
    %v656 = vld [vmem:[#allocation17 + $0x50] sm:$0xff]
    %v657 = vld [vmem:[#allocation17 + $0x58] sm:$0xff]
    %v658 = vld [vmem:[#allocation17 + $0x60] sm:$0xff]
    %v659 = vld [vmem:[#allocation17 + $0x68] sm:$0xff]
    %v660 = vld [vmem:[#allocation17 + $0x70] sm:$0xff]
    %v661 = vld [vmem:[#allocation17 + $0x78] sm:$0xff]
    %v662 = vld [vmem:[#allocation17 + $0x80] sm:$0xff]
    %v663 = vld [vmem:[#allocation17 + $0x88] sm:$0xff]
    %v664 = vld [vmem:[#allocation17 + $0x90] sm:$0xff]
    %v665 = vld [vmem:[#allocation17 + $0x98] sm:$0xff]
    %v666 = vld [vmem:[#allocation17 + $0xa0] sm:$0xff]
    %v667 = vld [vmem:[#allocation17 + $0xa8] sm:$0xff]
    %v668 = vld [vmem:[#allocation17 + $0xb0] sm:$0xff]
    %v669 = vld [vmem:[#allocation17 + $0xb8] sm:$0xff]
    %v670 = vld [vmem:[#allocation17 + $0xc0] sm:$0xff]
    %v671 = vld [vmem:[#allocation17 + $0xc8] sm:$0xff]
    %v672 = vld [vmem:[#allocation17 + $0xd0] sm:$0xff]
    %v673 = vld [vmem:[#allocation17 + $0xd8] sm:$0xff]
    %v674 = vld [vmem:[#allocation17 + $0xe0] sm:$0xff]
    %v675 = vld [vmem:[#allocation17 + $0xe8] sm:$0xff]
    %v676 = vld [vmem:[#allocation17 + $0xf0] sm:$0xff]
    %v677 = vld [vmem:[#allocation17 + $0xf8] sm:$0xff]
    %v678 = vld [vmem:[#allocation17 + $0x100] sm:$0xff]
    %v679 = vld [vmem:[#allocation17 + $0x108] sm:$0xff]
    %v680 = vld [vmem:[#allocation17 + $0x110] sm:$0xff]
    %v681 = vld [vmem:[#allocation17 + $0x118] sm:$0xff]
    %v682 = vld [vmem:[#allocation17 + $0x120] sm:$0xff]
    %v683 = vld [vmem:[#allocation17 + $0x128] sm:$0xff]
    %v684 = vld [vmem:[#allocation17 + $0x130] sm:$0xff]
    %v685 = vld [vmem:[#allocation17 + $0x138] sm:$0xff]
    %v686 = vld [vmem:[#allocation17 + $0x140] sm:$0xff]
    %v687 = vld [vmem:[#allocation17 + $0x148] sm:$0xff]
    %v688 = vld [vmem:[#allocation17 + $0x150] sm:$0xff]
    %v689 = vld [vmem:[#allocation17 + $0x158] sm:$0xff]
    %v690 = vld [vmem:[#allocation17 + $0x160] sm:$0xff]
    %v691 = vld [vmem:[#allocation17 + $0x168] sm:$0xff]
    %v692 = vld [vmem:[#allocation17 + $0x170] sm:$0xff]
    %v693 = vld [vmem:[#allocation17 + $0x178] sm:$0xff]
    %v694 = vld [vmem:[#allocation17 + $0x180] sm:$0xff]
    %v695 = vld [vmem:[#allocation17 + $0x188] sm:$0xff]
    %v696 = vld [vmem:[#allocation17 + $0x190] sm:$0xff]
    %v697 = vld [vmem:[#allocation17 + $0x198] sm:$0xff]
    %v698 = vld [vmem:[#allocation17 + $0x1a0] sm:$0xff]
    %v699 = vld [vmem:[#allocation17 + $0x1a8] sm:$0xff]
    %v700 = vld [vmem:[#allocation17 + $0x1b0] sm:$0xff]
    %v701 = vld [vmem:[#allocation17 + $0x1b8] sm:$0xff]
    %v702 = vld [vmem:[#allocation17 + $0x1c0] sm:$0xff]
    %v703 = vld [vmem:[#allocation17 + $0x1c8] sm:$0xff]
    %v704 = vld [vmem:[#allocation17 + $0x1d0] sm:$0xff]
    %v705 = vld [vmem:[#allocation17 + $0x1d8] sm:$0xff]
    %v706 = vld [vmem:[#allocation17 + $0x1e0] sm:$0xff]
    %v707 = vld [vmem:[#allocation17 + $0x1e8] sm:$0xff]
    %v708 = vld [vmem:[#allocation17 + $0x1f0] sm:$0xff]
    %v709 = vld [vmem:[#allocation17 + $0x1f8] sm:$0xff]
    %v710 = vld [vmem:[#allocation17 + $0x200] sm:$0xff]
    %v711 = vld [vmem:[#allocation17 + $0x208] sm:$0xff]
    %v712 = vld [vmem:[#allocation17 + $0x210] sm:$0xff]
    %v713 = vld [vmem:[#allocation17 + $0x218] sm:$0xff]
    %v714 = vld [vmem:[#allocation17 + $0x220] sm:$0xff]
    %v715 = vld [vmem:[#allocation17 + $0x228] sm:$0xff]
    %v716 = vld [vmem:[#allocation17 + $0x230] sm:$0xff]
    %v717 = vld [vmem:[#allocation17 + $0x238] sm:$0xff]
    %v718 = vld [vmem:[#allocation17 + $0x240] sm:$0xff]
    %v719 = vld [vmem:[#allocation17 + $0x248] sm:$0xff]
    %v720 = vld [vmem:[#allocation17 + $0x250] sm:$0xff]
    %v721 = vld [vmem:[#allocation17 + $0x258] sm:$0xff]
    %v722 = vld [vmem:[#allocation17 + $0x260] sm:$0xff]
    %v723 = vld [vmem:[#allocation17 + $0x268] sm:$0xff]
    %v724 = vld [vmem:[#allocation17 + $0x270] sm:$0xff]
    %v725 = vld [vmem:[#allocation17 + $0x278] sm:$0xff]
    %v726 = vld [vmem:[#allocation17 + $0x280] sm:$0xff]
    %v727 = vld [vmem:[#allocation17 + $0x288] sm:$0xff]
    %v728 = vld [vmem:[#allocation17 + $0x290] sm:$0xff]
    %v729 = vld [vmem:[#allocation17 + $0x298] sm:$0xff]
    %v730 = vld [vmem:[#allocation17 + $0x2a0] sm:$0xff]
    %v731 = vld [vmem:[#allocation17 + $0x2a8] sm:$0xff]
    %v732 = vld [vmem:[#allocation17 + $0x2b0] sm:$0xff]
    %v733 = vld [vmem:[#allocation17 + $0x2b8] sm:$0xff]
    %v734 = vld [vmem:[#allocation17 + $0x2c0] sm:$0xff]
    %v735 = vld [vmem:[#allocation17 + $0x2c8] sm:$0xff]
    %v736 = vld [vmem:[#allocation17 + $0x2d0] sm:$0xff]
    %v737 = vld [vmem:[#allocation17 + $0x2d8] sm:$0xff]
    %v738 = vld [vmem:[#allocation17 + $0x2e0] sm:$0xff]
    %v739 = vld [vmem:[#allocation17 + $0x2e8] sm:$0xff]
    %v740 = vld [vmem:[#allocation17 + $0x2f0] sm:$0xff]
    %v741 = vld [vmem:[#allocation17 + $0x2f8] sm:$0xff]
    %v742 = vld [vmem:[#allocation17 + $0x300] sm:$0xff]
    %v743 = vld [vmem:[#allocation17 + $0x308] sm:$0xff]
    %v744 = vld [vmem:[#allocation17 + $0x310] sm:$0xff]
    %v745 = vld [vmem:[#allocation17 + $0x318] sm:$0xff]
    %v746 = vld [vmem:[#allocation17 + $0x320] sm:$0xff]
    %v747 = vld [vmem:[#allocation17 + $0x328] sm:$0xff]
    %v748 = vld [vmem:[#allocation17 + $0x330] sm:$0xff]
    %v749 = vld [vmem:[#allocation17 + $0x338] sm:$0xff]
    %v750 = vld [vmem:[#allocation17 + $0x340] sm:$0xff]
    %v751 = vld [vmem:[#allocation17 + $0x348] sm:$0xff]
    %v752 = vld [vmem:[#allocation17 + $0x350] sm:$0xff]
    %v753 = vld [vmem:[#allocation17 + $0x358] sm:$0xff]
    %v754 = vld [vmem:[#allocation17 + $0x360] sm:$0xff]
    %v755 = vld [vmem:[#allocation17 + $0x368] sm:$0xff]
    %v756 = vld [vmem:[#allocation17 + $0x370] sm:$0xff]
    %v757 = vld [vmem:[#allocation17 + $0x378] sm:$0xff]
    %v758 = vld [vmem:[#allocation17 + $0x380] sm:$0xff]
    %v759 = vld [vmem:[#allocation17 + $0x388] sm:$0xff]
    %v760 = vld [vmem:[#allocation17 + $0x390] sm:$0xff]
    %v761 = vld [vmem:[#allocation17 + $0x398] sm:$0xff]
    %v762 = vld [vmem:[#allocation17 + $0x3a0] sm:$0xff]
    %v763 = vld [vmem:[#allocation17 + $0x3a8] sm:$0xff]
    %v764 = vld [vmem:[#allocation17 + $0x3b0] sm:$0xff]
    %v765 = vld [vmem:[#allocation17 + $0x3b8] sm:$0xff]
    %v766 = vld [vmem:[#allocation17 + $0x3c0] sm:$0xff]
    %v767 = vld [vmem:[#allocation17 + $0x3c8] sm:$0xff]
    %v768 = vld [vmem:[#allocation17 + $0x3d0] sm:$0xff]
    %v769 = vld [vmem:[#allocation17 + $0x3d8] sm:$0xff]
    %v770 = vld [vmem:[#allocation17 + $0x3e0] sm:$0xff]
    %v771 = vld [vmem:[#allocation17 + $0x3e8] sm:$0xff]
    %v772 = vld [vmem:[#allocation17 + $0x3f0] sm:$0xff]
    %v773 = vld [vmem:[#allocation17 + $0x3f8] sm:$0xff]
    %v774 = vld [vmem:[#allocation19] sm:$0xf]
    %v775 = vld [vmem:[#allocation20] sm:$0x1]
    %v776 = vld [vmem:[#allocation20 + $0x1] sm:$0x1]
    %v777 = vld [vmem:[#allocation20 + $0x2] sm:$0x1]
    %v778 = vld [vmem:[#allocation20 + $0x3] sm:$0x1]
    %v779 = vpack.c.bf16 %v775, %v775
    %v780 = vpack.c.bf16 %v776, %v776
    %v845 = vunpack.c.l.b16 %v646
    %v846 = vunpack.c.h.b16 %v646
    %v847 = vunpack.c.l.b16 %v647
    %v848 = vunpack.c.h.b16 %v647
    %v849 = vunpack.c.l.b16 %v650
    %v850 = vunpack.c.h.b16 %v650
    %v851 = vunpack.c.l.b16 %v651
    %v852 = vunpack.c.h.b16 %v651
    %v853 = vunpack.c.l.b16 %v654
    %v854 = vunpack.c.h.b16 %v654
    %v855 = vunpack.c.l.b16 %v655
    %v856 = vunpack.c.h.b16 %v655
    %v857 = vunpack.c.l.b16 %v658
    %v858 = vunpack.c.h.b16 %v658
    %v859 = vunpack.c.l.b16 %v659
    %v860 = vunpack.c.h.b16 %v659
    %v861 = vunpack.c.l.b16 %v662
    %v862 = vunpack.c.h.b16 %v662
    %v863 = vunpack.c.l.b16 %v663
    %v864 = vunpack.c.h.b16 %v663
    %v865 = vunpack.c.l.b16 %v666
    %v866 = vunpack.c.h.b16 %v666
    %v867 = vunpack.c.l.b16 %v667
    %v868 = vunpack.c.h.b16 %v667
    %v869 = vunpack.c.l.b16 %v670
    %v870 = vunpack.c.h.b16 %v670
    %v871 = vunpack.c.l.b16 %v671
    %v872 = vunpack.c.h.b16 %v671
    %v873 = vunpack.c.l.b16 %v674
    %v874 = vunpack.c.h.b16 %v674
    %v875 = vunpack.c.l.b16 %v675
    %v876 = vunpack.c.h.b16 %v675
    %v877 = vunpack.c.l.b16 %v678
    %v878 = vunpack.c.h.b16 %v678
    %v879 = vunpack.c.l.b16 %v679
    %v880 = vunpack.c.h.b16 %v679
    %v881 = vunpack.c.l.b16 %v682
    %v882 = vunpack.c.h.b16 %v682
    %v883 = vunpack.c.l.b16 %v683
    %v884 = vunpack.c.h.b16 %v683
    %v885 = vunpack.c.l.b16 %v686
    %v886 = vunpack.c.h.b16 %v686
    %v887 = vunpack.c.l.b16 %v687
    %v888 = vunpack.c.h.b16 %v687
    %v889 = vunpack.c.l.b16 %v690
    %v890 = vunpack.c.h.b16 %v690
    %v891 = vunpack.c.l.b16 %v691
    %v892 = vunpack.c.h.b16 %v691
    %v893 = vunpack.c.l.b16 %v694
    %v894 = vunpack.c.h.b16 %v694
    %v895 = vunpack.c.l.b16 %v695
    %v896 = vunpack.c.h.b16 %v695
    %v897 = vunpack.c.l.b16 %v698
    %v898 = vunpack.c.h.b16 %v698
    %v899 = vunpack.c.l.b16 %v699
    %v900 = vunpack.c.h.b16 %v699
    %v901 = vunpack.c.l.b16 %v702
    %v902 = vunpack.c.h.b16 %v702
    %v903 = vunpack.c.l.b16 %v703
    %v904 = vunpack.c.h.b16 %v703
    %v905 = vunpack.c.l.b16 %v706
    %v906 = vunpack.c.h.b16 %v706
    %v907 = vunpack.c.l.b16 %v707
    %v908 = vunpack.c.h.b16 %v707
    %v909 = vunpack.c.l.b16 %v710
    %v910 = vunpack.c.h.b16 %v710
    %v911 = vunpack.c.l.b16 %v711
    %v912 = vunpack.c.h.b16 %v711
    %v913 = vunpack.c.l.b16 %v714
    %v914 = vunpack.c.h.b16 %v714
    %v915 = vunpack.c.l.b16 %v715
    %v916 = vunpack.c.h.b16 %v715
    %v917 = vunpack.c.l.b16 %v718
    %v918 = vunpack.c.h.b16 %v718
    %v919 = vunpack.c.l.b16 %v719
    %v920 = vunpack.c.h.b16 %v719
    %v921 = vunpack.c.l.b16 %v722
    %v922 = vunpack.c.h.b16 %v722
    %v923 = vunpack.c.l.b16 %v723
    %v924 = vunpack.c.h.b16 %v723
    %v925 = vunpack.c.l.b16 %v726
    %v926 = vunpack.c.h.b16 %v726
    %v927 = vunpack.c.l.b16 %v727
    %v928 = vunpack.c.h.b16 %v727
    %v929 = vunpack.c.l.b16 %v730
    %v930 = vunpack.c.h.b16 %v730
    %v931 = vunpack.c.l.b16 %v731
    %v932 = vunpack.c.h.b16 %v731
    %v933 = vunpack.c.l.b16 %v734
    %v934 = vunpack.c.h.b16 %v734
    %v935 = vunpack.c.l.b16 %v735
    %v936 = vunpack.c.h.b16 %v735
    %v937 = vunpack.c.l.b16 %v738
    %v938 = vunpack.c.h.b16 %v738
    %v939 = vunpack.c.l.b16 %v739
    %v940 = vunpack.c.h.b16 %v739
    %v941 = vunpack.c.l.b16 %v742
    %v942 = vunpack.c.h.b16 %v742
    %v943 = vunpack.c.l.b16 %v743
    %v944 = vunpack.c.h.b16 %v743
    %v945 = vunpack.c.l.b16 %v746
    %v946 = vunpack.c.h.b16 %v746
    %v947 = vunpack.c.l.b16 %v747
    %v948 = vunpack.c.h.b16 %v747
    %v949 = vunpack.c.l.b16 %v750
    %v950 = vunpack.c.h.b16 %v750
    %v951 = vunpack.c.l.b16 %v751
    %v952 = vunpack.c.h.b16 %v751
    %v953 = vunpack.c.l.b16 %v754
    %v954 = vunpack.c.h.b16 %v754
    %v955 = vunpack.c.l.b16 %v755
    %v956 = vunpack.c.h.b16 %v755
    %v957 = vunpack.c.l.b16 %v758
    %v958 = vunpack.c.h.b16 %v758
    %v959 = vunpack.c.l.b16 %v759
    %v960 = vunpack.c.h.b16 %v759
    %v961 = vunpack.c.l.b16 %v762
    %v962 = vunpack.c.h.b16 %v762
    %v963 = vunpack.c.l.b16 %v763
    %v964 = vunpack.c.h.b16 %v763
    %v965 = vunpack.c.l.b16 %v766
    %v966 = vunpack.c.h.b16 %v766
    %v967 = vunpack.c.l.b16 %v767
    %v968 = vunpack.c.h.b16 %v767
    %v969 = vunpack.c.l.b16 %v770
    %v970 = vunpack.c.h.b16 %v770
    %v971 = vunpack.c.l.b16 %v771
    %v972 = vunpack.c.h.b16 %v771
    %v973 = vpack.c.b16 %v849, %v845
    %v974 = vpack.c.b16 %v850, %v846
    %v975 = vpack.c.b16 %v851, %v847
    %v976 = vpack.c.b16 %v852, %v848
    %v977 = vpack.c.b16 %v857, %v853
    %v978 = vpack.c.b16 %v858, %v854
    %v979 = vpack.c.b16 %v859, %v855
    %v980 = vpack.c.b16 %v860, %v856
    %v981 = vpack.c.b16 %v865, %v861
    %v982 = vpack.c.b16 %v866, %v862
    %v983 = vpack.c.b16 %v867, %v863
    %v984 = vpack.c.b16 %v868, %v864
    %v985 = vpack.c.b16 %v873, %v869
    %v986 = vpack.c.b16 %v874, %v870
    %v987 = vpack.c.b16 %v875, %v871
    %v988 = vpack.c.b16 %v876, %v872
    %v989 = vpack.c.b16 %v881, %v877
    %v990 = vpack.c.b16 %v882, %v878
    %v991 = vpack.c.b16 %v883, %v879
    %v992 = vpack.c.b16 %v884, %v880
    %v993 = vpack.c.b16 %v889, %v885
    %v994 = vpack.c.b16 %v890, %v886
    %v995 = vpack.c.b16 %v891, %v887
    %v996 = vpack.c.b16 %v892, %v888
    %v997 = vpack.c.b16 %v897, %v893
    %v998 = vpack.c.b16 %v898, %v894
    %v999 = vpack.c.b16 %v899, %v895
    %v1000 = vpack.c.b16 %v900, %v896
    %v1001 = vpack.c.b16 %v905, %v901
    %v1002 = vpack.c.b16 %v906, %v902
    %v1003 = vpack.c.b16 %v907, %v903
    %v1004 = vpack.c.b16 %v908, %v904
    %v1005 = vpack.c.b16 %v913, %v909
    %v1006 = vpack.c.b16 %v914, %v910
    %v1007 = vpack.c.b16 %v915, %v911
    %v1008 = vpack.c.b16 %v916, %v912
    %v1009 = vpack.c.b16 %v921, %v917
    %v1010 = vpack.c.b16 %v922, %v918
    %v1011 = vpack.c.b16 %v923, %v919
    %v1012 = vpack.c.b16 %v924, %v920
    %v1013 = vpack.c.b16 %v929, %v925
    %v1014 = vpack.c.b16 %v930, %v926
    %v1015 = vpack.c.b16 %v931, %v927
    %v1016 = vpack.c.b16 %v932, %v928
    %v1017 = vpack.c.b16 %v937, %v933
    %v1018 = vpack.c.b16 %v938, %v934
    %v1019 = vpack.c.b16 %v939, %v935
    %v1020 = vpack.c.b16 %v940, %v936
    %v1021 = vpack.c.b16 %v945, %v941
    %v1022 = vpack.c.b16 %v946, %v942
    %v1023 = vpack.c.b16 %v947, %v943
    %v1024 = vpack.c.b16 %v948, %v944
    %v1025 = vpack.c.b16 %v953, %v949
    %v1026 = vpack.c.b16 %v954, %v950
    %v1027 = vpack.c.b16 %v955, %v951
    %v1028 = vpack.c.b16 %v956, %v952
    %v1029 = vpack.c.b16 %v961, %v957
    %v1030 = vpack.c.b16 %v962, %v958
    %v1031 = vpack.c.b16 %v963, %v959
    %v1032 = vpack.c.b16 %v964, %v960
    %v1033 = vpack.c.b16 %v969, %v965
    %v1034 = vpack.c.b16 %v970, %v966
    %v1035 = vpack.c.b16 %v971, %v967
    %v1036 = vpack.c.b16 %v972, %v968
    %1101 = vmatpush.bf16.msra.mxu0 %v1001
    %1102 = vmatpush.bf16.msra.mxu0 %v997
    %1103 = vmatpush.bf16.msra.mxu0 %v993
    %1104 = vmatpush.bf16.msra.mxu0 %v989
    %1105 = vmatpush.bf16.msra.mxu0 %v985
    %1106 = vmatpush.bf16.msra.mxu0 %v981
    %1107 = vmatpush.bf16.msra.mxu0 %v977
    %1108 = vmatpush.bf16.msra.mxu0 %v973
    %1109 = vmatmul.bf16.gmra.mxu0 %v779
    %v1110 = vpop.f32.mrf.mxu0
    %v1111 = vadd.f32 0.0, %v1110
    %v1112 = vpop.f32.mrf.mxu0
    %1113 = vdwg.mxu0
    %1114 = vmatpush.bf16.msra.mxu0 %v1033
    %1115 = vmatpush.bf16.msra.mxu0 %v1029
    %1116 = vmatpush.bf16.msra.mxu0 %v1025
    %1117 = vmatpush.bf16.msra.mxu0 %v1021
    %1118 = vmatpush.bf16.msra.mxu0 %v1017
    %1119 = vmatpush.bf16.msra.mxu0 %v1013
    %1120 = vmatpush.bf16.msra.mxu0 %v1009
    %1121 = vmatpush.bf16.msra.mxu0 %v1005
    %1122 = vmatmul.bf16.gmra.mxu0 %v780
    %v1123 = vpop.f32.mrf.mxu0
    %v1124 = vadd.f32 %v1111, %v1123
    %v1125 = vpop.f32.mrf.mxu0
    %1126 = vdwg.mxu0
    %1127 = vmatpush.bf16.msra.mxu0 %v1002
    %1128 = vmatpush.bf16.msra.mxu0 %v998
    %1129 = vmatpush.bf16.msra.mxu0 %v994
    %1130 = vmatpush.bf16.msra.mxu0 %v990
    %1131 = vmatpush.bf16.msra.mxu0 %v986
    %1132 = vmatpush.bf16.msra.mxu0 %v982
    %1133 = vmatpush.bf16.msra.mxu0 %v978
    %1134 = vmatpush.bf16.msra.mxu0 %v974
    %1135 = vmatmul.bf16.gmra.mxu0 %v779
    %v1136 = vpop.f32.mrf.mxu0
    %v1137 = vadd.f32 0.0, %v1136
    %v1138 = vpop.f32.mrf.mxu0
    %1139 = vdwg.mxu0
    %1140 = vmatpush.bf16.msra.mxu0 %v1034
    %1141 = vmatpush.bf16.msra.mxu0 %v1030
    %1142 = vmatpush.bf16.msra.mxu0 %v1026
    %1143 = vmatpush.bf16.msra.mxu0 %v1022
    %1144 = vmatpush.bf16.msra.mxu0 %v1018
    %1145 = vmatpush.bf16.msra.mxu0 %v1014
    %1146 = vmatpush.bf16.msra.mxu0 %v1010
    %1147 = vmatpush.bf16.msra.mxu0 %v1006
    %1148 = vmatmul.bf16.gmra.mxu0 %v780
    %v1149 = vpop.f32.mrf.mxu0
    %v1150 = vadd.f32 %v1137, %v1149
    %v1151 = vpop.f32.mrf.mxu0
    %1152 = vdwg.mxu0
    %1153 = vmatpush.bf16.msra.mxu0 %v1003
    %1154 = vmatpush.bf16.msra.mxu0 %v999
    %1155 = vmatpush.bf16.msra.mxu0 %v995
    %1156 = vmatpush.bf16.msra.mxu0 %v991
    %1157 = vmatpush.bf16.msra.mxu0 %v987
    %1158 = vmatpush.bf16.msra.mxu0 %v983
    %1159 = vmatpush.bf16.msra.mxu0 %v979
    %1160 = vmatpush.bf16.msra.mxu0 %v975
    %1161 = vmatmul.bf16.gmra.mxu0 %v779
    %v1162 = vpop.f32.mrf.mxu0
    %v1163 = vadd.f32 0.0, %v1162
    %v1164 = vpop.f32.mrf.mxu0
    %1165 = vdwg.mxu0
    %1166 = vmatpush.bf16.msra.mxu0 %v1035
    %1167 = vmatpush.bf16.msra.mxu0 %v1031
    %1168 = vmatpush.bf16.msra.mxu0 %v1027
    %1169 = vmatpush.bf16.msra.mxu0 %v1023
    %1170 = vmatpush.bf16.msra.mxu0 %v1019
    %1171 = vmatpush.bf16.msra.mxu0 %v1015
    %1172 = vmatpush.bf16.msra.mxu0 %v1011
    %1173 = vmatpush.bf16.msra.mxu0 %v1007
    %1174 = vmatmul.bf16.gmra.mxu0 %v780
    %v1175 = vpop.f32.mrf.mxu0
    %v1176 = vadd.f32 %v1163, %v1175
    %v1177 = vpop.f32.mrf.mxu0
    %1178 = vdwg.mxu0
    %1179 = vmatpush.bf16.msra.mxu0 %v1004
    %1180 = vmatpush.bf16.msra.mxu0 %v1000
    %1181 = vmatpush.bf16.msra.mxu0 %v996
    %1182 = vmatpush.bf16.msra.mxu0 %v992
    %1183 = vmatpush.bf16.msra.mxu0 %v988
    %1184 = vmatpush.bf16.msra.mxu0 %v984
    %1185 = vmatpush.bf16.msra.mxu0 %v980
    %1186 = vmatpush.bf16.msra.mxu0 %v976
    %1187 = vmatmul.bf16.gmra.mxu0 %v779
    %v1188 = vpop.f32.mrf.mxu0
    %v1189 = vadd.f32 0.0, %v1188
    %v1190 = vpop.f32.mrf.mxu0
    %1191 = vdwg.mxu0
    %1192 = vmatpush.bf16.msra.mxu0 %v1036
    %1193 = vmatpush.bf16.msra.mxu0 %v1032
    %1194 = vmatpush.bf16.msra.mxu0 %v1028
    %1195 = vmatpush.bf16.msra.mxu0 %v1024
    %1196 = vmatpush.bf16.msra.mxu0 %v1020
    %1197 = vmatpush.bf16.msra.mxu0 %v1016
    %1198 = vmatpush.bf16.msra.mxu0 %v1012
    %1199 = vmatpush.bf16.msra.mxu0 %v1008
    %1200 = vmatmul.bf16.gmra.mxu0 %v780
    %v1201 = vpop.f32.mrf.mxu0
    %v1202 = vadd.f32 %v1189, %v1201
    %v1203 = vpop.f32.mrf.mxu0
    %1204 = vdwg.mxu0
    %v1205 = vadd.f32 %v604, %v1124
    %v1206 = vadd.f32 %v617, %v1150
    %v1207 = vadd.f32 %v630, %v1176
    %v1208 = vadd.f32 %v643, %v1202
    %v1209 = vxor.u32 %v1205, 2147483648
    %v1210 = vxor.u32 %v1206, 2147483648
    %v1211 = vxor.u32 %v1207, 2147483648
    %v1212 = vmul.f32 %v1209, 1.442695
    %v1213 = vpow.pop %v1212
    %v1214 = vmul.f32 %v1210, 1.442695
    %v1215 = vpow.pop %v1214
    %v1216 = vmul.f32 %v1211, 1.442695
    %v1217 = vpow.pop %v1216
    %v1218 = vadd.f32 %v1213, 1.0
    %v1219 = vadd.f32 %v1215, 1.0
    %v1220 = vadd.f32 %v1217, 1.0
    %v1221 = vrcp.pop %v1218
    %v1222 = vmul.f32 %v1218, %v1221
    %v1223 = vsub.f32 1.0, %v1222
    %v1224 = vmul.f32 %v1221, %v1223
    %v1225 = vadd.f32 %v1221, %v1224
    %vm1226 = vweird.f32 %v1218
    %vm1227 = vweird.f32 %v1221
    %vm1228 = vmor %vm1226, %vm1227
    %v1229 = vsel %vm1228, %v1221, %v1225
    %v1230 = vand.u32 2147483647, %v1218
    %vm1231 = vcmp.eq.f32.partialorder %v1230, 8.507059e+37
    %v1232 = vand.u32 %v1218, 2147483648
    %v1233 = vor.u32 1.1754944e-38, %v1232
    %v1234 = vsel %vm1231, %v1233, %v1229
    %v1235 = vmul.f32 1.0, %v1234
    %v1236 = vrcp.pop %v1219
    %v1237 = vmul.f32 %v1219, %v1236
    %v1238 = vsub.f32 1.0, %v1237
    %v1239 = vmul.f32 %v1236, %v1238
    %v1240 = vadd.f32 %v1236, %v1239
    %vm1241 = vweird.f32 %v1219
    %vm1242 = vweird.f32 %v1236
    %vm1243 = vmor %vm1241, %vm1242
    %v1244 = vsel %vm1243, %v1236, %v1240
    %v1245 = vand.u32 2147483647, %v1219
    %vm1246 = vcmp.eq.f32.partialorder %v1245, 8.507059e+37
    %v1247 = vand.u32 %v1219, 2147483648
    %v1248 = vor.u32 1.1754944e-38, %v1247
    %v1249 = vsel %vm1246, %v1248, %v1244
    %v1250 = vmul.f32 1.0, %v1249
    %v1251 = vrcp.pop %v1220
    %v1252 = vmul.f32 %v1220, %v1251
    %v1253 = vsub.f32 1.0, %v1252
    %v1254 = vmul.f32 %v1251, %v1253
    %v1255 = vadd.f32 %v1251, %v1254
    %vm1256 = vweird.f32 %v1220
    %vm1257 = vweird.f32 %v1251
    %vm1258 = vmor %vm1256, %vm1257
    %v1259 = vsel %vm1258, %v1251, %v1255
    %v1260 = vand.u32 2147483647, %v1220
    %vm1261 = vcmp.eq.f32.partialorder %v1260, 8.507059e+37
    %v1262 = vand.u32 %v1220, 2147483648
    %v1263 = vor.u32 1.1754944e-38, %v1262
    %v1264 = vsel %vm1261, %v1263, %v1259
    %v1265 = vmul.f32 1.0, %v1264
    %v1266 = vtanh.pop %v1208
    %v1267 = vmul.f32 %v1250, %v777
    %v1268 = vmul.f32 %v1235, %v1266
    %v1269 = vadd.f32 %v1267, %v1268
    %v1270 = vtanh.pop %v1269
    %v1271 = vmul.f32 %v1265, %v1270
    %v1272 = vpack.c.bf16 %v1271, %v1271
    %v1337 = vunpack.c.l.b16 %v648
    %v1338 = vunpack.c.h.b16 %v648
    %v1339 = vunpack.c.l.b16 %v649
    %v1340 = vunpack.c.h.b16 %v649
    %v1341 = vunpack.c.l.b16 %v652
    %v1342 = vunpack.c.h.b16 %v652
    %v1343 = vunpack.c.l.b16 %v653
    %v1344 = vunpack.c.h.b16 %v653
    %v1345 = vunpack.c.l.b16 %v656
    %v1346 = vunpack.c.h.b16 %v656
    %v1347 = vunpack.c.l.b16 %v657
    %v1348 = vunpack.c.h.b16 %v657
    %v1349 = vunpack.c.l.b16 %v660
    %v1350 = vunpack.c.h.b16 %v660
    %v1351 = vunpack.c.l.b16 %v661
    %v1352 = vunpack.c.h.b16 %v661
    %v1353 = vunpack.c.l.b16 %v664
    %v1354 = vunpack.c.h.b16 %v664
    %v1355 = vunpack.c.l.b16 %v665
    %v1356 = vunpack.c.h.b16 %v665
    %v1357 = vunpack.c.l.b16 %v668
    %v1358 = vunpack.c.h.b16 %v668
    %v1359 = vunpack.c.l.b16 %v669
    %v1360 = vunpack.c.h.b16 %v669
    %v1361 = vunpack.c.l.b16 %v672
    %v1362 = vunpack.c.h.b16 %v672
    %v1363 = vunpack.c.l.b16 %v673
    %v1364 = vunpack.c.h.b16 %v673
    %v1365 = vunpack.c.l.b16 %v676
    %v1366 = vunpack.c.h.b16 %v676
    %v1367 = vunpack.c.l.b16 %v677
    %v1368 = vunpack.c.h.b16 %v677
    %v1369 = vunpack.c.l.b16 %v680
    %v1370 = vunpack.c.h.b16 %v680
    %v1371 = vunpack.c.l.b16 %v681
    %v1372 = vunpack.c.h.b16 %v681
    %v1373 = vunpack.c.l.b16 %v684
    %v1374 = vunpack.c.h.b16 %v684
    %v1375 = vunpack.c.l.b16 %v685
    %v1376 = vunpack.c.h.b16 %v685
    %v1377 = vunpack.c.l.b16 %v688
    %v1378 = vunpack.c.h.b16 %v688
    %v1379 = vunpack.c.l.b16 %v689
    %v1380 = vunpack.c.h.b16 %v689
    %v1381 = vunpack.c.l.b16 %v692
    %v1382 = vunpack.c.h.b16 %v692
    %v1383 = vunpack.c.l.b16 %v693
    %v1384 = vunpack.c.h.b16 %v693
    %v1385 = vunpack.c.l.b16 %v696
    %v1386 = vunpack.c.h.b16 %v696
    %v1387 = vunpack.c.l.b16 %v697
    %v1388 = vunpack.c.h.b16 %v697
    %v1389 = vunpack.c.l.b16 %v700
    %v1390 = vunpack.c.h.b16 %v700
    %v1391 = vunpack.c.l.b16 %v701
    %v1392 = vunpack.c.h.b16 %v701
    %v1393 = vunpack.c.l.b16 %v704
    %v1394 = vunpack.c.h.b16 %v704
    %v1395 = vunpack.c.l.b16 %v705
    %v1396 = vunpack.c.h.b16 %v705
    %v1397 = vunpack.c.l.b16 %v708
    %v1398 = vunpack.c.h.b16 %v708
    %v1399 = vunpack.c.l.b16 %v709
    %v1400 = vunpack.c.h.b16 %v709
    %v1401 = vunpack.c.l.b16 %v712
    %v1402 = vunpack.c.h.b16 %v712
    %v1403 = vunpack.c.l.b16 %v713
    %v1404 = vunpack.c.h.b16 %v713
    %v1405 = vunpack.c.l.b16 %v716
    %v1406 = vunpack.c.h.b16 %v716
    %v1407 = vunpack.c.l.b16 %v717
    %v1408 = vunpack.c.h.b16 %v717
    %v1409 = vunpack.c.l.b16 %v720
    %v1410 = vunpack.c.h.b16 %v720
    %v1411 = vunpack.c.l.b16 %v721
    %v1412 = vunpack.c.h.b16 %v721
    %v1413 = vunpack.c.l.b16 %v724
    %v1414 = vunpack.c.h.b16 %v724
    %v1415 = vunpack.c.l.b16 %v725
    %v1416 = vunpack.c.h.b16 %v725
    %v1417 = vunpack.c.l.b16 %v728
    %v1418 = vunpack.c.h.b16 %v728
    %v1419 = vunpack.c.l.b16 %v729
    %v1420 = vunpack.c.h.b16 %v729
    %v1421 = vunpack.c.l.b16 %v732
    %v1422 = vunpack.c.h.b16 %v732
    %v1423 = vunpack.c.l.b16 %v733
    %v1424 = vunpack.c.h.b16 %v733
    %v1425 = vunpack.c.l.b16 %v736
    %v1426 = vunpack.c.h.b16 %v736
    %v1427 = vunpack.c.l.b16 %v737
    %v1428 = vunpack.c.h.b16 %v737
    %v1429 = vunpack.c.l.b16 %v740
    %v1430 = vunpack.c.h.b16 %v740
    %v1431 = vunpack.c.l.b16 %v741
    %v1432 = vunpack.c.h.b16 %v741
    %v1433 = vunpack.c.l.b16 %v744
    %v1434 = vunpack.c.h.b16 %v744
    %v1435 = vunpack.c.l.b16 %v745
    %v1436 = vunpack.c.h.b16 %v745
    %v1437 = vunpack.c.l.b16 %v748
    %v1438 = vunpack.c.h.b16 %v748
    %v1439 = vunpack.c.l.b16 %v749
    %v1440 = vunpack.c.h.b16 %v749
    %v1441 = vunpack.c.l.b16 %v752
    %v1442 = vunpack.c.h.b16 %v752
    %v1443 = vunpack.c.l.b16 %v753
    %v1444 = vunpack.c.h.b16 %v753
    %v1445 = vunpack.c.l.b16 %v756
    %v1446 = vunpack.c.h.b16 %v756
    %v1447 = vunpack.c.l.b16 %v757
    %v1448 = vunpack.c.h.b16 %v757
    %v1449 = vunpack.c.l.b16 %v760
    %v1450 = vunpack.c.h.b16 %v760
    %v1451 = vunpack.c.l.b16 %v761
    %v1452 = vunpack.c.h.b16 %v761
    %v1453 = vunpack.c.l.b16 %v764
    %v1454 = vunpack.c.h.b16 %v764
    %v1455 = vunpack.c.l.b16 %v765
    %v1456 = vunpack.c.h.b16 %v765
    %v1457 = vunpack.c.l.b16 %v768
    %v1458 = vunpack.c.h.b16 %v768
    %v1459 = vunpack.c.l.b16 %v769
    %v1460 = vunpack.c.h.b16 %v769
    %v1461 = vunpack.c.l.b16 %v772
    %v1462 = vunpack.c.h.b16 %v772
    %v1463 = vunpack.c.l.b16 %v773
    %v1464 = vunpack.c.h.b16 %v773
    %v1465 = vpack.c.b16 %v1341, %v1337
    %v1466 = vpack.c.b16 %v1342, %v1338
    %v1467 = vpack.c.b16 %v1343, %v1339
    %v1468 = vpack.c.b16 %v1344, %v1340
    %v1469 = vpack.c.b16 %v1349, %v1345
    %v1470 = vpack.c.b16 %v1350, %v1346
    %v1471 = vpack.c.b16 %v1351, %v1347
    %v1472 = vpack.c.b16 %v1352, %v1348
    %v1473 = vpack.c.b16 %v1357, %v1353
    %v1474 = vpack.c.b16 %v1358, %v1354
    %v1475 = vpack.c.b16 %v1359, %v1355
    %v1476 = vpack.c.b16 %v1360, %v1356
    %v1477 = vpack.c.b16 %v1365, %v1361
    %v1478 = vpack.c.b16 %v1366, %v1362
    %v1479 = vpack.c.b16 %v1367, %v1363
    %v1480 = vpack.c.b16 %v1368, %v1364
    %v1481 = vpack.c.b16 %v1373, %v1369
    %v1482 = vpack.c.b16 %v1374, %v1370
    %v1483 = vpack.c.b16 %v1375, %v1371
    %v1484 = vpack.c.b16 %v1376, %v1372
    %v1485 = vpack.c.b16 %v1381, %v1377
    %v1486 = vpack.c.b16 %v1382, %v1378
    %v1487 = vpack.c.b16 %v1383, %v1379
    %v1488 = vpack.c.b16 %v1384, %v1380
    %v1489 = vpack.c.b16 %v1389, %v1385
    %v1490 = vpack.c.b16 %v1390, %v1386
    %v1491 = vpack.c.b16 %v1391, %v1387
    %v1492 = vpack.c.b16 %v1392, %v1388
    %v1493 = vpack.c.b16 %v1397, %v1393
    %v1494 = vpack.c.b16 %v1398, %v1394
    %v1495 = vpack.c.b16 %v1399, %v1395
    %v1496 = vpack.c.b16 %v1400, %v1396
    %v1497 = vpack.c.b16 %v1405, %v1401
    %v1498 = vpack.c.b16 %v1406, %v1402
    %v1499 = vpack.c.b16 %v1407, %v1403
    %v1500 = vpack.c.b16 %v1408, %v1404
    %v1501 = vpack.c.b16 %v1413, %v1409
    %v1502 = vpack.c.b16 %v1414, %v1410
    %v1503 = vpack.c.b16 %v1415, %v1411
    %v1504 = vpack.c.b16 %v1416, %v1412
    %v1505 = vpack.c.b16 %v1421, %v1417
    %v1506 = vpack.c.b16 %v1422, %v1418
    %v1507 = vpack.c.b16 %v1423, %v1419
    %v1508 = vpack.c.b16 %v1424, %v1420
    %v1509 = vpack.c.b16 %v1429, %v1425
    %v1510 = vpack.c.b16 %v1430, %v1426
    %v1511 = vpack.c.b16 %v1431, %v1427
    %v1512 = vpack.c.b16 %v1432, %v1428
    %v1513 = vpack.c.b16 %v1437, %v1433
    %v1514 = vpack.c.b16 %v1438, %v1434
    %v1515 = vpack.c.b16 %v1439, %v1435
    %v1516 = vpack.c.b16 %v1440, %v1436
    %v1517 = vpack.c.b16 %v1445, %v1441
    %v1518 = vpack.c.b16 %v1446, %v1442
    %v1519 = vpack.c.b16 %v1447, %v1443
    %v1520 = vpack.c.b16 %v1448, %v1444
    %v1521 = vpack.c.b16 %v1453, %v1449
    %v1522 = vpack.c.b16 %v1454, %v1450
    %v1523 = vpack.c.b16 %v1455, %v1451
    %v1524 = vpack.c.b16 %v1456, %v1452
    %v1525 = vpack.c.b16 %v1461, %v1457
    %v1526 = vpack.c.b16 %v1462, %v1458
    %v1527 = vpack.c.b16 %v1463, %v1459
    %v1528 = vpack.c.b16 %v1464, %v1460
    %1593 = vmatpush.bf16.msra.mxu0 %v1001
    %1594 = vmatpush.bf16.msra.mxu0 %v997
    %1595 = vmatpush.bf16.msra.mxu0 %v993
    %1596 = vmatpush.bf16.msra.mxu0 %v989
    %1597 = vmatpush.bf16.msra.mxu0 %v985
    %1598 = vmatpush.bf16.msra.mxu0 %v981
    %1599 = vmatpush.bf16.msra.mxu0 %v977
    %1600 = vmatpush.bf16.msra.mxu0 %v973
    %1601 = vmatmul.bf16.gmra.mxu0 %v1272
    %v1602 = vpop.f32.mrf.mxu0
    %v1603 = vadd.f32 0.0, %v1602
    %v1604 = vpop.f32.mrf.mxu0
    %1605 = vdwg.mxu0
    %1606 = vmatpush.bf16.msra.mxu0 %v1033
    %1607 = vmatpush.bf16.msra.mxu0 %v1029
    %1608 = vmatpush.bf16.msra.mxu0 %v1025
    %1609 = vmatpush.bf16.msra.mxu0 %v1021
    %1610 = vmatpush.bf16.msra.mxu0 %v1017
    %1611 = vmatpush.bf16.msra.mxu0 %v1013
    %1612 = vmatpush.bf16.msra.mxu0 %v1009
    %1613 = vmatpush.bf16.msra.mxu0 %v1005
    %1614 = vmatmul.bf16.gmra.mxu0 %v780
    %v1615 = vpop.f32.mrf.mxu0
    %v1616 = vadd.f32 %v1603, %v1615
    %v1617 = vpop.f32.mrf.mxu0
    %1618 = vdwg.mxu0
    %1619 = vmatpush.bf16.msra.mxu0 %v1002
    %1620 = vmatpush.bf16.msra.mxu0 %v998
    %1621 = vmatpush.bf16.msra.mxu0 %v994
    %1622 = vmatpush.bf16.msra.mxu0 %v990
    %1623 = vmatpush.bf16.msra.mxu0 %v986
    %1624 = vmatpush.bf16.msra.mxu0 %v982
    %1625 = vmatpush.bf16.msra.mxu0 %v978
    %1626 = vmatpush.bf16.msra.mxu0 %v974
    %1627 = vmatmul.bf16.gmra.mxu0 %v1272
    %v1628 = vpop.f32.mrf.mxu0
    %v1629 = vadd.f32 0.0, %v1628
    %v1630 = vpop.f32.mrf.mxu0
    %1631 = vdwg.mxu0
    %1632 = vmatpush.bf16.msra.mxu0 %v1034
    %1633 = vmatpush.bf16.msra.mxu0 %v1030
    %1634 = vmatpush.bf16.msra.mxu0 %v1026
    %1635 = vmatpush.bf16.msra.mxu0 %v1022
    %1636 = vmatpush.bf16.msra.mxu0 %v1018
    %1637 = vmatpush.bf16.msra.mxu0 %v1014
    %1638 = vmatpush.bf16.msra.mxu0 %v1010
    %1639 = vmatpush.bf16.msra.mxu0 %v1006
    %1640 = vmatmul.bf16.gmra.mxu0 %v780
    %v1641 = vpop.f32.mrf.mxu0
    %v1642 = vadd.f32 %v1629, %v1641
    %v1643 = vpop.f32.mrf.mxu0
    %1644 = vdwg.mxu0
    %1645 = vmatpush.bf16.msra.mxu0 %v1003
    %1646 = vmatpush.bf16.msra.mxu0 %v999
    %1647 = vmatpush.bf16.msra.mxu0 %v995
    %1648 = vmatpush.bf16.msra.mxu0 %v991
    %1649 = vmatpush.bf16.msra.mxu0 %v987
    %1650 = vmatpush.bf16.msra.mxu0 %v983
    %1651 = vmatpush.bf16.msra.mxu0 %v979
    %1652 = vmatpush.bf16.msra.mxu0 %v975
    %1653 = vmatmul.bf16.gmra.mxu0 %v1272
    %v1654 = vpop.f32.mrf.mxu0
    %v1655 = vadd.f32 0.0, %v1654
    %v1656 = vpop.f32.mrf.mxu0
    %1657 = vdwg.mxu0
    %1658 = vmatpush.bf16.msra.mxu0 %v1035
    %1659 = vmatpush.bf16.msra.mxu0 %v1031
    %1660 = vmatpush.bf16.msra.mxu0 %v1027
    %1661 = vmatpush.bf16.msra.mxu0 %v1023
    %1662 = vmatpush.bf16.msra.mxu0 %v1019
    %1663 = vmatpush.bf16.msra.mxu0 %v1015
    %1664 = vmatpush.bf16.msra.mxu0 %v1011
    %1665 = vmatpush.bf16.msra.mxu0 %v1007
    %1666 = vmatmul.bf16.gmra.mxu0 %v780
    %v1667 = vpop.f32.mrf.mxu0
    %v1668 = vadd.f32 %v1655, %v1667
    %v1669 = vpop.f32.mrf.mxu0
    %1670 = vdwg.mxu0
    %1671 = vmatpush.bf16.msra.mxu0 %v1004
    %1672 = vmatpush.bf16.msra.mxu0 %v1000
    %1673 = vmatpush.bf16.msra.mxu0 %v996
    %1674 = vmatpush.bf16.msra.mxu0 %v992
    %1675 = vmatpush.bf16.msra.mxu0 %v988
    %1676 = vmatpush.bf16.msra.mxu0 %v984
    %1677 = vmatpush.bf16.msra.mxu0 %v980
    %1678 = vmatpush.bf16.msra.mxu0 %v976
    %1679 = vmatmul.bf16.gmra.mxu0 %v1272
    %v1680 = vpop.f32.mrf.mxu0
    %v1681 = vadd.f32 0.0, %v1680
    %v1682 = vpop.f32.mrf.mxu0
    %1683 = vdwg.mxu0
    %1684 = vmatpush.bf16.msra.mxu0 %v1036
    %1685 = vmatpush.bf16.msra.mxu0 %v1032
    %1686 = vmatpush.bf16.msra.mxu0 %v1028
    %1687 = vmatpush.bf16.msra.mxu0 %v1024
    %1688 = vmatpush.bf16.msra.mxu0 %v1020
    %1689 = vmatpush.bf16.msra.mxu0 %v1016
    %1690 = vmatpush.bf16.msra.mxu0 %v1012
    %1691 = vmatpush.bf16.msra.mxu0 %v1008
    %1692 = vmatmul.bf16.gmra.mxu0 %v780
    %v1693 = vpop.f32.mrf.mxu0
    %v1694 = vadd.f32 %v1681, %v1693
    %v1695 = vpop.f32.mrf.mxu0
    %1696 = vdwg.mxu0
    %1697 = vmatpush.bf16.msra.mxu0 %v1493
    %1698 = vmatpush.bf16.msra.mxu0 %v1489
    %1699 = vmatpush.bf16.msra.mxu0 %v1485
    %1700 = vmatpush.bf16.msra.mxu0 %v1481
    %1701 = vmatpush.bf16.msra.mxu0 %v1477
    %1702 = vmatpush.bf16.msra.mxu0 %v1473
    %1703 = vmatpush.bf16.msra.mxu0 %v1469
    %1704 = vmatpush.bf16.msra.mxu0 %v1465
    %1705 = vmatmul.bf16.gmra.mxu0 %v1272
    %v1706 = vpop.f32.mrf.mxu0
    %v1707 = vadd.f32 0.0, %v1706
    %v1708 = vpop.f32.mrf.mxu0
    %1709 = vdwg.mxu0
    %1710 = vmatpush.bf16.msra.mxu0 %v1525
    %1711 = vmatpush.bf16.msra.mxu0 %v1521
    %1712 = vmatpush.bf16.msra.mxu0 %v1517
    %1713 = vmatpush.bf16.msra.mxu0 %v1513
    %1714 = vmatpush.bf16.msra.mxu0 %v1509
    %1715 = vmatpush.bf16.msra.mxu0 %v1505
    %1716 = vmatpush.bf16.msra.mxu0 %v1501
    %1717 = vmatpush.bf16.msra.mxu0 %v1497
    %1718 = vmatmul.bf16.gmra.mxu0 %v780
    %v1719 = vpop.f32.mrf.mxu0
    %v1720 = vadd.f32 %v1707, %v1719
    %v1721 = vpop.f32.mrf.mxu0
    %1722 = vdwg.mxu0
    %1723 = vmatpush.bf16.msra.mxu0 %v1494
    %1724 = vmatpush.bf16.msra.mxu0 %v1490
    %1725 = vmatpush.bf16.msra.mxu0 %v1486
    %1726 = vmatpush.bf16.msra.mxu0 %v1482
    %1727 = vmatpush.bf16.msra.mxu0 %v1478
    %1728 = vmatpush.bf16.msra.mxu0 %v1474
    %1729 = vmatpush.bf16.msra.mxu0 %v1470
    %1730 = vmatpush.bf16.msra.mxu0 %v1466
    %1731 = vmatmul.bf16.gmra.mxu0 %v1272
    %v1732 = vpop.f32.mrf.mxu0
    %v1733 = vadd.f32 0.0, %v1732
    %v1734 = vpop.f32.mrf.mxu0
    %1735 = vdwg.mxu0
    %1736 = vmatpush.bf16.msra.mxu0 %v1526
    %1737 = vmatpush.bf16.msra.mxu0 %v1522
    %1738 = vmatpush.bf16.msra.mxu0 %v1518
    %1739 = vmatpush.bf16.msra.mxu0 %v1514
    %1740 = vmatpush.bf16.msra.mxu0 %v1510
    %1741 = vmatpush.bf16.msra.mxu0 %v1506
    %1742 = vmatpush.bf16.msra.mxu0 %v1502
    %1743 = vmatpush.bf16.msra.mxu0 %v1498
    %1744 = vmatmul.bf16.gmra.mxu0 %v780
    %v1745 = vpop.f32.mrf.mxu0
    %v1746 = vadd.f32 %v1733, %v1745
    %v1747 = vpop.f32.mrf.mxu0
    %1748 = vdwg.mxu0
    %1749 = vmatpush.bf16.msra.mxu0 %v1495
    %1750 = vmatpush.bf16.msra.mxu0 %v1491
    %1751 = vmatpush.bf16.msra.mxu0 %v1487
    %1752 = vmatpush.bf16.msra.mxu0 %v1483
    %1753 = vmatpush.bf16.msra.mxu0 %v1479
    %1754 = vmatpush.bf16.msra.mxu0 %v1475
    %1755 = vmatpush.bf16.msra.mxu0 %v1471
    %1756 = vmatpush.bf16.msra.mxu0 %v1467
    %1757 = vmatmul.bf16.gmra.mxu0 %v1272
    %v1758 = vpop.f32.mrf.mxu0
    %v1759 = vadd.f32 0.0, %v1758
    %v1760 = vpop.f32.mrf.mxu0
    %1761 = vdwg.mxu0
    %1762 = vmatpush.bf16.msra.mxu0 %v1527
    %1763 = vmatpush.bf16.msra.mxu0 %v1523
    %1764 = vmatpush.bf16.msra.mxu0 %v1519
    %1765 = vmatpush.bf16.msra.mxu0 %v1515
    %1766 = vmatpush.bf16.msra.mxu0 %v1511
    %1767 = vmatpush.bf16.msra.mxu0 %v1507
    %1768 = vmatpush.bf16.msra.mxu0 %v1503
    %1769 = vmatpush.bf16.msra.mxu0 %v1499
    %1770 = vmatmul.bf16.gmra.mxu0 %v780
    %v1771 = vpop.f32.mrf.mxu0
    %v1772 = vadd.f32 %v1759, %v1771
    %v1773 = vpop.f32.mrf.mxu0
    %1774 = vdwg.mxu0
    %1775 = vmatpush.bf16.msra.mxu0 %v1496
    %1776 = vmatpush.bf16.msra.mxu0 %v1492
    %1777 = vmatpush.bf16.msra.mxu0 %v1488
    %1778 = vmatpush.bf16.msra.mxu0 %v1484
    %1779 = vmatpush.bf16.msra.mxu0 %v1480
    %1780 = vmatpush.bf16.msra.mxu0 %v1476
    %1781 = vmatpush.bf16.msra.mxu0 %v1472
    %1782 = vmatpush.bf16.msra.mxu0 %v1468
    %1783 = vmatmul.bf16.gmra.mxu0 %v1272
    %v1784 = vpop.f32.mrf.mxu0
    %v1785 = vadd.f32 0.0, %v1784
    %v1786 = vpop.f32.mrf.mxu0
    %1787 = vdwg.mxu0
    %1788 = vmatpush.bf16.msra.mxu0 %v1528
    %1789 = vmatpush.bf16.msra.mxu0 %v1524
    %1790 = vmatpush.bf16.msra.mxu0 %v1520
    %1791 = vmatpush.bf16.msra.mxu0 %v1516
    %1792 = vmatpush.bf16.msra.mxu0 %v1512
    %1793 = vmatpush.bf16.msra.mxu0 %v1508
    %1794 = vmatpush.bf16.msra.mxu0 %v1504
    %1795 = vmatpush.bf16.msra.mxu0 %v1500
    %1796 = vmatmul.bf16.gmra.mxu0 %v780
    %v1797 = vpop.f32.mrf.mxu0
    %v1798 = vadd.f32 %v1785, %v1797
    %v1799 = vpop.f32.mrf.mxu0
    %1800 = vdwg.mxu0
    %v1802 = vperm.slane %v774, 0
    %v1803 = vperm.slane %v774, 1
    %v1804 = vperm.slane %v774, 2
    %v1805 = vperm.slane %v774, 3
    %v1810 = vadd.f32 %v1720, %v1802
    %v1811 = vadd.f32 %v1746, %v1803
    %v1812 = vadd.f32 %v1772, %v1804
    %v1813 = vadd.f32 %v1798, %v1805
    %v1814 = vxor.u32 %v1810, 2147483648
    %v1815 = vxor.u32 %v1811, 2147483648
    %v1816 = vxor.u32 %v1812, 2147483648
    %v1817 = vmul.f32 %v1814, 1.442695
    %v1818 = vpow.pop %v1817
    %v1819 = vmul.f32 %v1815, 1.442695
    %v1820 = vpow.pop %v1819
    %v1821 = vmul.f32 %v1816, 1.442695
    %v1822 = vpow.pop %v1821
    %v1823 = vadd.f32 %v1818, 1.0
    %v1824 = vadd.f32 %v1820, 1.0
    %v1825 = vadd.f32 %v1822, 1.0
    %v1826 = vrcp.pop %v1823
    %v1827 = vmul.f32 %v1823, %v1826
    %v1828 = vsub.f32 1.0, %v1827
    %v1829 = vmul.f32 %v1826, %v1828
    %v1830 = vadd.f32 %v1826, %v1829
    %vm1831 = vweird.f32 %v1823
    %vm1832 = vweird.f32 %v1826
    %vm1833 = vmor %vm1831, %vm1832
    %v1834 = vsel %vm1833, %v1826, %v1830
    %v1835 = vand.u32 2147483647, %v1823
    %vm1836 = vcmp.eq.f32.partialorder %v1835, 8.507059e+37
    %v1837 = vand.u32 %v1823, 2147483648
    %v1838 = vor.u32 1.1754944e-38, %v1837
    %v1839 = vsel %vm1836, %v1838, %v1834
    %v1840 = vmul.f32 1.0, %v1839
    %v1841 = vrcp.pop %v1824
    %v1842 = vmul.f32 %v1824, %v1841
    %v1843 = vsub.f32 1.0, %v1842
    %v1844 = vmul.f32 %v1841, %v1843
    %v1845 = vadd.f32 %v1841, %v1844
    %vm1846 = vweird.f32 %v1824
    %vm1847 = vweird.f32 %v1841
    %vm1848 = vmor %vm1846, %vm1847
    %v1849 = vsel %vm1848, %v1841, %v1845
    %v1850 = vand.u32 2147483647, %v1824
    %vm1851 = vcmp.eq.f32.partialorder %v1850, 8.507059e+37
    %v1852 = vand.u32 %v1824, 2147483648
    %v1853 = vor.u32 1.1754944e-38, %v1852
    %v1854 = vsel %vm1851, %v1853, %v1849
    %v1855 = vmul.f32 1.0, %v1854
    %v1856 = vrcp.pop %v1825
    %v1857 = vmul.f32 %v1825, %v1856
    %v1858 = vsub.f32 1.0, %v1857
    %v1859 = vmul.f32 %v1856, %v1858
    %v1860 = vadd.f32 %v1856, %v1859
    %vm1861 = vweird.f32 %v1825
    %vm1862 = vweird.f32 %v1856
    %vm1863 = vmor %vm1861, %vm1862
    %v1864 = vsel %vm1863, %v1856, %v1860
    %v1865 = vand.u32 2147483647, %v1825
    %vm1866 = vcmp.eq.f32.partialorder %v1865, 8.507059e+37
    %v1867 = vand.u32 %v1825, 2147483648
    %v1868 = vor.u32 1.1754944e-38, %v1867
    %v1869 = vsel %vm1866, %v1868, %v1864
    %v1870 = vmul.f32 1.0, %v1869
    %v1871 = vtanh.pop %v1813
    %v1872 = vmul.f32 %v1855, %v778
    %v1873 = vmul.f32 %v1840, %v1871
    %v1874 = vadd.f32 %v1872, %v1873
    %v1875 = vtanh.pop %v1874
    %v1876 = vmul.f32 %v1870, %v1875
    %v1881 = vrot.slane %v1616, 7
    %v1882 = vrot.slane %v1642, 7
    %v1883 = vrot.slane %v1668, 7
    %v1884 = vrot.slane %v1694, 7
    %v1889 = vadd.f32 %v604, %v1881
    %v1890 = vadd.f32 %v617, %v1882
    %v1891 = vadd.f32 %v630, %v1883
    %v1892 = vadd.f32 %v643, %v1884
    %v1893 = vxor.u32 %v1889, 2147483648
    %v1894 = vxor.u32 %v1890, 2147483648
    %v1895 = vxor.u32 %v1891, 2147483648
    %v1896 = vmul.f32 %v1893, 1.442695
    %v1897 = vpow.pop %v1896
    %v1898 = vmul.f32 %v1894, 1.442695
    %v1899 = vpow.pop %v1898
    %v1900 = vmul.f32 %v1895, 1.442695
    %v1901 = vpow.pop %v1900
    %v1902 = vadd.f32 %v1897, 1.0
    %v1903 = vadd.f32 %v1899, 1.0
    %v1904 = vadd.f32 %v1901, 1.0
    %v1905 = vrcp.pop %v1902
    %v1906 = vmul.f32 %v1902, %v1905
    %v1907 = vsub.f32 1.0, %v1906
    %v1908 = vmul.f32 %v1905, %v1907
    %v1909 = vadd.f32 %v1905, %v1908
    %vm1910 = vweird.f32 %v1902
    %vm1911 = vweird.f32 %v1905
    %vm1912 = vmor %vm1910, %vm1911
    %v1913 = vsel %vm1912, %v1905, %v1909
    %v1914 = vand.u32 2147483647, %v1902
    %vm1915 = vcmp.eq.f32.partialorder %v1914, 8.507059e+37
    %v1916 = vand.u32 %v1902, 2147483648
    %v1917 = vor.u32 1.1754944e-38, %v1916
    %v1918 = vsel %vm1915, %v1917, %v1913
    %v1919 = vmul.f32 1.0, %v1918
    %v1920 = vrcp.pop %v1903
    %v1921 = vmul.f32 %v1903, %v1920
    %v1922 = vsub.f32 1.0, %v1921
    %v1923 = vmul.f32 %v1920, %v1922
    %v1924 = vadd.f32 %v1920, %v1923
    %vm1925 = vweird.f32 %v1903
    %vm1926 = vweird.f32 %v1920
    %vm1927 = vmor %vm1925, %vm1926
    %v1928 = vsel %vm1927, %v1920, %v1924
    %v1929 = vand.u32 2147483647, %v1903
    %vm1930 = vcmp.eq.f32.partialorder %v1929, 8.507059e+37
    %v1931 = vand.u32 %v1903, 2147483648
    %v1932 = vor.u32 1.1754944e-38, %v1931
    %v1933 = vsel %vm1930, %v1932, %v1928
    %v1934 = vmul.f32 1.0, %v1933
    %v1935 = vrcp.pop %v1904
    %v1936 = vmul.f32 %v1904, %v1935
    %v1937 = vsub.f32 1.0, %v1936
    %v1938 = vmul.f32 %v1935, %v1937
    %v1939 = vadd.f32 %v1935, %v1938
    %vm1940 = vweird.f32 %v1904
    %vm1941 = vweird.f32 %v1935
    %vm1942 = vmor %vm1940, %vm1941
    %v1943 = vsel %vm1942, %v1935, %v1939
    %v1944 = vand.u32 2147483647, %v1904
    %vm1945 = vcmp.eq.f32.partialorder %v1944, 8.507059e+37
    %v1946 = vand.u32 %v1904, 2147483648
    %v1947 = vor.u32 1.1754944e-38, %v1946
    %v1948 = vsel %vm1945, %v1947, %v1943
    %v1949 = vmul.f32 1.0, %v1948
    %v1950 = vtanh.pop %v1892
    %v1952 = vrot.slane %v1269, 7
    %v1954 = vmul.f32 %v1934, %v1952
    %v1955 = vmul.f32 %v1919, %v1950
    %v1956 = vadd.f32 %v1954, %v1955
    %v1957 = vtanh.pop %v1956
    %v1958 = vmul.f32 %v1949, %v1957
    %v1960 = vrot.slane %v1876, 7
    %v1962 = vpack.c.bf16 %v1958, %v1958
    %v1963 = vpack.c.bf16 %v1960, %v1960
    %v1965 = vshrl.u32 %v1962, 16
    %v1968 = vshrl.u32 %v1963, 16
    %1972 = vmatpush.bf16.msra.mxu0 %v1001
    %1973 = vmatpush.bf16.msra.mxu0 %v997
    %1974 = vmatpush.bf16.msra.mxu0 %v993
    %1975 = vmatpush.bf16.msra.mxu0 %v989
    %1976 = vmatpush.bf16.msra.mxu0 %v985
    %1977 = vmatpush.bf16.msra.mxu0 %v981
    %1978 = vmatpush.bf16.msra.mxu0 %v977
    %1979 = vmatpush.bf16.msra.mxu0 %v973
    %1980 = vmatmul.bf16.gmra.mxu0 %v1965
    %v1981 = vpop.f32.mrf.mxu0
    %v1982 = vadd.f32 0.0, %v1981
    %v1983 = vpop.f32.mrf.mxu0
    %1984 = vdwg.mxu0
    %1985 = vmatpush.bf16.msra.mxu0 %v1033
    %1986 = vmatpush.bf16.msra.mxu0 %v1029
    %1987 = vmatpush.bf16.msra.mxu0 %v1025
    %1988 = vmatpush.bf16.msra.mxu0 %v1021
    %1989 = vmatpush.bf16.msra.mxu0 %v1017
    %1990 = vmatpush.bf16.msra.mxu0 %v1013
    %1991 = vmatpush.bf16.msra.mxu0 %v1009
    %1992 = vmatpush.bf16.msra.mxu0 %v1005
    %1993 = vmatmul.bf16.gmra.mxu0 %v1968
    %v1994 = vpop.f32.mrf.mxu0
    %v1995 = vadd.f32 %v1982, %v1994
    %v1996 = vpop.f32.mrf.mxu0
    %1997 = vdwg.mxu0
    %1998 = vmatpush.bf16.msra.mxu0 %v1002
    %1999 = vmatpush.bf16.msra.mxu0 %v998
    %2000 = vmatpush.bf16.msra.mxu0 %v994
    %2001 = vmatpush.bf16.msra.mxu0 %v990
    %2002 = vmatpush.bf16.msra.mxu0 %v986
    %2003 = vmatpush.bf16.msra.mxu0 %v982
    %2004 = vmatpush.bf16.msra.mxu0 %v978
    %2005 = vmatpush.bf16.msra.mxu0 %v974
    %2006 = vmatmul.bf16.gmra.mxu0 %v1965
    %v2007 = vpop.f32.mrf.mxu0
    %v2008 = vadd.f32 0.0, %v2007
    %v2009 = vpop.f32.mrf.mxu0
    %2010 = vdwg.mxu0
    %2011 = vmatpush.bf16.msra.mxu0 %v1034
    %2012 = vmatpush.bf16.msra.mxu0 %v1030
    %2013 = vmatpush.bf16.msra.mxu0 %v1026
    %2014 = vmatpush.bf16.msra.mxu0 %v1022
    %2015 = vmatpush.bf16.msra.mxu0 %v1018
    %2016 = vmatpush.bf16.msra.mxu0 %v1014
    %2017 = vmatpush.bf16.msra.mxu0 %v1010
    %2018 = vmatpush.bf16.msra.mxu0 %v1006
    %2019 = vmatmul.bf16.gmra.mxu0 %v1968
    %v2020 = vpop.f32.mrf.mxu0
    %v2021 = vadd.f32 %v2008, %v2020
    %v2022 = vpop.f32.mrf.mxu0
    %2023 = vdwg.mxu0
    %2024 = vmatpush.bf16.msra.mxu0 %v1003
    %2025 = vmatpush.bf16.msra.mxu0 %v999
    %2026 = vmatpush.bf16.msra.mxu0 %v995
    %2027 = vmatpush.bf16.msra.mxu0 %v991
    %2028 = vmatpush.bf16.msra.mxu0 %v987
    %2029 = vmatpush.bf16.msra.mxu0 %v983
    %2030 = vmatpush.bf16.msra.mxu0 %v979
    %2031 = vmatpush.bf16.msra.mxu0 %v975
    %2032 = vmatmul.bf16.gmra.mxu0 %v1965
    %v2033 = vpop.f32.mrf.mxu0
    %v2034 = vadd.f32 0.0, %v2033
    %v2035 = vpop.f32.mrf.mxu0
    %2036 = vdwg.mxu0
    %2037 = vmatpush.bf16.msra.mxu0 %v1035
    %2038 = vmatpush.bf16.msra.mxu0 %v1031
    %2039 = vmatpush.bf16.msra.mxu0 %v1027
    %2040 = vmatpush.bf16.msra.mxu0 %v1023
    %2041 = vmatpush.bf16.msra.mxu0 %v1019
    %2042 = vmatpush.bf16.msra.mxu0 %v1015
    %2043 = vmatpush.bf16.msra.mxu0 %v1011
    %2044 = vmatpush.bf16.msra.mxu0 %v1007
    %2045 = vmatmul.bf16.gmra.mxu0 %v1968
    %v2046 = vpop.f32.mrf.mxu0
    %v2047 = vadd.f32 %v2034, %v2046
    %v2048 = vpop.f32.mrf.mxu0
    %2049 = vdwg.mxu0
    %2050 = vmatpush.bf16.msra.mxu0 %v1004
    %2051 = vmatpush.bf16.msra.mxu0 %v1000
    %2052 = vmatpush.bf16.msra.mxu0 %v996
    %2053 = vmatpush.bf16.msra.mxu0 %v992
    %2054 = vmatpush.bf16.msra.mxu0 %v988
    %2055 = vmatpush.bf16.msra.mxu0 %v984
    %2056 = vmatpush.bf16.msra.mxu0 %v980
    %2057 = vmatpush.bf16.msra.mxu0 %v976
    %2058 = vmatmul.bf16.gmra.mxu0 %v1965
    %v2059 = vpop.f32.mrf.mxu0
    %v2060 = vadd.f32 0.0, %v2059
    %v2061 = vpop.f32.mrf.mxu0
    %2062 = vdwg.mxu0
    %2063 = vmatpush.bf16.msra.mxu0 %v1036
    %2064 = vmatpush.bf16.msra.mxu0 %v1032
    %2065 = vmatpush.bf16.msra.mxu0 %v1028
    %2066 = vmatpush.bf16.msra.mxu0 %v1024
    %2067 = vmatpush.bf16.msra.mxu0 %v1020
    %2068 = vmatpush.bf16.msra.mxu0 %v1016
    %2069 = vmatpush.bf16.msra.mxu0 %v1012
    %2070 = vmatpush.bf16.msra.mxu0 %v1008
    %2071 = vmatmul.bf16.gmra.mxu0 %v1968
    %v2072 = vpop.f32.mrf.mxu0
    %v2073 = vadd.f32 %v2060, %v2072
    %v2074 = vpop.f32.mrf.mxu0
    %2075 = vdwg.mxu0
    %2076 = vmatpush.bf16.msra.mxu0 %v1493
    %2077 = vmatpush.bf16.msra.mxu0 %v1489
    %2078 = vmatpush.bf16.msra.mxu0 %v1485
    %2079 = vmatpush.bf16.msra.mxu0 %v1481
    %2080 = vmatpush.bf16.msra.mxu0 %v1477
    %2081 = vmatpush.bf16.msra.mxu0 %v1473
    %2082 = vmatpush.bf16.msra.mxu0 %v1469
    %2083 = vmatpush.bf16.msra.mxu0 %v1465
    %2084 = vmatmul.bf16.gmra.mxu0 %v1965
    %v2085 = vpop.f32.mrf.mxu0
    %v2086 = vadd.f32 0.0, %v2085
    %v2087 = vpop.f32.mrf.mxu0
    %2088 = vdwg.mxu0
    %2089 = vmatpush.bf16.msra.mxu0 %v1525
    %2090 = vmatpush.bf16.msra.mxu0 %v1521
    %2091 = vmatpush.bf16.msra.mxu0 %v1517
    %2092 = vmatpush.bf16.msra.mxu0 %v1513
    %2093 = vmatpush.bf16.msra.mxu0 %v1509
    %2094 = vmatpush.bf16.msra.mxu0 %v1505
    %2095 = vmatpush.bf16.msra.mxu0 %v1501
    %2096 = vmatpush.bf16.msra.mxu0 %v1497
    %2097 = vmatmul.bf16.gmra.mxu0 %v1968
    %v2098 = vpop.f32.mrf.mxu0
    %v2099 = vadd.f32 %v2086, %v2098
    %v2100 = vpop.f32.mrf.mxu0
    %2101 = vdwg.mxu0
    %2102 = vmatpush.bf16.msra.mxu0 %v1494
    %2103 = vmatpush.bf16.msra.mxu0 %v1490
    %2104 = vmatpush.bf16.msra.mxu0 %v1486
    %2105 = vmatpush.bf16.msra.mxu0 %v1482
    %2106 = vmatpush.bf16.msra.mxu0 %v1478
    %2107 = vmatpush.bf16.msra.mxu0 %v1474
    %2108 = vmatpush.bf16.msra.mxu0 %v1470
    %2109 = vmatpush.bf16.msra.mxu0 %v1466
    %2110 = vmatmul.bf16.gmra.mxu0 %v1965
    %v2111 = vpop.f32.mrf.mxu0
    %v2112 = vadd.f32 0.0, %v2111
    %v2113 = vpop.f32.mrf.mxu0
    %2114 = vdwg.mxu0
    %2115 = vmatpush.bf16.msra.mxu0 %v1526
    %2116 = vmatpush.bf16.msra.mxu0 %v1522
    %2117 = vmatpush.bf16.msra.mxu0 %v1518
    %2118 = vmatpush.bf16.msra.mxu0 %v1514
    %2119 = vmatpush.bf16.msra.mxu0 %v1510
    %2120 = vmatpush.bf16.msra.mxu0 %v1506
    %2121 = vmatpush.bf16.msra.mxu0 %v1502
    %2122 = vmatpush.bf16.msra.mxu0 %v1498
    %2123 = vmatmul.bf16.gmra.mxu0 %v1968
    %v2124 = vpop.f32.mrf.mxu0
    %v2125 = vadd.f32 %v2112, %v2124
    %v2126 = vpop.f32.mrf.mxu0
    %2127 = vdwg.mxu0
    %2128 = vmatpush.bf16.msra.mxu0 %v1495
    %2129 = vmatpush.bf16.msra.mxu0 %v1491
    %2130 = vmatpush.bf16.msra.mxu0 %v1487
    %2131 = vmatpush.bf16.msra.mxu0 %v1483
    %2132 = vmatpush.bf16.msra.mxu0 %v1479
    %2133 = vmatpush.bf16.msra.mxu0 %v1475
    %2134 = vmatpush.bf16.msra.mxu0 %v1471
    %2135 = vmatpush.bf16.msra.mxu0 %v1467
    %2136 = vmatmul.bf16.gmra.mxu0 %v1965
    %v2137 = vpop.f32.mrf.mxu0
    %v2138 = vadd.f32 0.0, %v2137
    %v2139 = vpop.f32.mrf.mxu0
    %2140 = vdwg.mxu0
    %2141 = vmatpush.bf16.msra.mxu0 %v1527
    %2142 = vmatpush.bf16.msra.mxu0 %v1523
    %2143 = vmatpush.bf16.msra.mxu0 %v1519
    %2144 = vmatpush.bf16.msra.mxu0 %v1515
    %2145 = vmatpush.bf16.msra.mxu0 %v1511
    %2146 = vmatpush.bf16.msra.mxu0 %v1507
    %2147 = vmatpush.bf16.msra.mxu0 %v1503
    %2148 = vmatpush.bf16.msra.mxu0 %v1499
    %2149 = vmatmul.bf16.gmra.mxu0 %v1968
    %v2150 = vpop.f32.mrf.mxu0
    %v2151 = vadd.f32 %v2138, %v2150
    %v2152 = vpop.f32.mrf.mxu0
    %2153 = vdwg.mxu0
    %2154 = vmatpush.bf16.msra.mxu0 %v1496
    %2155 = vmatpush.bf16.msra.mxu0 %v1492
    %2156 = vmatpush.bf16.msra.mxu0 %v1488
    %2157 = vmatpush.bf16.msra.mxu0 %v1484
    %2158 = vmatpush.bf16.msra.mxu0 %v1480
    %2159 = vmatpush.bf16.msra.mxu0 %v1476
    %2160 = vmatpush.bf16.msra.mxu0 %v1472
    %2161 = vmatpush.bf16.msra.mxu0 %v1468
    %2162 = vmatmul.bf16.gmra.mxu0 %v1965
    %v2163 = vpop.f32.mrf.mxu0
    %v2164 = vadd.f32 0.0, %v2163
    %v2165 = vpop.f32.mrf.mxu0
    %2166 = vdwg.mxu0
    %2167 = vmatpush.bf16.msra.mxu0 %v1528
    %2168 = vmatpush.bf16.msra.mxu0 %v1524
    %2169 = vmatpush.bf16.msra.mxu0 %v1520
    %2170 = vmatpush.bf16.msra.mxu0 %v1516
    %2171 = vmatpush.bf16.msra.mxu0 %v1512
    %2172 = vmatpush.bf16.msra.mxu0 %v1508
    %2173 = vmatpush.bf16.msra.mxu0 %v1504
    %2174 = vmatpush.bf16.msra.mxu0 %v1500
    %2175 = vmatmul.bf16.gmra.mxu0 %v1968
    %v2176 = vpop.f32.mrf.mxu0
    %v2177 = vadd.f32 %v2164, %v2176
    %v2178 = vpop.f32.mrf.mxu0
    %2179 = vdwg.mxu0
    %v2180 = vadd.f32 %v2099, %v1802
    %v2181 = vadd.f32 %v2125, %v1803
    %v2182 = vadd.f32 %v2151, %v1804
    %v2183 = vadd.f32 %v2177, %v1805
    %v2184 = vxor.u32 %v2180, 2147483648
    %v2185 = vxor.u32 %v2181, 2147483648
    %v2186 = vxor.u32 %v2182, 2147483648
    %v2187 = vmul.f32 %v2184, 1.442695
    %v2188 = vpow.pop %v2187
    %v2189 = vmul.f32 %v2185, 1.442695
    %v2190 = vpow.pop %v2189
    %v2191 = vmul.f32 %v2186, 1.442695
    %v2192 = vpow.pop %v2191
    %v2193 = vadd.f32 %v2188, 1.0
    %v2194 = vadd.f32 %v2190, 1.0
    %v2195 = vadd.f32 %v2192, 1.0
    %v2196 = vrcp.pop %v2193
    %v2197 = vmul.f32 %v2193, %v2196
    %v2198 = vsub.f32 1.0, %v2197
    %v2199 = vmul.f32 %v2196, %v2198
    %v2200 = vadd.f32 %v2196, %v2199
    %vm2201 = vweird.f32 %v2193
    %vm2202 = vweird.f32 %v2196
    %vm2203 = vmor %vm2201, %vm2202
    %v2204 = vsel %vm2203, %v2196, %v2200
    %v2205 = vand.u32 2147483647, %v2193
    %vm2206 = vcmp.eq.f32.partialorder %v2205, 8.507059e+37
    %v2207 = vand.u32 %v2193, 2147483648
    %v2208 = vor.u32 1.1754944e-38, %v2207
    %v2209 = vsel %vm2206, %v2208, %v2204
    %v2210 = vmul.f32 1.0, %v2209
    %v2211 = vrcp.pop %v2194
    %v2212 = vmul.f32 %v2194, %v2211
    %v2213 = vsub.f32 1.0, %v2212
    %v2214 = vmul.f32 %v2211, %v2213
    %v2215 = vadd.f32 %v2211, %v2214
    %vm2216 = vweird.f32 %v2194
    %vm2217 = vweird.f32 %v2211
    %vm2218 = vmor %vm2216, %vm2217
    %v2219 = vsel %vm2218, %v2211, %v2215
    %v2220 = vand.u32 2147483647, %v2194
    %vm2221 = vcmp.eq.f32.partialorder %v2220, 8.507059e+37
    %v2222 = vand.u32 %v2194, 2147483648
    %v2223 = vor.u32 1.1754944e-38, %v2222
    %v2224 = vsel %vm2221, %v2223, %v2219
    %v2225 = vmul.f32 1.0, %v2224
    %v2226 = vrcp.pop %v2195
    %v2227 = vmul.f32 %v2195, %v2226
    %v2228 = vsub.f32 1.0, %v2227
    %v2229 = vmul.f32 %v2226, %v2228
    %v2230 = vadd.f32 %v2226, %v2229
    %vm2231 = vweird.f32 %v2195
    %vm2232 = vweird.f32 %v2226
    %vm2233 = vmor %vm2231, %vm2232
    %v2234 = vsel %vm2233, %v2226, %v2230
    %v2235 = vand.u32 2147483647, %v2195
    %vm2236 = vcmp.eq.f32.partialorder %v2235, 8.507059e+37
    %v2237 = vand.u32 %v2195, 2147483648
    %v2238 = vor.u32 1.1754944e-38, %v2237
    %v2239 = vsel %vm2236, %v2238, %v2234
    %v2240 = vmul.f32 1.0, %v2239
    %v2241 = vtanh.pop %v2183
    %v2242 = vmul.f32 %v2225, %v1874
    %v2243 = vmul.f32 %v2210, %v2241
    %v2244 = vadd.f32 %v2242, %v2243
    %v2245 = vtanh.pop %v2244
    %v2246 = vmul.f32 %v2240, %v2245
    %v2251 = vrot.slane %v1995, 6
    %v2252 = vrot.slane %v2021, 6
    %v2253 = vrot.slane %v2047, 6
    %v2254 = vrot.slane %v2073, 6
    %v2259 = vadd.f32 %v604, %v2251
    %v2260 = vadd.f32 %v617, %v2252
    %v2261 = vadd.f32 %v630, %v2253
    %v2262 = vadd.f32 %v643, %v2254
    %v2263 = vxor.u32 %v2259, 2147483648
    %v2264 = vxor.u32 %v2260, 2147483648
    %v2265 = vxor.u32 %v2261, 2147483648
    %v2266 = vmul.f32 %v2263, 1.442695
    %v2267 = vpow.pop %v2266
    %v2268 = vmul.f32 %v2264, 1.442695
    %v2269 = vpow.pop %v2268
    %v2270 = vmul.f32 %v2265, 1.442695
    %v2271 = vpow.pop %v2270
    %v2272 = vadd.f32 %v2267, 1.0
    %v2273 = vadd.f32 %v2269, 1.0
    %v2274 = vadd.f32 %v2271, 1.0
    %v2275 = vrcp.pop %v2272
    %v2276 = vmul.f32 %v2272, %v2275
    %v2277 = vsub.f32 1.0, %v2276
    %v2278 = vmul.f32 %v2275, %v2277
    %v2279 = vadd.f32 %v2275, %v2278
    %vm2280 = vweird.f32 %v2272
    %vm2281 = vweird.f32 %v2275
    %vm2282 = vmor %vm2280, %vm2281
    %v2283 = vsel %vm2282, %v2275, %v2279
    %v2284 = vand.u32 2147483647, %v2272
    %vm2285 = vcmp.eq.f32.partialorder %v2284, 8.507059e+37
    %v2286 = vand.u32 %v2272, 2147483648
    %v2287 = vor.u32 1.1754944e-38, %v2286
    %v2288 = vsel %vm2285, %v2287, %v2283
    %v2289 = vmul.f32 1.0, %v2288
    %v2290 = vrcp.pop %v2273
    %v2291 = vmul.f32 %v2273, %v2290
    %v2292 = vsub.f32 1.0, %v2291
    %v2293 = vmul.f32 %v2290, %v2292
    %v2294 = vadd.f32 %v2290, %v2293
    %vm2295 = vweird.f32 %v2273
    %vm2296 = vweird.f32 %v2290
    %vm2297 = vmor %vm2295, %vm2296
    %v2298 = vsel %vm2297, %v2290, %v2294
    %v2299 = vand.u32 2147483647, %v2273
    %vm2300 = vcmp.eq.f32.partialorder %v2299, 8.507059e+37
    %v2301 = vand.u32 %v2273, 2147483648
    %v2302 = vor.u32 1.1754944e-38, %v2301
    %v2303 = vsel %vm2300, %v2302, %v2298
    %v2304 = vmul.f32 1.0, %v2303
    %v2305 = vrcp.pop %v2274
    %v2306 = vmul.f32 %v2274, %v2305
    %v2307 = vsub.f32 1.0, %v2306
    %v2308 = vmul.f32 %v2305, %v2307
    %v2309 = vadd.f32 %v2305, %v2308
    %vm2310 = vweird.f32 %v2274
    %vm2311 = vweird.f32 %v2305
    %vm2312 = vmor %vm2310, %vm2311
    %v2313 = vsel %vm2312, %v2305, %v2309
    %v2314 = vand.u32 2147483647, %v2274
    %vm2315 = vcmp.eq.f32.partialorder %v2314, 8.507059e+37
    %v2316 = vand.u32 %v2274, 2147483648
    %v2317 = vor.u32 1.1754944e-38, %v2316
    %v2318 = vsel %vm2315, %v2317, %v2313
    %v2319 = vmul.f32 1.0, %v2318
    %v2320 = vtanh.pop %v2262
    %v2322 = vrot.slane %v1956, 7
    %v2324 = vmul.f32 %v2304, %v2322
    %v2325 = vmul.f32 %v2289, %v2320
    %v2326 = vadd.f32 %v2324, %v2325
    %v2327 = vtanh.pop %v2326
    %v2328 = vmul.f32 %v2319, %v2327
    %v2330 = vrot.slane %v2246, 6
    %v2332 = vpack.c.bf16 %v2328, %v2328
    %v2333 = vpack.c.bf16 %v2330, %v2330
    %v2336 = vrot.slane %v2332, 1
    %v2337 = vrot.slane %v2333, 1
    %2340 = vmatpush.bf16.msra.mxu0 %v1001
    %2341 = vmatpush.bf16.msra.mxu0 %v997
    %2342 = vmatpush.bf16.msra.mxu0 %v993
    %2343 = vmatpush.bf16.msra.mxu0 %v989
    %2344 = vmatpush.bf16.msra.mxu0 %v985
    %2345 = vmatpush.bf16.msra.mxu0 %v981
    %2346 = vmatpush.bf16.msra.mxu0 %v977
    %2347 = vmatpush.bf16.msra.mxu0 %v973
    %2348 = vmatmul.bf16.gmra.mxu0 %v2336
    %v2349 = vpop.f32.mrf.mxu0
    %v2350 = vadd.f32 0.0, %v2349
    %v2351 = vpop.f32.mrf.mxu0
    %2352 = vdwg.mxu0
    %2353 = vmatpush.bf16.msra.mxu0 %v1033
    %2354 = vmatpush.bf16.msra.mxu0 %v1029
    %2355 = vmatpush.bf16.msra.mxu0 %v1025
    %2356 = vmatpush.bf16.msra.mxu0 %v1021
    %2357 = vmatpush.bf16.msra.mxu0 %v1017
    %2358 = vmatpush.bf16.msra.mxu0 %v1013
    %2359 = vmatpush.bf16.msra.mxu0 %v1009
    %2360 = vmatpush.bf16.msra.mxu0 %v1005
    %2361 = vmatmul.bf16.gmra.mxu0 %v2337
    %v2362 = vpop.f32.mrf.mxu0
    %v2363 = vadd.f32 %v2350, %v2362
    %v2364 = vpop.f32.mrf.mxu0
    %2365 = vdwg.mxu0
    %2366 = vmatpush.bf16.msra.mxu0 %v1002
    %2367 = vmatpush.bf16.msra.mxu0 %v998
    %2368 = vmatpush.bf16.msra.mxu0 %v994
    %2369 = vmatpush.bf16.msra.mxu0 %v990
    %2370 = vmatpush.bf16.msra.mxu0 %v986
    %2371 = vmatpush.bf16.msra.mxu0 %v982
    %2372 = vmatpush.bf16.msra.mxu0 %v978
    %2373 = vmatpush.bf16.msra.mxu0 %v974
    %2374 = vmatmul.bf16.gmra.mxu0 %v2336
    %v2375 = vpop.f32.mrf.mxu0
    %v2376 = vadd.f32 0.0, %v2375
    %v2377 = vpop.f32.mrf.mxu0
    %2378 = vdwg.mxu0
    %2379 = vmatpush.bf16.msra.mxu0 %v1034
    %2380 = vmatpush.bf16.msra.mxu0 %v1030
    %2381 = vmatpush.bf16.msra.mxu0 %v1026
    %2382 = vmatpush.bf16.msra.mxu0 %v1022
    %2383 = vmatpush.bf16.msra.mxu0 %v1018
    %2384 = vmatpush.bf16.msra.mxu0 %v1014
    %2385 = vmatpush.bf16.msra.mxu0 %v1010
    %2386 = vmatpush.bf16.msra.mxu0 %v1006
    %2387 = vmatmul.bf16.gmra.mxu0 %v2337
    %v2388 = vpop.f32.mrf.mxu0
    %v2389 = vadd.f32 %v2376, %v2388
    %v2390 = vpop.f32.mrf.mxu0
    %2391 = vdwg.mxu0
    %2392 = vmatpush.bf16.msra.mxu0 %v1003
    %2393 = vmatpush.bf16.msra.mxu0 %v999
    %2394 = vmatpush.bf16.msra.mxu0 %v995
    %2395 = vmatpush.bf16.msra.mxu0 %v991
    %2396 = vmatpush.bf16.msra.mxu0 %v987
    %2397 = vmatpush.bf16.msra.mxu0 %v983
    %2398 = vmatpush.bf16.msra.mxu0 %v979
    %2399 = vmatpush.bf16.msra.mxu0 %v975
    %2400 = vmatmul.bf16.gmra.mxu0 %v2336
    %v2401 = vpop.f32.mrf.mxu0
    %v2402 = vadd.f32 0.0, %v2401
    %v2403 = vpop.f32.mrf.mxu0
    %2404 = vdwg.mxu0
    %2405 = vmatpush.bf16.msra.mxu0 %v1035
    %2406 = vmatpush.bf16.msra.mxu0 %v1031
    %2407 = vmatpush.bf16.msra.mxu0 %v1027
    %2408 = vmatpush.bf16.msra.mxu0 %v1023
    %2409 = vmatpush.bf16.msra.mxu0 %v1019
    %2410 = vmatpush.bf16.msra.mxu0 %v1015
    %2411 = vmatpush.bf16.msra.mxu0 %v1011
    %2412 = vmatpush.bf16.msra.mxu0 %v1007
    %2413 = vmatmul.bf16.gmra.mxu0 %v2337
    %v2414 = vpop.f32.mrf.mxu0
    %v2415 = vadd.f32 %v2402, %v2414
    %v2416 = vpop.f32.mrf.mxu0
    %2417 = vdwg.mxu0
    %2418 = vmatpush.bf16.msra.mxu0 %v1004
    %2419 = vmatpush.bf16.msra.mxu0 %v1000
    %2420 = vmatpush.bf16.msra.mxu0 %v996
    %2421 = vmatpush.bf16.msra.mxu0 %v992
    %2422 = vmatpush.bf16.msra.mxu0 %v988
    %2423 = vmatpush.bf16.msra.mxu0 %v984
    %2424 = vmatpush.bf16.msra.mxu0 %v980
    %2425 = vmatpush.bf16.msra.mxu0 %v976
    %2426 = vmatmul.bf16.gmra.mxu0 %v2336
    %v2427 = vpop.f32.mrf.mxu0
    %v2428 = vadd.f32 0.0, %v2427
    %v2429 = vpop.f32.mrf.mxu0
    %2430 = vdwg.mxu0
    %2431 = vmatpush.bf16.msra.mxu0 %v1036
    %2432 = vmatpush.bf16.msra.mxu0 %v1032
    %2433 = vmatpush.bf16.msra.mxu0 %v1028
    %2434 = vmatpush.bf16.msra.mxu0 %v1024
    %2435 = vmatpush.bf16.msra.mxu0 %v1020
    %2436 = vmatpush.bf16.msra.mxu0 %v1016
    %2437 = vmatpush.bf16.msra.mxu0 %v1012
    %2438 = vmatpush.bf16.msra.mxu0 %v1008
    %2439 = vmatmul.bf16.gmra.mxu0 %v2337
    %v2440 = vpop.f32.mrf.mxu0
    %v2441 = vadd.f32 %v2428, %v2440
    %v2442 = vpop.f32.mrf.mxu0
    %2443 = vdwg.mxu0
    %2444 = vmatpush.bf16.msra.mxu0 %v1493
    %2445 = vmatpush.bf16.msra.mxu0 %v1489
    %2446 = vmatpush.bf16.msra.mxu0 %v1485
    %2447 = vmatpush.bf16.msra.mxu0 %v1481
    %2448 = vmatpush.bf16.msra.mxu0 %v1477
    %2449 = vmatpush.bf16.msra.mxu0 %v1473
    %2450 = vmatpush.bf16.msra.mxu0 %v1469
    %2451 = vmatpush.bf16.msra.mxu0 %v1465
    %2452 = vmatmul.bf16.gmra.mxu0 %v2336
    %v2453 = vpop.f32.mrf.mxu0
    %v2454 = vadd.f32 0.0, %v2453
    %v2455 = vpop.f32.mrf.mxu0
    %2456 = vdwg.mxu0
    %2457 = vmatpush.bf16.msra.mxu0 %v1525
    %2458 = vmatpush.bf16.msra.mxu0 %v1521
    %2459 = vmatpush.bf16.msra.mxu0 %v1517
    %2460 = vmatpush.bf16.msra.mxu0 %v1513
    %2461 = vmatpush.bf16.msra.mxu0 %v1509
    %2462 = vmatpush.bf16.msra.mxu0 %v1505
    %2463 = vmatpush.bf16.msra.mxu0 %v1501
    %2464 = vmatpush.bf16.msra.mxu0 %v1497
    %2465 = vmatmul.bf16.gmra.mxu0 %v2337
    %v2466 = vpop.f32.mrf.mxu0
    %v2467 = vadd.f32 %v2454, %v2466
    %v2468 = vpop.f32.mrf.mxu0
    %2469 = vdwg.mxu0
    %2470 = vmatpush.bf16.msra.mxu0 %v1494
    %2471 = vmatpush.bf16.msra.mxu0 %v1490
    %2472 = vmatpush.bf16.msra.mxu0 %v1486
    %2473 = vmatpush.bf16.msra.mxu0 %v1482
    %2474 = vmatpush.bf16.msra.mxu0 %v1478
    %2475 = vmatpush.bf16.msra.mxu0 %v1474
    %2476 = vmatpush.bf16.msra.mxu0 %v1470
    %2477 = vmatpush.bf16.msra.mxu0 %v1466
    %2478 = vmatmul.bf16.gmra.mxu0 %v2336
    %v2479 = vpop.f32.mrf.mxu0
    %v2480 = vadd.f32 0.0, %v2479
    %v2481 = vpop.f32.mrf.mxu0
    %2482 = vdwg.mxu0
    %2483 = vmatpush.bf16.msra.mxu0 %v1526
    %2484 = vmatpush.bf16.msra.mxu0 %v1522
    %2485 = vmatpush.bf16.msra.mxu0 %v1518
    %2486 = vmatpush.bf16.msra.mxu0 %v1514
    %2487 = vmatpush.bf16.msra.mxu0 %v1510
    %2488 = vmatpush.bf16.msra.mxu0 %v1506
    %2489 = vmatpush.bf16.msra.mxu0 %v1502
    %2490 = vmatpush.bf16.msra.mxu0 %v1498
    %2491 = vmatmul.bf16.gmra.mxu0 %v2337
    %v2492 = vpop.f32.mrf.mxu0
    %v2493 = vadd.f32 %v2480, %v2492
    %v2494 = vpop.f32.mrf.mxu0
    %2495 = vdwg.mxu0
    %2496 = vmatpush.bf16.msra.mxu0 %v1495
    %2497 = vmatpush.bf16.msra.mxu0 %v1491
    %2498 = vmatpush.bf16.msra.mxu0 %v1487
    %2499 = vmatpush.bf16.msra.mxu0 %v1483
    %2500 = vmatpush.bf16.msra.mxu0 %v1479
    %2501 = vmatpush.bf16.msra.mxu0 %v1475
    %2502 = vmatpush.bf16.msra.mxu0 %v1471
    %2503 = vmatpush.bf16.msra.mxu0 %v1467
    %2504 = vmatmul.bf16.gmra.mxu0 %v2336
    %v2505 = vpop.f32.mrf.mxu0
    %v2506 = vadd.f32 0.0, %v2505
    %v2507 = vpop.f32.mrf.mxu0
    %2508 = vdwg.mxu0
    %2509 = vmatpush.bf16.msra.mxu0 %v1527
    %2510 = vmatpush.bf16.msra.mxu0 %v1523
    %2511 = vmatpush.bf16.msra.mxu0 %v1519
    %2512 = vmatpush.bf16.msra.mxu0 %v1515
    %2513 = vmatpush.bf16.msra.mxu0 %v1511
    %2514 = vmatpush.bf16.msra.mxu0 %v1507
    %2515 = vmatpush.bf16.msra.mxu0 %v1503
    %2516 = vmatpush.bf16.msra.mxu0 %v1499
    %2517 = vmatmul.bf16.gmra.mxu0 %v2337
    %v2518 = vpop.f32.mrf.mxu0
    %v2519 = vadd.f32 %v2506, %v2518
    %v2520 = vpop.f32.mrf.mxu0
    %2521 = vdwg.mxu0
    %2522 = vmatpush.bf16.msra.mxu0 %v1496
    %2523 = vmatpush.bf16.msra.mxu0 %v1492
    %2524 = vmatpush.bf16.msra.mxu0 %v1488
    %2525 = vmatpush.bf16.msra.mxu0 %v1484
    %2526 = vmatpush.bf16.msra.mxu0 %v1480
    %2527 = vmatpush.bf16.msra.mxu0 %v1476
    %2528 = vmatpush.bf16.msra.mxu0 %v1472
    %2529 = vmatpush.bf16.msra.mxu0 %v1468
    %2530 = vmatmul.bf16.gmra.mxu0 %v2336
    %v2531 = vpop.f32.mrf.mxu0
    %v2532 = vadd.f32 0.0, %v2531
    %v2533 = vpop.f32.mrf.mxu0
    %2534 = vdwg.mxu0
    %2535 = vmatpush.bf16.msra.mxu0 %v1528
    %2536 = vmatpush.bf16.msra.mxu0 %v1524
    %2537 = vmatpush.bf16.msra.mxu0 %v1520
    %2538 = vmatpush.bf16.msra.mxu0 %v1516
    %2539 = vmatpush.bf16.msra.mxu0 %v1512
    %2540 = vmatpush.bf16.msra.mxu0 %v1508
    %2541 = vmatpush.bf16.msra.mxu0 %v1504
    %2542 = vmatpush.bf16.msra.mxu0 %v1500
    %2543 = vmatmul.bf16.gmra.mxu0 %v2337
    %v2544 = vpop.f32.mrf.mxu0
    %v2545 = vadd.f32 %v2532, %v2544
    %v2546 = vpop.f32.mrf.mxu0
    %2547 = vdwg.mxu0
    %v2548 = vadd.f32 %v2467, %v1802
    %v2549 = vadd.f32 %v2493, %v1803
    %v2550 = vadd.f32 %v2519, %v1804
    %v2551 = vadd.f32 %v2545, %v1805
    %v2552 = vxor.u32 %v2548, 2147483648
    %v2553 = vxor.u32 %v2549, 2147483648
    %v2554 = vxor.u32 %v2550, 2147483648
    %v2555 = vmul.f32 %v2552, 1.442695
    %v2556 = vpow.pop %v2555
    %v2557 = vmul.f32 %v2553, 1.442695
    %v2558 = vpow.pop %v2557
    %v2559 = vmul.f32 %v2554, 1.442695
    %v2560 = vpow.pop %v2559
    %v2561 = vadd.f32 %v2556, 1.0
    %v2562 = vadd.f32 %v2558, 1.0
    %v2563 = vadd.f32 %v2560, 1.0
    %v2564 = vrcp.pop %v2561
    %v2565 = vmul.f32 %v2561, %v2564
    %v2566 = vsub.f32 1.0, %v2565
    %v2567 = vmul.f32 %v2564, %v2566
    %v2568 = vadd.f32 %v2564, %v2567
    %vm2569 = vweird.f32 %v2561
    %vm2570 = vweird.f32 %v2564
    %vm2571 = vmor %vm2569, %vm2570
    %v2572 = vsel %vm2571, %v2564, %v2568
    %v2573 = vand.u32 2147483647, %v2561
    %vm2574 = vcmp.eq.f32.partialorder %v2573, 8.507059e+37
    %v2575 = vand.u32 %v2561, 2147483648
    %v2576 = vor.u32 1.1754944e-38, %v2575
    %v2577 = vsel %vm2574, %v2576, %v2572
    %v2578 = vmul.f32 1.0, %v2577
    %v2579 = vrcp.pop %v2562
    %v2580 = vmul.f32 %v2562, %v2579
    %v2581 = vsub.f32 1.0, %v2580
    %v2582 = vmul.f32 %v2579, %v2581
    %v2583 = vadd.f32 %v2579, %v2582
    %vm2584 = vweird.f32 %v2562
    %vm2585 = vweird.f32 %v2579
    %vm2586 = vmor %vm2584, %vm2585
    %v2587 = vsel %vm2586, %v2579, %v2583
    %v2588 = vand.u32 2147483647, %v2562
    %vm2589 = vcmp.eq.f32.partialorder %v2588, 8.507059e+37
    %v2590 = vand.u32 %v2562, 2147483648
    %v2591 = vor.u32 1.1754944e-38, %v2590
    %v2592 = vsel %vm2589, %v2591, %v2587
    %v2593 = vmul.f32 1.0, %v2592
    %v2594 = vrcp.pop %v2563
    %v2595 = vmul.f32 %v2563, %v2594
    %v2596 = vsub.f32 1.0, %v2595
    %v2597 = vmul.f32 %v2594, %v2596
    %v2598 = vadd.f32 %v2594, %v2597
    %vm2599 = vweird.f32 %v2563
    %vm2600 = vweird.f32 %v2594
    %vm2601 = vmor %vm2599, %vm2600
    %v2602 = vsel %vm2601, %v2594, %v2598
    %v2603 = vand.u32 2147483647, %v2563
    %vm2604 = vcmp.eq.f32.partialorder %v2603, 8.507059e+37
    %v2605 = vand.u32 %v2563, 2147483648
    %v2606 = vor.u32 1.1754944e-38, %v2605
    %v2607 = vsel %vm2604, %v2606, %v2602
    %v2608 = vmul.f32 1.0, %v2607
    %v2609 = vtanh.pop %v2551
    %v2610 = vmul.f32 %v2593, %v2244
    %v2611 = vmul.f32 %v2578, %v2609
    %v2612 = vadd.f32 %v2610, %v2611
    %v2613 = vtanh.pop %v2612
    %v2614 = vmul.f32 %v2608, %v2613
    %v2619 = vrot.slane %v2363, 5
    %v2620 = vrot.slane %v2389, 5
    %v2621 = vrot.slane %v2415, 5
    %v2622 = vrot.slane %v2441, 5
    %v2627 = vadd.f32 %v604, %v2619
    %v2628 = vadd.f32 %v617, %v2620
    %v2629 = vadd.f32 %v630, %v2621
    %v2630 = vadd.f32 %v643, %v2622
    %v2631 = vxor.u32 %v2627, 2147483648
    %v2632 = vxor.u32 %v2628, 2147483648
    %v2633 = vxor.u32 %v2629, 2147483648
    %v2634 = vmul.f32 %v2631, 1.442695
    %v2635 = vpow.pop %v2634
    %v2636 = vmul.f32 %v2632, 1.442695
    %v2637 = vpow.pop %v2636
    %v2638 = vmul.f32 %v2633, 1.442695
    %v2639 = vpow.pop %v2638
    %v2640 = vadd.f32 %v2635, 1.0
    %v2641 = vadd.f32 %v2637, 1.0
    %v2642 = vadd.f32 %v2639, 1.0
    %v2643 = vrcp.pop %v2640
    %v2644 = vmul.f32 %v2640, %v2643
    %v2645 = vsub.f32 1.0, %v2644
    %v2646 = vmul.f32 %v2643, %v2645
    %v2647 = vadd.f32 %v2643, %v2646
    %vm2648 = vweird.f32 %v2640
    %vm2649 = vweird.f32 %v2643
    %vm2650 = vmor %vm2648, %vm2649
    %v2651 = vsel %vm2650, %v2643, %v2647
    %v2652 = vand.u32 2147483647, %v2640
    %vm2653 = vcmp.eq.f32.partialorder %v2652, 8.507059e+37
    %v2654 = vand.u32 %v2640, 2147483648
    %v2655 = vor.u32 1.1754944e-38, %v2654
    %v2656 = vsel %vm2653, %v2655, %v2651
    %v2657 = vmul.f32 1.0, %v2656
    %v2658 = vrcp.pop %v2641
    %v2659 = vmul.f32 %v2641, %v2658
    %v2660 = vsub.f32 1.0, %v2659
    %v2661 = vmul.f32 %v2658, %v2660
    %v2662 = vadd.f32 %v2658, %v2661
    %vm2663 = vweird.f32 %v2641
    %vm2664 = vweird.f32 %v2658
    %vm2665 = vmor %vm2663, %vm2664
    %v2666 = vsel %vm2665, %v2658, %v2662
    %v2667 = vand.u32 2147483647, %v2641
    %vm2668 = vcmp.eq.f32.partialorder %v2667, 8.507059e+37
    %v2669 = vand.u32 %v2641, 2147483648
    %v2670 = vor.u32 1.1754944e-38, %v2669
    %v2671 = vsel %vm2668, %v2670, %v2666
    %v2672 = vmul.f32 1.0, %v2671
    %v2673 = vrcp.pop %v2642
    %v2674 = vmul.f32 %v2642, %v2673
    %v2675 = vsub.f32 1.0, %v2674
    %v2676 = vmul.f32 %v2673, %v2675
    %v2677 = vadd.f32 %v2673, %v2676
    %vm2678 = vweird.f32 %v2642
    %vm2679 = vweird.f32 %v2673
    %vm2680 = vmor %vm2678, %vm2679
    %v2681 = vsel %vm2680, %v2673, %v2677
    %v2682 = vand.u32 2147483647, %v2642
    %vm2683 = vcmp.eq.f32.partialorder %v2682, 8.507059e+37
    %v2684 = vand.u32 %v2642, 2147483648
    %v2685 = vor.u32 1.1754944e-38, %v2684
    %v2686 = vsel %vm2683, %v2685, %v2681
    %v2687 = vmul.f32 1.0, %v2686
    %v2688 = vtanh.pop %v2630
    %v2690 = vrot.slane %v2326, 7
    %v2692 = vmul.f32 %v2672, %v2690
    %v2693 = vmul.f32 %v2657, %v2688
    %v2694 = vadd.f32 %v2692, %v2693
    %v2695 = vtanh.pop %v2694
    %v2696 = vmul.f32 %v2687, %v2695
    %v2698 = vrot.slane %v2614, 5
    %v2700 = vpack.c.bf16 %v2696, %v2696
    %v2701 = vpack.c.bf16 %v2698, %v2698
    %v2703 = vshrl.u32 %v2700, 16
    %v2705 = vrot.slane %v2703, 1
    %v2707 = vshrl.u32 %v2701, 16
    %v2709 = vrot.slane %v2707, 1
    %2712 = vmatpush.bf16.msra.mxu0 %v1001
    %2713 = vmatpush.bf16.msra.mxu0 %v997
    %2714 = vmatpush.bf16.msra.mxu0 %v993
    %2715 = vmatpush.bf16.msra.mxu0 %v989
    %2716 = vmatpush.bf16.msra.mxu0 %v985
    %2717 = vmatpush.bf16.msra.mxu0 %v981
    %2718 = vmatpush.bf16.msra.mxu0 %v977
    %2719 = vmatpush.bf16.msra.mxu0 %v973
    %2720 = vmatmul.bf16.gmra.mxu0 %v2705
    %v2721 = vpop.f32.mrf.mxu0
    %v2722 = vadd.f32 0.0, %v2721
    %v2723 = vpop.f32.mrf.mxu0
    %2724 = vdwg.mxu0
    %2725 = vmatpush.bf16.msra.mxu0 %v1033
    %2726 = vmatpush.bf16.msra.mxu0 %v1029
    %2727 = vmatpush.bf16.msra.mxu0 %v1025
    %2728 = vmatpush.bf16.msra.mxu0 %v1021
    %2729 = vmatpush.bf16.msra.mxu0 %v1017
    %2730 = vmatpush.bf16.msra.mxu0 %v1013
    %2731 = vmatpush.bf16.msra.mxu0 %v1009
    %2732 = vmatpush.bf16.msra.mxu0 %v1005
    %2733 = vmatmul.bf16.gmra.mxu0 %v2709
    %v2734 = vpop.f32.mrf.mxu0
    %v2735 = vadd.f32 %v2722, %v2734
    %v2736 = vpop.f32.mrf.mxu0
    %2737 = vdwg.mxu0
    %2738 = vmatpush.bf16.msra.mxu0 %v1002
    %2739 = vmatpush.bf16.msra.mxu0 %v998
    %2740 = vmatpush.bf16.msra.mxu0 %v994
    %2741 = vmatpush.bf16.msra.mxu0 %v990
    %2742 = vmatpush.bf16.msra.mxu0 %v986
    %2743 = vmatpush.bf16.msra.mxu0 %v982
    %2744 = vmatpush.bf16.msra.mxu0 %v978
    %2745 = vmatpush.bf16.msra.mxu0 %v974
    %2746 = vmatmul.bf16.gmra.mxu0 %v2705
    %v2747 = vpop.f32.mrf.mxu0
    %v2748 = vadd.f32 0.0, %v2747
    %v2749 = vpop.f32.mrf.mxu0
    %2750 = vdwg.mxu0
    %2751 = vmatpush.bf16.msra.mxu0 %v1034
    %2752 = vmatpush.bf16.msra.mxu0 %v1030
    %2753 = vmatpush.bf16.msra.mxu0 %v1026
    %2754 = vmatpush.bf16.msra.mxu0 %v1022
    %2755 = vmatpush.bf16.msra.mxu0 %v1018
    %2756 = vmatpush.bf16.msra.mxu0 %v1014
    %2757 = vmatpush.bf16.msra.mxu0 %v1010
    %2758 = vmatpush.bf16.msra.mxu0 %v1006
    %2759 = vmatmul.bf16.gmra.mxu0 %v2709
    %v2760 = vpop.f32.mrf.mxu0
    %v2761 = vadd.f32 %v2748, %v2760
    %v2762 = vpop.f32.mrf.mxu0
    %2763 = vdwg.mxu0
    %2764 = vmatpush.bf16.msra.mxu0 %v1003
    %2765 = vmatpush.bf16.msra.mxu0 %v999
    %2766 = vmatpush.bf16.msra.mxu0 %v995
    %2767 = vmatpush.bf16.msra.mxu0 %v991
    %2768 = vmatpush.bf16.msra.mxu0 %v987
    %2769 = vmatpush.bf16.msra.mxu0 %v983
    %2770 = vmatpush.bf16.msra.mxu0 %v979
    %2771 = vmatpush.bf16.msra.mxu0 %v975
    %2772 = vmatmul.bf16.gmra.mxu0 %v2705
    %v2773 = vpop.f32.mrf.mxu0
    %v2774 = vadd.f32 0.0, %v2773
    %v2775 = vpop.f32.mrf.mxu0
    %2776 = vdwg.mxu0
    %2777 = vmatpush.bf16.msra.mxu0 %v1035
    %2778 = vmatpush.bf16.msra.mxu0 %v1031
    %2779 = vmatpush.bf16.msra.mxu0 %v1027
    %2780 = vmatpush.bf16.msra.mxu0 %v1023
    %2781 = vmatpush.bf16.msra.mxu0 %v1019
    %2782 = vmatpush.bf16.msra.mxu0 %v1015
    %2783 = vmatpush.bf16.msra.mxu0 %v1011
    %2784 = vmatpush.bf16.msra.mxu0 %v1007
    %2785 = vmatmul.bf16.gmra.mxu0 %v2709
    %v2786 = vpop.f32.mrf.mxu0
    %v2787 = vadd.f32 %v2774, %v2786
    %v2788 = vpop.f32.mrf.mxu0
    %2789 = vdwg.mxu0
    %2790 = vmatpush.bf16.msra.mxu0 %v1004
    %2791 = vmatpush.bf16.msra.mxu0 %v1000
    %2792 = vmatpush.bf16.msra.mxu0 %v996
    %2793 = vmatpush.bf16.msra.mxu0 %v992
    %2794 = vmatpush.bf16.msra.mxu0 %v988
    %2795 = vmatpush.bf16.msra.mxu0 %v984
    %2796 = vmatpush.bf16.msra.mxu0 %v980
    %2797 = vmatpush.bf16.msra.mxu0 %v976
    %2798 = vmatmul.bf16.gmra.mxu0 %v2705
    %v2799 = vpop.f32.mrf.mxu0
    %v2800 = vadd.f32 0.0, %v2799
    %v2801 = vpop.f32.mrf.mxu0
    %2802 = vdwg.mxu0
    %2803 = vmatpush.bf16.msra.mxu0 %v1036
    %2804 = vmatpush.bf16.msra.mxu0 %v1032
    %2805 = vmatpush.bf16.msra.mxu0 %v1028
    %2806 = vmatpush.bf16.msra.mxu0 %v1024
    %2807 = vmatpush.bf16.msra.mxu0 %v1020
    %2808 = vmatpush.bf16.msra.mxu0 %v1016
    %2809 = vmatpush.bf16.msra.mxu0 %v1012
    %2810 = vmatpush.bf16.msra.mxu0 %v1008
    %2811 = vmatmul.bf16.gmra.mxu0 %v2709
    %v2812 = vpop.f32.mrf.mxu0
    %v2813 = vadd.f32 %v2800, %v2812
    %v2814 = vpop.f32.mrf.mxu0
    %2815 = vdwg.mxu0
    %2816 = vmatpush.bf16.msra.mxu0 %v1493
    %2817 = vmatpush.bf16.msra.mxu0 %v1489
    %2818 = vmatpush.bf16.msra.mxu0 %v1485
    %2819 = vmatpush.bf16.msra.mxu0 %v1481
    %2820 = vmatpush.bf16.msra.mxu0 %v1477
    %2821 = vmatpush.bf16.msra.mxu0 %v1473
    %2822 = vmatpush.bf16.msra.mxu0 %v1469
    %2823 = vmatpush.bf16.msra.mxu0 %v1465
    %2824 = vmatmul.bf16.gmra.mxu0 %v2705
    %v2825 = vpop.f32.mrf.mxu0
    %v2826 = vadd.f32 0.0, %v2825
    %v2827 = vpop.f32.mrf.mxu0
    %2828 = vdwg.mxu0
    %2829 = vmatpush.bf16.msra.mxu0 %v1525
    %2830 = vmatpush.bf16.msra.mxu0 %v1521
    %2831 = vmatpush.bf16.msra.mxu0 %v1517
    %2832 = vmatpush.bf16.msra.mxu0 %v1513
    %2833 = vmatpush.bf16.msra.mxu0 %v1509
    %2834 = vmatpush.bf16.msra.mxu0 %v1505
    %2835 = vmatpush.bf16.msra.mxu0 %v1501
    %2836 = vmatpush.bf16.msra.mxu0 %v1497
    %2837 = vmatmul.bf16.gmra.mxu0 %v2709
    %v2838 = vpop.f32.mrf.mxu0
    %v2839 = vadd.f32 %v2826, %v2838
    %v2840 = vpop.f32.mrf.mxu0
    %2841 = vdwg.mxu0
    %2842 = vmatpush.bf16.msra.mxu0 %v1494
    %2843 = vmatpush.bf16.msra.mxu0 %v1490
    %2844 = vmatpush.bf16.msra.mxu0 %v1486
    %2845 = vmatpush.bf16.msra.mxu0 %v1482
    %2846 = vmatpush.bf16.msra.mxu0 %v1478
    %2847 = vmatpush.bf16.msra.mxu0 %v1474
    %2848 = vmatpush.bf16.msra.mxu0 %v1470
    %2849 = vmatpush.bf16.msra.mxu0 %v1466
    %2850 = vmatmul.bf16.gmra.mxu0 %v2705
    %v2851 = vpop.f32.mrf.mxu0
    %v2852 = vadd.f32 0.0, %v2851
    %v2853 = vpop.f32.mrf.mxu0
    %2854 = vdwg.mxu0
    %2855 = vmatpush.bf16.msra.mxu0 %v1526
    %2856 = vmatpush.bf16.msra.mxu0 %v1522
    %2857 = vmatpush.bf16.msra.mxu0 %v1518
    %2858 = vmatpush.bf16.msra.mxu0 %v1514
    %2859 = vmatpush.bf16.msra.mxu0 %v1510
    %2860 = vmatpush.bf16.msra.mxu0 %v1506
    %2861 = vmatpush.bf16.msra.mxu0 %v1502
    %2862 = vmatpush.bf16.msra.mxu0 %v1498
    %2863 = vmatmul.bf16.gmra.mxu0 %v2709
    %v2864 = vpop.f32.mrf.mxu0
    %v2865 = vadd.f32 %v2852, %v2864
    %v2866 = vpop.f32.mrf.mxu0
    %2867 = vdwg.mxu0
    %2868 = vmatpush.bf16.msra.mxu0 %v1495
    %2869 = vmatpush.bf16.msra.mxu0 %v1491
    %2870 = vmatpush.bf16.msra.mxu0 %v1487
    %2871 = vmatpush.bf16.msra.mxu0 %v1483
    %2872 = vmatpush.bf16.msra.mxu0 %v1479
    %2873 = vmatpush.bf16.msra.mxu0 %v1475
    %2874 = vmatpush.bf16.msra.mxu0 %v1471
    %2875 = vmatpush.bf16.msra.mxu0 %v1467
    %2876 = vmatmul.bf16.gmra.mxu0 %v2705
    %v2877 = vpop.f32.mrf.mxu0
    %v2878 = vadd.f32 0.0, %v2877
    %v2879 = vpop.f32.mrf.mxu0
    %2880 = vdwg.mxu0
    %2881 = vmatpush.bf16.msra.mxu0 %v1527
    %2882 = vmatpush.bf16.msra.mxu0 %v1523
    %2883 = vmatpush.bf16.msra.mxu0 %v1519
    %2884 = vmatpush.bf16.msra.mxu0 %v1515
    %2885 = vmatpush.bf16.msra.mxu0 %v1511
    %2886 = vmatpush.bf16.msra.mxu0 %v1507
    %2887 = vmatpush.bf16.msra.mxu0 %v1503
    %2888 = vmatpush.bf16.msra.mxu0 %v1499
    %2889 = vmatmul.bf16.gmra.mxu0 %v2709
    %v2890 = vpop.f32.mrf.mxu0
    %v2891 = vadd.f32 %v2878, %v2890
    %v2892 = vpop.f32.mrf.mxu0
    %2893 = vdwg.mxu0
    %2894 = vmatpush.bf16.msra.mxu0 %v1496
    %2895 = vmatpush.bf16.msra.mxu0 %v1492
    %2896 = vmatpush.bf16.msra.mxu0 %v1488
    %2897 = vmatpush.bf16.msra.mxu0 %v1484
    %2898 = vmatpush.bf16.msra.mxu0 %v1480
    %2899 = vmatpush.bf16.msra.mxu0 %v1476
    %2900 = vmatpush.bf16.msra.mxu0 %v1472
    %2901 = vmatpush.bf16.msra.mxu0 %v1468
    %2902 = vmatmul.bf16.gmra.mxu0 %v2705
    %v2903 = vpop.f32.mrf.mxu0
    %v2904 = vadd.f32 0.0, %v2903
    %v2905 = vpop.f32.mrf.mxu0
    %2906 = vdwg.mxu0
    %2907 = vmatpush.bf16.msra.mxu0 %v1528
    %2908 = vmatpush.bf16.msra.mxu0 %v1524
    %2909 = vmatpush.bf16.msra.mxu0 %v1520
    %2910 = vmatpush.bf16.msra.mxu0 %v1516
    %2911 = vmatpush.bf16.msra.mxu0 %v1512
    %2912 = vmatpush.bf16.msra.mxu0 %v1508
    %2913 = vmatpush.bf16.msra.mxu0 %v1504
    %2914 = vmatpush.bf16.msra.mxu0 %v1500
    %2915 = vmatmul.bf16.gmra.mxu0 %v2709
    %v2916 = vpop.f32.mrf.mxu0
    %v2917 = vadd.f32 %v2904, %v2916
    %v2918 = vpop.f32.mrf.mxu0
    %2919 = vdwg.mxu0
    %v2920 = vadd.f32 %v2839, %v1802
    %v2921 = vadd.f32 %v2865, %v1803
    %v2922 = vadd.f32 %v2891, %v1804
    %v2923 = vadd.f32 %v2917, %v1805
    %v2924 = vxor.u32 %v2920, 2147483648
    %v2925 = vxor.u32 %v2921, 2147483648
    %v2926 = vxor.u32 %v2922, 2147483648
    %v2927 = vmul.f32 %v2924, 1.442695
    %v2928 = vpow.pop %v2927
    %v2929 = vmul.f32 %v2925, 1.442695
    %v2930 = vpow.pop %v2929
    %v2931 = vmul.f32 %v2926, 1.442695
    %v2932 = vpow.pop %v2931
    %v2933 = vadd.f32 %v2928, 1.0
    %v2934 = vadd.f32 %v2930, 1.0
    %v2935 = vadd.f32 %v2932, 1.0
    %v2936 = vrcp.pop %v2933
    %v2937 = vmul.f32 %v2933, %v2936
    %v2938 = vsub.f32 1.0, %v2937
    %v2939 = vmul.f32 %v2936, %v2938
    %v2940 = vadd.f32 %v2936, %v2939
    %vm2941 = vweird.f32 %v2933
    %vm2942 = vweird.f32 %v2936
    %vm2943 = vmor %vm2941, %vm2942
    %v2944 = vsel %vm2943, %v2936, %v2940
    %v2945 = vand.u32 2147483647, %v2933
    %vm2946 = vcmp.eq.f32.partialorder %v2945, 8.507059e+37
    %v2947 = vand.u32 %v2933, 2147483648
    %v2948 = vor.u32 1.1754944e-38, %v2947
    %v2949 = vsel %vm2946, %v2948, %v2944
    %v2950 = vmul.f32 1.0, %v2949
    %v2951 = vrcp.pop %v2934
    %v2952 = vmul.f32 %v2934, %v2951
    %v2953 = vsub.f32 1.0, %v2952
    %v2954 = vmul.f32 %v2951, %v2953
    %v2955 = vadd.f32 %v2951, %v2954
    %vm2956 = vweird.f32 %v2934
    %vm2957 = vweird.f32 %v2951
    %vm2958 = vmor %vm2956, %vm2957
    %v2959 = vsel %vm2958, %v2951, %v2955
    %v2960 = vand.u32 2147483647, %v2934
    %vm2961 = vcmp.eq.f32.partialorder %v2960, 8.507059e+37
    %v2962 = vand.u32 %v2934, 2147483648
    %v2963 = vor.u32 1.1754944e-38, %v2962
    %v2964 = vsel %vm2961, %v2963, %v2959
    %v2965 = vmul.f32 1.0, %v2964
    %v2966 = vrcp.pop %v2935
    %v2967 = vmul.f32 %v2935, %v2966
    %v2968 = vsub.f32 1.0, %v2967
    %v2969 = vmul.f32 %v2966, %v2968
    %v2970 = vadd.f32 %v2966, %v2969
    %vm2971 = vweird.f32 %v2935
    %vm2972 = vweird.f32 %v2966
    %vm2973 = vmor %vm2971, %vm2972
    %v2974 = vsel %vm2973, %v2966, %v2970
    %v2975 = vand.u32 2147483647, %v2935
    %vm2976 = vcmp.eq.f32.partialorder %v2975, 8.507059e+37
    %v2977 = vand.u32 %v2935, 2147483648
    %v2978 = vor.u32 1.1754944e-38, %v2977
    %v2979 = vsel %vm2976, %v2978, %v2974
    %v2980 = vmul.f32 1.0, %v2979
    %v2981 = vtanh.pop %v2923
    %v2982 = vmul.f32 %v2965, %v2612
    %v2983 = vmul.f32 %v2950, %v2981
    %v2984 = vadd.f32 %v2982, %v2983
    %v2985 = vtanh.pop %v2984
    %v2986 = vmul.f32 %v2980, %v2985
    %v2991 = vrot.slane %v2735, 4
    %v2992 = vrot.slane %v2761, 4
    %v2993 = vrot.slane %v2787, 4
    %v2994 = vrot.slane %v2813, 4
    %v2999 = vadd.f32 %v604, %v2991
    %v3000 = vadd.f32 %v617, %v2992
    %v3001 = vadd.f32 %v630, %v2993
    %v3002 = vadd.f32 %v643, %v2994
    %v3003 = vxor.u32 %v2999, 2147483648
    %v3004 = vxor.u32 %v3000, 2147483648
    %v3005 = vxor.u32 %v3001, 2147483648
    %v3006 = vmul.f32 %v3003, 1.442695
    %v3007 = vpow.pop %v3006
    %v3008 = vmul.f32 %v3004, 1.442695
    %v3009 = vpow.pop %v3008
    %v3010 = vmul.f32 %v3005, 1.442695
    %v3011 = vpow.pop %v3010
    %v3012 = vadd.f32 %v3007, 1.0
    %v3013 = vadd.f32 %v3009, 1.0
    %v3014 = vadd.f32 %v3011, 1.0
    %v3015 = vrcp.pop %v3012
    %v3016 = vmul.f32 %v3012, %v3015
    %v3017 = vsub.f32 1.0, %v3016
    %v3018 = vmul.f32 %v3015, %v3017
    %v3019 = vadd.f32 %v3015, %v3018
    %vm3020 = vweird.f32 %v3012
    %vm3021 = vweird.f32 %v3015
    %vm3022 = vmor %vm3020, %vm3021
    %v3023 = vsel %vm3022, %v3015, %v3019
    %v3024 = vand.u32 2147483647, %v3012
    %vm3025 = vcmp.eq.f32.partialorder %v3024, 8.507059e+37
    %v3026 = vand.u32 %v3012, 2147483648
    %v3027 = vor.u32 1.1754944e-38, %v3026
    %v3028 = vsel %vm3025, %v3027, %v3023
    %v3029 = vmul.f32 1.0, %v3028
    %v3030 = vrcp.pop %v3013
    %v3031 = vmul.f32 %v3013, %v3030
    %v3032 = vsub.f32 1.0, %v3031
    %v3033 = vmul.f32 %v3030, %v3032
    %v3034 = vadd.f32 %v3030, %v3033
    %vm3035 = vweird.f32 %v3013
    %vm3036 = vweird.f32 %v3030
    %vm3037 = vmor %vm3035, %vm3036
    %v3038 = vsel %vm3037, %v3030, %v3034
    %v3039 = vand.u32 2147483647, %v3013
    %vm3040 = vcmp.eq.f32.partialorder %v3039, 8.507059e+37
    %v3041 = vand.u32 %v3013, 2147483648
    %v3042 = vor.u32 1.1754944e-38, %v3041
    %v3043 = vsel %vm3040, %v3042, %v3038
    %v3044 = vmul.f32 1.0, %v3043
    %v3045 = vrcp.pop %v3014
    %v3046 = vmul.f32 %v3014, %v3045
    %v3047 = vsub.f32 1.0, %v3046
    %v3048 = vmul.f32 %v3045, %v3047
    %v3049 = vadd.f32 %v3045, %v3048
    %vm3050 = vweird.f32 %v3014
    %vm3051 = vweird.f32 %v3045
    %vm3052 = vmor %vm3050, %vm3051
    %v3053 = vsel %vm3052, %v3045, %v3049
    %v3054 = vand.u32 2147483647, %v3014
    %vm3055 = vcmp.eq.f32.partialorder %v3054, 8.507059e+37
    %v3056 = vand.u32 %v3014, 2147483648
    %v3057 = vor.u32 1.1754944e-38, %v3056
    %v3058 = vsel %vm3055, %v3057, %v3053
    %v3059 = vmul.f32 1.0, %v3058
    %v3060 = vtanh.pop %v3002
    %v3062 = vrot.slane %v2694, 7
    %v3064 = vmul.f32 %v3044, %v3062
    %v3065 = vmul.f32 %v3029, %v3060
    %v3066 = vadd.f32 %v3064, %v3065
    %v3067 = vtanh.pop %v3066
    %v3068 = vmul.f32 %v3059, %v3067
    %v3070 = vrot.slane %v2986, 4
    %v3072 = vpack.c.bf16 %v3068, %v3068
    %v3073 = vpack.c.bf16 %v3070, %v3070
    %v3076 = vrot.slane %v3072, 2
    %v3077 = vrot.slane %v3073, 2
    %3080 = vmatpush.bf16.msra.mxu0 %v1001
    %3081 = vmatpush.bf16.msra.mxu0 %v997
    %3082 = vmatpush.bf16.msra.mxu0 %v993
    %3083 = vmatpush.bf16.msra.mxu0 %v989
    %3084 = vmatpush.bf16.msra.mxu0 %v985
    %3085 = vmatpush.bf16.msra.mxu0 %v981
    %3086 = vmatpush.bf16.msra.mxu0 %v977
    %3087 = vmatpush.bf16.msra.mxu0 %v973
    %3088 = vmatmul.bf16.gmra.mxu0 %v3076
    %v3089 = vpop.f32.mrf.mxu0
    %v3090 = vadd.f32 0.0, %v3089
    %v3091 = vpop.f32.mrf.mxu0
    %3092 = vdwg.mxu0
    %3093 = vmatpush.bf16.msra.mxu0 %v1033
    %3094 = vmatpush.bf16.msra.mxu0 %v1029
    %3095 = vmatpush.bf16.msra.mxu0 %v1025
    %3096 = vmatpush.bf16.msra.mxu0 %v1021
    %3097 = vmatpush.bf16.msra.mxu0 %v1017
    %3098 = vmatpush.bf16.msra.mxu0 %v1013
    %3099 = vmatpush.bf16.msra.mxu0 %v1009
    %3100 = vmatpush.bf16.msra.mxu0 %v1005
    %3101 = vmatmul.bf16.gmra.mxu0 %v3077
    %v3102 = vpop.f32.mrf.mxu0
    %v3103 = vadd.f32 %v3090, %v3102
    %v3104 = vpop.f32.mrf.mxu0
    %3105 = vdwg.mxu0
    %3106 = vmatpush.bf16.msra.mxu0 %v1002
    %3107 = vmatpush.bf16.msra.mxu0 %v998
    %3108 = vmatpush.bf16.msra.mxu0 %v994
    %3109 = vmatpush.bf16.msra.mxu0 %v990
    %3110 = vmatpush.bf16.msra.mxu0 %v986
    %3111 = vmatpush.bf16.msra.mxu0 %v982
    %3112 = vmatpush.bf16.msra.mxu0 %v978
    %3113 = vmatpush.bf16.msra.mxu0 %v974
    %3114 = vmatmul.bf16.gmra.mxu0 %v3076
    %v3115 = vpop.f32.mrf.mxu0
    %v3116 = vadd.f32 0.0, %v3115
    %v3117 = vpop.f32.mrf.mxu0
    %3118 = vdwg.mxu0
    %3119 = vmatpush.bf16.msra.mxu0 %v1034
    %3120 = vmatpush.bf16.msra.mxu0 %v1030
    %3121 = vmatpush.bf16.msra.mxu0 %v1026
    %3122 = vmatpush.bf16.msra.mxu0 %v1022
    %3123 = vmatpush.bf16.msra.mxu0 %v1018
    %3124 = vmatpush.bf16.msra.mxu0 %v1014
    %3125 = vmatpush.bf16.msra.mxu0 %v1010
    %3126 = vmatpush.bf16.msra.mxu0 %v1006
    %3127 = vmatmul.bf16.gmra.mxu0 %v3077
    %v3128 = vpop.f32.mrf.mxu0
    %v3129 = vadd.f32 %v3116, %v3128
    %v3130 = vpop.f32.mrf.mxu0
    %3131 = vdwg.mxu0
    %3132 = vmatpush.bf16.msra.mxu0 %v1003
    %3133 = vmatpush.bf16.msra.mxu0 %v999
    %3134 = vmatpush.bf16.msra.mxu0 %v995
    %3135 = vmatpush.bf16.msra.mxu0 %v991
    %3136 = vmatpush.bf16.msra.mxu0 %v987
    %3137 = vmatpush.bf16.msra.mxu0 %v983
    %3138 = vmatpush.bf16.msra.mxu0 %v979
    %3139 = vmatpush.bf16.msra.mxu0 %v975
    %3140 = vmatmul.bf16.gmra.mxu0 %v3076
    %v3141 = vpop.f32.mrf.mxu0
    %v3142 = vadd.f32 0.0, %v3141
    %v3143 = vpop.f32.mrf.mxu0
    %3144 = vdwg.mxu0
    %3145 = vmatpush.bf16.msra.mxu0 %v1035
    %3146 = vmatpush.bf16.msra.mxu0 %v1031
    %3147 = vmatpush.bf16.msra.mxu0 %v1027
    %3148 = vmatpush.bf16.msra.mxu0 %v1023
    %3149 = vmatpush.bf16.msra.mxu0 %v1019
    %3150 = vmatpush.bf16.msra.mxu0 %v1015
    %3151 = vmatpush.bf16.msra.mxu0 %v1011
    %3152 = vmatpush.bf16.msra.mxu0 %v1007
    %3153 = vmatmul.bf16.gmra.mxu0 %v3077
    %v3154 = vpop.f32.mrf.mxu0
    %v3155 = vadd.f32 %v3142, %v3154
    %v3156 = vpop.f32.mrf.mxu0
    %3157 = vdwg.mxu0
    %3158 = vmatpush.bf16.msra.mxu0 %v1004
    %3159 = vmatpush.bf16.msra.mxu0 %v1000
    %3160 = vmatpush.bf16.msra.mxu0 %v996
    %3161 = vmatpush.bf16.msra.mxu0 %v992
    %3162 = vmatpush.bf16.msra.mxu0 %v988
    %3163 = vmatpush.bf16.msra.mxu0 %v984
    %3164 = vmatpush.bf16.msra.mxu0 %v980
    %3165 = vmatpush.bf16.msra.mxu0 %v976
    %3166 = vmatmul.bf16.gmra.mxu0 %v3076
    %v3167 = vpop.f32.mrf.mxu0
    %v3168 = vadd.f32 0.0, %v3167
    %v3169 = vpop.f32.mrf.mxu0
    %3170 = vdwg.mxu0
    %3171 = vmatpush.bf16.msra.mxu0 %v1036
    %3172 = vmatpush.bf16.msra.mxu0 %v1032
    %3173 = vmatpush.bf16.msra.mxu0 %v1028
    %3174 = vmatpush.bf16.msra.mxu0 %v1024
    %3175 = vmatpush.bf16.msra.mxu0 %v1020
    %3176 = vmatpush.bf16.msra.mxu0 %v1016
    %3177 = vmatpush.bf16.msra.mxu0 %v1012
    %3178 = vmatpush.bf16.msra.mxu0 %v1008
    %3179 = vmatmul.bf16.gmra.mxu0 %v3077
    %v3180 = vpop.f32.mrf.mxu0
    %v3181 = vadd.f32 %v3168, %v3180
    %v3182 = vpop.f32.mrf.mxu0
    %3183 = vdwg.mxu0
    %3184 = vmatpush.bf16.msra.mxu0 %v1493
    %3185 = vmatpush.bf16.msra.mxu0 %v1489
    %3186 = vmatpush.bf16.msra.mxu0 %v1485
    %3187 = vmatpush.bf16.msra.mxu0 %v1481
    %3188 = vmatpush.bf16.msra.mxu0 %v1477
    %3189 = vmatpush.bf16.msra.mxu0 %v1473
    %3190 = vmatpush.bf16.msra.mxu0 %v1469
    %3191 = vmatpush.bf16.msra.mxu0 %v1465
    %3192 = vmatmul.bf16.gmra.mxu0 %v3076
    %v3193 = vpop.f32.mrf.mxu0
    %v3194 = vadd.f32 0.0, %v3193
    %v3195 = vpop.f32.mrf.mxu0
    %3196 = vdwg.mxu0
    %3197 = vmatpush.bf16.msra.mxu0 %v1525
    %3198 = vmatpush.bf16.msra.mxu0 %v1521
    %3199 = vmatpush.bf16.msra.mxu0 %v1517
    %3200 = vmatpush.bf16.msra.mxu0 %v1513
    %3201 = vmatpush.bf16.msra.mxu0 %v1509
    %3202 = vmatpush.bf16.msra.mxu0 %v1505
    %3203 = vmatpush.bf16.msra.mxu0 %v1501
    %3204 = vmatpush.bf16.msra.mxu0 %v1497
    %3205 = vmatmul.bf16.gmra.mxu0 %v3077
    %v3206 = vpop.f32.mrf.mxu0
    %v3207 = vadd.f32 %v3194, %v3206
    %v3208 = vpop.f32.mrf.mxu0
    %3209 = vdwg.mxu0
    %3210 = vmatpush.bf16.msra.mxu0 %v1494
    %3211 = vmatpush.bf16.msra.mxu0 %v1490
    %3212 = vmatpush.bf16.msra.mxu0 %v1486
    %3213 = vmatpush.bf16.msra.mxu0 %v1482
    %3214 = vmatpush.bf16.msra.mxu0 %v1478
    %3215 = vmatpush.bf16.msra.mxu0 %v1474
    %3216 = vmatpush.bf16.msra.mxu0 %v1470
    %3217 = vmatpush.bf16.msra.mxu0 %v1466
    %3218 = vmatmul.bf16.gmra.mxu0 %v3076
    %v3219 = vpop.f32.mrf.mxu0
    %v3220 = vadd.f32 0.0, %v3219
    %v3221 = vpop.f32.mrf.mxu0
    %3222 = vdwg.mxu0
    %3223 = vmatpush.bf16.msra.mxu0 %v1526
    %3224 = vmatpush.bf16.msra.mxu0 %v1522
    %3225 = vmatpush.bf16.msra.mxu0 %v1518
    %3226 = vmatpush.bf16.msra.mxu0 %v1514
    %3227 = vmatpush.bf16.msra.mxu0 %v1510
    %3228 = vmatpush.bf16.msra.mxu0 %v1506
    %3229 = vmatpush.bf16.msra.mxu0 %v1502
    %3230 = vmatpush.bf16.msra.mxu0 %v1498
    %3231 = vmatmul.bf16.gmra.mxu0 %v3077
    %v3232 = vpop.f32.mrf.mxu0
    %v3233 = vadd.f32 %v3220, %v3232
    %v3234 = vpop.f32.mrf.mxu0
    %3235 = vdwg.mxu0
    %3236 = vmatpush.bf16.msra.mxu0 %v1495
    %3237 = vmatpush.bf16.msra.mxu0 %v1491
    %3238 = vmatpush.bf16.msra.mxu0 %v1487
    %3239 = vmatpush.bf16.msra.mxu0 %v1483
    %3240 = vmatpush.bf16.msra.mxu0 %v1479
    %3241 = vmatpush.bf16.msra.mxu0 %v1475
    %3242 = vmatpush.bf16.msra.mxu0 %v1471
    %3243 = vmatpush.bf16.msra.mxu0 %v1467
    %3244 = vmatmul.bf16.gmra.mxu0 %v3076
    %v3245 = vpop.f32.mrf.mxu0
    %v3246 = vadd.f32 0.0, %v3245
    %v3247 = vpop.f32.mrf.mxu0
    %3248 = vdwg.mxu0
    %3249 = vmatpush.bf16.msra.mxu0 %v1527
    %3250 = vmatpush.bf16.msra.mxu0 %v1523
    %3251 = vmatpush.bf16.msra.mxu0 %v1519
    %3252 = vmatpush.bf16.msra.mxu0 %v1515
    %3253 = vmatpush.bf16.msra.mxu0 %v1511
    %3254 = vmatpush.bf16.msra.mxu0 %v1507
    %3255 = vmatpush.bf16.msra.mxu0 %v1503
    %3256 = vmatpush.bf16.msra.mxu0 %v1499
    %3257 = vmatmul.bf16.gmra.mxu0 %v3077
    %v3258 = vpop.f32.mrf.mxu0
    %v3259 = vadd.f32 %v3246, %v3258
    %v3260 = vpop.f32.mrf.mxu0
    %3261 = vdwg.mxu0
    %3262 = vmatpush.bf16.msra.mxu0 %v1496
    %3263 = vmatpush.bf16.msra.mxu0 %v1492
    %3264 = vmatpush.bf16.msra.mxu0 %v1488
    %3265 = vmatpush.bf16.msra.mxu0 %v1484
    %3266 = vmatpush.bf16.msra.mxu0 %v1480
    %3267 = vmatpush.bf16.msra.mxu0 %v1476
    %3268 = vmatpush.bf16.msra.mxu0 %v1472
    %3269 = vmatpush.bf16.msra.mxu0 %v1468
    %3270 = vmatmul.bf16.gmra.mxu0 %v3076
    %v3271 = vpop.f32.mrf.mxu0
    %v3272 = vadd.f32 0.0, %v3271
    %v3273 = vpop.f32.mrf.mxu0
    %3274 = vdwg.mxu0
    %3275 = vmatpush.bf16.msra.mxu0 %v1528
    %3276 = vmatpush.bf16.msra.mxu0 %v1524
    %3277 = vmatpush.bf16.msra.mxu0 %v1520
    %3278 = vmatpush.bf16.msra.mxu0 %v1516
    %3279 = vmatpush.bf16.msra.mxu0 %v1512
    %3280 = vmatpush.bf16.msra.mxu0 %v1508
    %3281 = vmatpush.bf16.msra.mxu0 %v1504
    %3282 = vmatpush.bf16.msra.mxu0 %v1500
    %3283 = vmatmul.bf16.gmra.mxu0 %v3077
    %v3284 = vpop.f32.mrf.mxu0
    %v3285 = vadd.f32 %v3272, %v3284
    %v3286 = vpop.f32.mrf.mxu0
    %3287 = vdwg.mxu0
    %v3288 = vadd.f32 %v3207, %v1802
    %v3289 = vadd.f32 %v3233, %v1803
    %v3290 = vadd.f32 %v3259, %v1804
    %v3291 = vadd.f32 %v3285, %v1805
    %v3292 = vxor.u32 %v3288, 2147483648
    %v3293 = vxor.u32 %v3289, 2147483648
    %v3294 = vxor.u32 %v3290, 2147483648
    %v3295 = vmul.f32 %v3292, 1.442695
    %v3296 = vpow.pop %v3295
    %v3297 = vmul.f32 %v3293, 1.442695
    %v3298 = vpow.pop %v3297
    %v3299 = vmul.f32 %v3294, 1.442695
    %v3300 = vpow.pop %v3299
    %v3301 = vadd.f32 %v3296, 1.0
    %v3302 = vadd.f32 %v3298, 1.0
    %v3303 = vadd.f32 %v3300, 1.0
    %v3304 = vrcp.pop %v3301
    %v3305 = vmul.f32 %v3301, %v3304
    %v3306 = vsub.f32 1.0, %v3305
    %v3307 = vmul.f32 %v3304, %v3306
    %v3308 = vadd.f32 %v3304, %v3307
    %vm3309 = vweird.f32 %v3301
    %vm3310 = vweird.f32 %v3304
    %vm3311 = vmor %vm3309, %vm3310
    %v3312 = vsel %vm3311, %v3304, %v3308
    %v3313 = vand.u32 2147483647, %v3301
    %vm3314 = vcmp.eq.f32.partialorder %v3313, 8.507059e+37
    %v3315 = vand.u32 %v3301, 2147483648
    %v3316 = vor.u32 1.1754944e-38, %v3315
    %v3317 = vsel %vm3314, %v3316, %v3312
    %v3318 = vmul.f32 1.0, %v3317
    %v3319 = vrcp.pop %v3302
    %v3320 = vmul.f32 %v3302, %v3319
    %v3321 = vsub.f32 1.0, %v3320
    %v3322 = vmul.f32 %v3319, %v3321
    %v3323 = vadd.f32 %v3319, %v3322
    %vm3324 = vweird.f32 %v3302
    %vm3325 = vweird.f32 %v3319
    %vm3326 = vmor %vm3324, %vm3325
    %v3327 = vsel %vm3326, %v3319, %v3323
    %v3328 = vand.u32 2147483647, %v3302
    %vm3329 = vcmp.eq.f32.partialorder %v3328, 8.507059e+37
    %v3330 = vand.u32 %v3302, 2147483648
    %v3331 = vor.u32 1.1754944e-38, %v3330
    %v3332 = vsel %vm3329, %v3331, %v3327
    %v3333 = vmul.f32 1.0, %v3332
    %v3334 = vrcp.pop %v3303
    %v3335 = vmul.f32 %v3303, %v3334
    %v3336 = vsub.f32 1.0, %v3335
    %v3337 = vmul.f32 %v3334, %v3336
    %v3338 = vadd.f32 %v3334, %v3337
    %vm3339 = vweird.f32 %v3303
    %vm3340 = vweird.f32 %v3334
    %vm3341 = vmor %vm3339, %vm3340
    %v3342 = vsel %vm3341, %v3334, %v3338
    %v3343 = vand.u32 2147483647, %v3303
    %vm3344 = vcmp.eq.f32.partialorder %v3343, 8.507059e+37
    %v3345 = vand.u32 %v3303, 2147483648
    %v3346 = vor.u32 1.1754944e-38, %v3345
    %v3347 = vsel %vm3344, %v3346, %v3342
    %v3348 = vmul.f32 1.0, %v3347
    %v3349 = vtanh.pop %v3291
    %v3350 = vmul.f32 %v3333, %v2984
    %v3351 = vmul.f32 %v3318, %v3349
    %v3352 = vadd.f32 %v3350, %v3351
    %v3353 = vtanh.pop %v3352
    %v3354 = vmul.f32 %v3348, %v3353
    %v3359 = vrot.slane %v3103, 3
    %v3360 = vrot.slane %v3129, 3
    %v3361 = vrot.slane %v3155, 3
    %v3362 = vrot.slane %v3181, 3
    %v3367 = vadd.f32 %v604, %v3359
    %v3368 = vadd.f32 %v617, %v3360
    %v3369 = vadd.f32 %v630, %v3361
    %v3370 = vadd.f32 %v643, %v3362
    %v3371 = vxor.u32 %v3367, 2147483648
    %v3372 = vxor.u32 %v3368, 2147483648
    %v3373 = vxor.u32 %v3369, 2147483648
    %v3374 = vmul.f32 %v3371, 1.442695
    %v3375 = vpow.pop %v3374
    %v3376 = vmul.f32 %v3372, 1.442695
    %v3377 = vpow.pop %v3376
    %v3378 = vmul.f32 %v3373, 1.442695
    %v3379 = vpow.pop %v3378
    %v3380 = vadd.f32 %v3375, 1.0
    %v3381 = vadd.f32 %v3377, 1.0
    %v3382 = vadd.f32 %v3379, 1.0
    %v3383 = vrcp.pop %v3380
    %v3384 = vmul.f32 %v3380, %v3383
    %v3385 = vsub.f32 1.0, %v3384
    %v3386 = vmul.f32 %v3383, %v3385
    %v3387 = vadd.f32 %v3383, %v3386
    %vm3388 = vweird.f32 %v3380
    %vm3389 = vweird.f32 %v3383
    %vm3390 = vmor %vm3388, %vm3389
    %v3391 = vsel %vm3390, %v3383, %v3387
    %v3392 = vand.u32 2147483647, %v3380
    %vm3393 = vcmp.eq.f32.partialorder %v3392, 8.507059e+37
    %v3394 = vand.u32 %v3380, 2147483648
    %v3395 = vor.u32 1.1754944e-38, %v3394
    %v3396 = vsel %vm3393, %v3395, %v3391
    %v3397 = vmul.f32 1.0, %v3396
    %v3398 = vrcp.pop %v3381
    %v3399 = vmul.f32 %v3381, %v3398
    %v3400 = vsub.f32 1.0, %v3399
    %v3401 = vmul.f32 %v3398, %v3400
    %v3402 = vadd.f32 %v3398, %v3401
    %vm3403 = vweird.f32 %v3381
    %vm3404 = vweird.f32 %v3398
    %vm3405 = vmor %vm3403, %vm3404
    %v3406 = vsel %vm3405, %v3398, %v3402
    %v3407 = vand.u32 2147483647, %v3381
    %vm3408 = vcmp.eq.f32.partialorder %v3407, 8.507059e+37
    %v3409 = vand.u32 %v3381, 2147483648
    %v3410 = vor.u32 1.1754944e-38, %v3409
    %v3411 = vsel %vm3408, %v3410, %v3406
    %v3412 = vmul.f32 1.0, %v3411
    %v3413 = vrcp.pop %v3382
    %v3414 = vmul.f32 %v3382, %v3413
    %v3415 = vsub.f32 1.0, %v3414
    %v3416 = vmul.f32 %v3413, %v3415
    %v3417 = vadd.f32 %v3413, %v3416
    %vm3418 = vweird.f32 %v3382
    %vm3419 = vweird.f32 %v3413
    %vm3420 = vmor %vm3418, %vm3419
    %v3421 = vsel %vm3420, %v3413, %v3417
    %v3422 = vand.u32 2147483647, %v3382
    %vm3423 = vcmp.eq.f32.partialorder %v3422, 8.507059e+37
    %v3424 = vand.u32 %v3382, 2147483648
    %v3425 = vor.u32 1.1754944e-38, %v3424
    %v3426 = vsel %vm3423, %v3425, %v3421
    %v3427 = vmul.f32 1.0, %v3426
    %v3428 = vtanh.pop %v3370
    %v3430 = vrot.slane %v3066, 7
    %v3432 = vmul.f32 %v3412, %v3430
    %v3433 = vmul.f32 %v3397, %v3428
    %v3434 = vadd.f32 %v3432, %v3433
    %v3435 = vtanh.pop %v3434
    %v3436 = vmul.f32 %v3427, %v3435
    %v3438 = vrot.slane %v3354, 3
    %v3440 = vpack.c.bf16 %v3436, %v3436
    %v3441 = vpack.c.bf16 %v3438, %v3438
    %v3443 = vshrl.u32 %v3440, 16
    %v3445 = vrot.slane %v3443, 2
    %v3447 = vshrl.u32 %v3441, 16
    %v3449 = vrot.slane %v3447, 2
    %3452 = vmatpush.bf16.msra.mxu0 %v1001
    %3453 = vmatpush.bf16.msra.mxu0 %v997
    %3454 = vmatpush.bf16.msra.mxu0 %v993
    %3455 = vmatpush.bf16.msra.mxu0 %v989
    %3456 = vmatpush.bf16.msra.mxu0 %v985
    %3457 = vmatpush.bf16.msra.mxu0 %v981
    %3458 = vmatpush.bf16.msra.mxu0 %v977
    %3459 = vmatpush.bf16.msra.mxu0 %v973
    %3460 = vmatmul.bf16.gmra.mxu0 %v3445
    %v3461 = vpop.f32.mrf.mxu0
    %v3462 = vadd.f32 0.0, %v3461
    %v3463 = vpop.f32.mrf.mxu0
    %3464 = vdwg.mxu0
    %3465 = vmatpush.bf16.msra.mxu0 %v1033
    %3466 = vmatpush.bf16.msra.mxu0 %v1029
    %3467 = vmatpush.bf16.msra.mxu0 %v1025
    %3468 = vmatpush.bf16.msra.mxu0 %v1021
    %3469 = vmatpush.bf16.msra.mxu0 %v1017
    %3470 = vmatpush.bf16.msra.mxu0 %v1013
    %3471 = vmatpush.bf16.msra.mxu0 %v1009
    %3472 = vmatpush.bf16.msra.mxu0 %v1005
    %3473 = vmatmul.bf16.gmra.mxu0 %v3449
    %v3474 = vpop.f32.mrf.mxu0
    %v3475 = vadd.f32 %v3462, %v3474
    %v3476 = vpop.f32.mrf.mxu0
    %3477 = vdwg.mxu0
    %3478 = vmatpush.bf16.msra.mxu0 %v1002
    %3479 = vmatpush.bf16.msra.mxu0 %v998
    %3480 = vmatpush.bf16.msra.mxu0 %v994
    %3481 = vmatpush.bf16.msra.mxu0 %v990
    %3482 = vmatpush.bf16.msra.mxu0 %v986
    %3483 = vmatpush.bf16.msra.mxu0 %v982
    %3484 = vmatpush.bf16.msra.mxu0 %v978
    %3485 = vmatpush.bf16.msra.mxu0 %v974
    %3486 = vmatmul.bf16.gmra.mxu0 %v3445
    %v3487 = vpop.f32.mrf.mxu0
    %v3488 = vadd.f32 0.0, %v3487
    %v3489 = vpop.f32.mrf.mxu0
    %3490 = vdwg.mxu0
    %3491 = vmatpush.bf16.msra.mxu0 %v1034
    %3492 = vmatpush.bf16.msra.mxu0 %v1030
    %3493 = vmatpush.bf16.msra.mxu0 %v1026
    %3494 = vmatpush.bf16.msra.mxu0 %v1022
    %3495 = vmatpush.bf16.msra.mxu0 %v1018
    %3496 = vmatpush.bf16.msra.mxu0 %v1014
    %3497 = vmatpush.bf16.msra.mxu0 %v1010
    %3498 = vmatpush.bf16.msra.mxu0 %v1006
    %3499 = vmatmul.bf16.gmra.mxu0 %v3449
    %v3500 = vpop.f32.mrf.mxu0
    %v3501 = vadd.f32 %v3488, %v3500
    %v3502 = vpop.f32.mrf.mxu0
    %3503 = vdwg.mxu0
    %3504 = vmatpush.bf16.msra.mxu0 %v1003
    %3505 = vmatpush.bf16.msra.mxu0 %v999
    %3506 = vmatpush.bf16.msra.mxu0 %v995
    %3507 = vmatpush.bf16.msra.mxu0 %v991
    %3508 = vmatpush.bf16.msra.mxu0 %v987
    %3509 = vmatpush.bf16.msra.mxu0 %v983
    %3510 = vmatpush.bf16.msra.mxu0 %v979
    %3511 = vmatpush.bf16.msra.mxu0 %v975
    %3512 = vmatmul.bf16.gmra.mxu0 %v3445
    %v3513 = vpop.f32.mrf.mxu0
    %v3514 = vadd.f32 0.0, %v3513
    %v3515 = vpop.f32.mrf.mxu0
    %3516 = vdwg.mxu0
    %3517 = vmatpush.bf16.msra.mxu0 %v1035
    %3518 = vmatpush.bf16.msra.mxu0 %v1031
    %3519 = vmatpush.bf16.msra.mxu0 %v1027
    %3520 = vmatpush.bf16.msra.mxu0 %v1023
    %3521 = vmatpush.bf16.msra.mxu0 %v1019
    %3522 = vmatpush.bf16.msra.mxu0 %v1015
    %3523 = vmatpush.bf16.msra.mxu0 %v1011
    %3524 = vmatpush.bf16.msra.mxu0 %v1007
    %3525 = vmatmul.bf16.gmra.mxu0 %v3449
    %v3526 = vpop.f32.mrf.mxu0
    %v3527 = vadd.f32 %v3514, %v3526
    %v3528 = vpop.f32.mrf.mxu0
    %3529 = vdwg.mxu0
    %3530 = vmatpush.bf16.msra.mxu0 %v1004
    %3531 = vmatpush.bf16.msra.mxu0 %v1000
    %3532 = vmatpush.bf16.msra.mxu0 %v996
    %3533 = vmatpush.bf16.msra.mxu0 %v992
    %3534 = vmatpush.bf16.msra.mxu0 %v988
    %3535 = vmatpush.bf16.msra.mxu0 %v984
    %3536 = vmatpush.bf16.msra.mxu0 %v980
    %3537 = vmatpush.bf16.msra.mxu0 %v976
    %3538 = vmatmul.bf16.gmra.mxu0 %v3445
    %v3539 = vpop.f32.mrf.mxu0
    %v3540 = vadd.f32 0.0, %v3539
    %v3541 = vpop.f32.mrf.mxu0
    %3542 = vdwg.mxu0
    %3543 = vmatpush.bf16.msra.mxu0 %v1036
    %3544 = vmatpush.bf16.msra.mxu0 %v1032
    %3545 = vmatpush.bf16.msra.mxu0 %v1028
    %3546 = vmatpush.bf16.msra.mxu0 %v1024
    %3547 = vmatpush.bf16.msra.mxu0 %v1020
    %3548 = vmatpush.bf16.msra.mxu0 %v1016
    %3549 = vmatpush.bf16.msra.mxu0 %v1012
    %3550 = vmatpush.bf16.msra.mxu0 %v1008
    %3551 = vmatmul.bf16.gmra.mxu0 %v3449
    %v3552 = vpop.f32.mrf.mxu0
    %v3553 = vadd.f32 %v3540, %v3552
    %v3554 = vpop.f32.mrf.mxu0
    %3555 = vdwg.mxu0
    %3556 = vmatpush.bf16.msra.mxu0 %v1493
    %3557 = vmatpush.bf16.msra.mxu0 %v1489
    %3558 = vmatpush.bf16.msra.mxu0 %v1485
    %3559 = vmatpush.bf16.msra.mxu0 %v1481
    %3560 = vmatpush.bf16.msra.mxu0 %v1477
    %3561 = vmatpush.bf16.msra.mxu0 %v1473
    %3562 = vmatpush.bf16.msra.mxu0 %v1469
    %3563 = vmatpush.bf16.msra.mxu0 %v1465
    %3564 = vmatmul.bf16.gmra.mxu0 %v3445
    %v3565 = vpop.f32.mrf.mxu0
    %v3566 = vadd.f32 0.0, %v3565
    %v3567 = vpop.f32.mrf.mxu0
    %3568 = vdwg.mxu0
    %3569 = vmatpush.bf16.msra.mxu0 %v1525
    %3570 = vmatpush.bf16.msra.mxu0 %v1521
    %3571 = vmatpush.bf16.msra.mxu0 %v1517
    %3572 = vmatpush.bf16.msra.mxu0 %v1513
    %3573 = vmatpush.bf16.msra.mxu0 %v1509
    %3574 = vmatpush.bf16.msra.mxu0 %v1505
    %3575 = vmatpush.bf16.msra.mxu0 %v1501
    %3576 = vmatpush.bf16.msra.mxu0 %v1497
    %3577 = vmatmul.bf16.gmra.mxu0 %v3449
    %v3578 = vpop.f32.mrf.mxu0
    %v3579 = vadd.f32 %v3566, %v3578
    %v3580 = vpop.f32.mrf.mxu0
    %3581 = vdwg.mxu0
    %3582 = vmatpush.bf16.msra.mxu0 %v1494
    %3583 = vmatpush.bf16.msra.mxu0 %v1490
    %3584 = vmatpush.bf16.msra.mxu0 %v1486
    %3585 = vmatpush.bf16.msra.mxu0 %v1482
    %3586 = vmatpush.bf16.msra.mxu0 %v1478
    %3587 = vmatpush.bf16.msra.mxu0 %v1474
    %3588 = vmatpush.bf16.msra.mxu0 %v1470
    %3589 = vmatpush.bf16.msra.mxu0 %v1466
    %3590 = vmatmul.bf16.gmra.mxu0 %v3445
    %v3591 = vpop.f32.mrf.mxu0
    %v3592 = vadd.f32 0.0, %v3591
    %v3593 = vpop.f32.mrf.mxu0
    %3594 = vdwg.mxu0
    %3595 = vmatpush.bf16.msra.mxu0 %v1526
    %3596 = vmatpush.bf16.msra.mxu0 %v1522
    %3597 = vmatpush.bf16.msra.mxu0 %v1518
    %3598 = vmatpush.bf16.msra.mxu0 %v1514
    %3599 = vmatpush.bf16.msra.mxu0 %v1510
    %3600 = vmatpush.bf16.msra.mxu0 %v1506
    %3601 = vmatpush.bf16.msra.mxu0 %v1502
    %3602 = vmatpush.bf16.msra.mxu0 %v1498
    %3603 = vmatmul.bf16.gmra.mxu0 %v3449
    %v3604 = vpop.f32.mrf.mxu0
    %v3605 = vadd.f32 %v3592, %v3604
    %v3606 = vpop.f32.mrf.mxu0
    %3607 = vdwg.mxu0
    %3608 = vmatpush.bf16.msra.mxu0 %v1495
    %3609 = vmatpush.bf16.msra.mxu0 %v1491
    %3610 = vmatpush.bf16.msra.mxu0 %v1487
    %3611 = vmatpush.bf16.msra.mxu0 %v1483
    %3612 = vmatpush.bf16.msra.mxu0 %v1479
    %3613 = vmatpush.bf16.msra.mxu0 %v1475
    %3614 = vmatpush.bf16.msra.mxu0 %v1471
    %3615 = vmatpush.bf16.msra.mxu0 %v1467
    %3616 = vmatmul.bf16.gmra.mxu0 %v3445
    %v3617 = vpop.f32.mrf.mxu0
    %v3618 = vadd.f32 0.0, %v3617
    %v3619 = vpop.f32.mrf.mxu0
    %3620 = vdwg.mxu0
    %3621 = vmatpush.bf16.msra.mxu0 %v1527
    %3622 = vmatpush.bf16.msra.mxu0 %v1523
    %3623 = vmatpush.bf16.msra.mxu0 %v1519
    %3624 = vmatpush.bf16.msra.mxu0 %v1515
    %3625 = vmatpush.bf16.msra.mxu0 %v1511
    %3626 = vmatpush.bf16.msra.mxu0 %v1507
    %3627 = vmatpush.bf16.msra.mxu0 %v1503
    %3628 = vmatpush.bf16.msra.mxu0 %v1499
    %3629 = vmatmul.bf16.gmra.mxu0 %v3449
    %v3630 = vpop.f32.mrf.mxu0
    %v3631 = vadd.f32 %v3618, %v3630
    %v3632 = vpop.f32.mrf.mxu0
    %3633 = vdwg.mxu0
    %3634 = vmatpush.bf16.msra.mxu0 %v1496
    %3635 = vmatpush.bf16.msra.mxu0 %v1492
    %3636 = vmatpush.bf16.msra.mxu0 %v1488
    %3637 = vmatpush.bf16.msra.mxu0 %v1484
    %3638 = vmatpush.bf16.msra.mxu0 %v1480
    %3639 = vmatpush.bf16.msra.mxu0 %v1476
    %3640 = vmatpush.bf16.msra.mxu0 %v1472
    %3641 = vmatpush.bf16.msra.mxu0 %v1468
    %3642 = vmatmul.bf16.gmra.mxu0 %v3445
    %v3643 = vpop.f32.mrf.mxu0
    %v3644 = vadd.f32 0.0, %v3643
    %v3645 = vpop.f32.mrf.mxu0
    %3646 = vdwg.mxu0
    %3647 = vmatpush.bf16.msra.mxu0 %v1528
    %3648 = vmatpush.bf16.msra.mxu0 %v1524
    %3649 = vmatpush.bf16.msra.mxu0 %v1520
    %3650 = vmatpush.bf16.msra.mxu0 %v1516
    %3651 = vmatpush.bf16.msra.mxu0 %v1512
    %3652 = vmatpush.bf16.msra.mxu0 %v1508
    %3653 = vmatpush.bf16.msra.mxu0 %v1504
    %3654 = vmatpush.bf16.msra.mxu0 %v1500
    %3655 = vmatmul.bf16.gmra.mxu0 %v3449
    %v3656 = vpop.f32.mrf.mxu0
    %v3657 = vadd.f32 %v3644, %v3656
    %v3658 = vpop.f32.mrf.mxu0
    %3659 = vdwg.mxu0
    %v3660 = vadd.f32 %v3579, %v1802
    %v3661 = vadd.f32 %v3605, %v1803
    %v3662 = vadd.f32 %v3631, %v1804
    %v3663 = vadd.f32 %v3657, %v1805
    %v3664 = vxor.u32 %v3660, 2147483648
    %v3665 = vxor.u32 %v3661, 2147483648
    %v3666 = vxor.u32 %v3662, 2147483648
    %v3667 = vmul.f32 %v3664, 1.442695
    %v3668 = vpow.pop %v3667
    %v3669 = vmul.f32 %v3665, 1.442695
    %v3670 = vpow.pop %v3669
    %v3671 = vmul.f32 %v3666, 1.442695
    %v3672 = vpow.pop %v3671
    %v3673 = vadd.f32 %v3668, 1.0
    %v3674 = vadd.f32 %v3670, 1.0
    %v3675 = vadd.f32 %v3672, 1.0
    %v3676 = vrcp.pop %v3673
    %v3677 = vmul.f32 %v3673, %v3676
    %v3678 = vsub.f32 1.0, %v3677
    %v3679 = vmul.f32 %v3676, %v3678
    %v3680 = vadd.f32 %v3676, %v3679
    %vm3681 = vweird.f32 %v3673
    %vm3682 = vweird.f32 %v3676
    %vm3683 = vmor %vm3681, %vm3682
    %v3684 = vsel %vm3683, %v3676, %v3680
    %v3685 = vand.u32 2147483647, %v3673
    %vm3686 = vcmp.eq.f32.partialorder %v3685, 8.507059e+37
    %v3687 = vand.u32 %v3673, 2147483648
    %v3688 = vor.u32 1.1754944e-38, %v3687
    %v3689 = vsel %vm3686, %v3688, %v3684
    %v3690 = vmul.f32 1.0, %v3689
    %v3691 = vrcp.pop %v3674
    %v3692 = vmul.f32 %v3674, %v3691
    %v3693 = vsub.f32 1.0, %v3692
    %v3694 = vmul.f32 %v3691, %v3693
    %v3695 = vadd.f32 %v3691, %v3694
    %vm3696 = vweird.f32 %v3674
    %vm3697 = vweird.f32 %v3691
    %vm3698 = vmor %vm3696, %vm3697
    %v3699 = vsel %vm3698, %v3691, %v3695
    %v3700 = vand.u32 2147483647, %v3674
    %vm3701 = vcmp.eq.f32.partialorder %v3700, 8.507059e+37
    %v3702 = vand.u32 %v3674, 2147483648
    %v3703 = vor.u32 1.1754944e-38, %v3702
    %v3704 = vsel %vm3701, %v3703, %v3699
    %v3705 = vmul.f32 1.0, %v3704
    %v3706 = vrcp.pop %v3675
    %v3707 = vmul.f32 %v3675, %v3706
    %v3708 = vsub.f32 1.0, %v3707
    %v3709 = vmul.f32 %v3706, %v3708
    %v3710 = vadd.f32 %v3706, %v3709
    %vm3711 = vweird.f32 %v3675
    %vm3712 = vweird.f32 %v3706
    %vm3713 = vmor %vm3711, %vm3712
    %v3714 = vsel %vm3713, %v3706, %v3710
    %v3715 = vand.u32 2147483647, %v3675
    %vm3716 = vcmp.eq.f32.partialorder %v3715, 8.507059e+37
    %v3717 = vand.u32 %v3675, 2147483648
    %v3718 = vor.u32 1.1754944e-38, %v3717
    %v3719 = vsel %vm3716, %v3718, %v3714
    %v3720 = vmul.f32 1.0, %v3719
    %v3721 = vtanh.pop %v3663
    %v3722 = vmul.f32 %v3705, %v3352
    %v3723 = vmul.f32 %v3690, %v3721
    %v3724 = vadd.f32 %v3722, %v3723
    %v3725 = vtanh.pop %v3724
    %v3726 = vmul.f32 %v3720, %v3725
    %v3731 = vrot.slane %v3475, 2
    %v3732 = vrot.slane %v3501, 2
    %v3733 = vrot.slane %v3527, 2
    %v3734 = vrot.slane %v3553, 2
    %v3739 = vadd.f32 %v604, %v3731
    %v3740 = vadd.f32 %v617, %v3732
    %v3741 = vadd.f32 %v630, %v3733
    %v3742 = vadd.f32 %v643, %v3734
    %v3743 = vxor.u32 %v3739, 2147483648
    %v3744 = vxor.u32 %v3740, 2147483648
    %v3745 = vxor.u32 %v3741, 2147483648
    %v3746 = vmul.f32 %v3743, 1.442695
    %v3747 = vpow.pop %v3746
    %v3748 = vmul.f32 %v3744, 1.442695
    %v3749 = vpow.pop %v3748
    %v3750 = vmul.f32 %v3745, 1.442695
    %v3751 = vpow.pop %v3750
    %v3752 = vadd.f32 %v3747, 1.0
    %v3753 = vadd.f32 %v3749, 1.0
    %v3754 = vadd.f32 %v3751, 1.0
    %v3755 = vrcp.pop %v3752
    %v3756 = vmul.f32 %v3752, %v3755
    %v3757 = vsub.f32 1.0, %v3756
    %v3758 = vmul.f32 %v3755, %v3757
    %v3759 = vadd.f32 %v3755, %v3758
    %vm3760 = vweird.f32 %v3752
    %vm3761 = vweird.f32 %v3755
    %vm3762 = vmor %vm3760, %vm3761
    %v3763 = vsel %vm3762, %v3755, %v3759
    %v3764 = vand.u32 2147483647, %v3752
    %vm3765 = vcmp.eq.f32.partialorder %v3764, 8.507059e+37
    %v3766 = vand.u32 %v3752, 2147483648
    %v3767 = vor.u32 1.1754944e-38, %v3766
    %v3768 = vsel %vm3765, %v3767, %v3763
    %v3769 = vmul.f32 1.0, %v3768
    %v3770 = vrcp.pop %v3753
    %v3771 = vmul.f32 %v3753, %v3770
    %v3772 = vsub.f32 1.0, %v3771
    %v3773 = vmul.f32 %v3770, %v3772
    %v3774 = vadd.f32 %v3770, %v3773
    %vm3775 = vweird.f32 %v3753
    %vm3776 = vweird.f32 %v3770
    %vm3777 = vmor %vm3775, %vm3776
    %v3778 = vsel %vm3777, %v3770, %v3774
    %v3779 = vand.u32 2147483647, %v3753
    %vm3780 = vcmp.eq.f32.partialorder %v3779, 8.507059e+37
    %v3781 = vand.u32 %v3753, 2147483648
    %v3782 = vor.u32 1.1754944e-38, %v3781
    %v3783 = vsel %vm3780, %v3782, %v3778
    %v3784 = vmul.f32 1.0, %v3783
    %v3785 = vrcp.pop %v3754
    %v3786 = vmul.f32 %v3754, %v3785
    %v3787 = vsub.f32 1.0, %v3786
    %v3788 = vmul.f32 %v3785, %v3787
    %v3789 = vadd.f32 %v3785, %v3788
    %vm3790 = vweird.f32 %v3754
    %vm3791 = vweird.f32 %v3785
    %vm3792 = vmor %vm3790, %vm3791
    %v3793 = vsel %vm3792, %v3785, %v3789
    %v3794 = vand.u32 2147483647, %v3754
    %vm3795 = vcmp.eq.f32.partialorder %v3794, 8.507059e+37
    %v3796 = vand.u32 %v3754, 2147483648
    %v3797 = vor.u32 1.1754944e-38, %v3796
    %v3798 = vsel %vm3795, %v3797, %v3793
    %v3799 = vmul.f32 1.0, %v3798
    %v3800 = vtanh.pop %v3742
    %v3802 = vrot.slane %v3434, 7
    %v3804 = vmul.f32 %v3784, %v3802
    %v3805 = vmul.f32 %v3769, %v3800
    %v3806 = vadd.f32 %v3804, %v3805
    %v3807 = vtanh.pop %v3806
    %v3808 = vmul.f32 %v3799, %v3807
    %v3810 = vrot.slane %v3726, 2
    %v3812 = vpack.c.bf16 %v3808, %v3808
    %v3813 = vpack.c.bf16 %v3810, %v3810
    %v3816 = vrot.slane %v3812, 3
    %v3817 = vrot.slane %v3813, 3
    %3820 = vmatpush.bf16.msra.mxu0 %v1001
    %3821 = vmatpush.bf16.msra.mxu0 %v997
    %3822 = vmatpush.bf16.msra.mxu0 %v993
    %3823 = vmatpush.bf16.msra.mxu0 %v989
    %3824 = vmatpush.bf16.msra.mxu0 %v985
    %3825 = vmatpush.bf16.msra.mxu0 %v981
    %3826 = vmatpush.bf16.msra.mxu0 %v977
    %3827 = vmatpush.bf16.msra.mxu0 %v973
    %3828 = vmatmul.bf16.gmra.mxu0 %v3816
    %v3829 = vpop.f32.mrf.mxu0
    %v3830 = vadd.f32 0.0, %v3829
    %v3831 = vpop.f32.mrf.mxu0
    %3832 = vdwg.mxu0
    %3833 = vmatpush.bf16.msra.mxu0 %v1033
    %3834 = vmatpush.bf16.msra.mxu0 %v1029
    %3835 = vmatpush.bf16.msra.mxu0 %v1025
    %3836 = vmatpush.bf16.msra.mxu0 %v1021
    %3837 = vmatpush.bf16.msra.mxu0 %v1017
    %3838 = vmatpush.bf16.msra.mxu0 %v1013
    %3839 = vmatpush.bf16.msra.mxu0 %v1009
    %3840 = vmatpush.bf16.msra.mxu0 %v1005
    %3841 = vmatmul.bf16.gmra.mxu0 %v3817
    %v3842 = vpop.f32.mrf.mxu0
    %v3843 = vadd.f32 %v3830, %v3842
    %v3844 = vpop.f32.mrf.mxu0
    %3845 = vdwg.mxu0
    %3846 = vmatpush.bf16.msra.mxu0 %v1002
    %3847 = vmatpush.bf16.msra.mxu0 %v998
    %3848 = vmatpush.bf16.msra.mxu0 %v994
    %3849 = vmatpush.bf16.msra.mxu0 %v990
    %3850 = vmatpush.bf16.msra.mxu0 %v986
    %3851 = vmatpush.bf16.msra.mxu0 %v982
    %3852 = vmatpush.bf16.msra.mxu0 %v978
    %3853 = vmatpush.bf16.msra.mxu0 %v974
    %3854 = vmatmul.bf16.gmra.mxu0 %v3816
    %v3855 = vpop.f32.mrf.mxu0
    %v3856 = vadd.f32 0.0, %v3855
    %v3857 = vpop.f32.mrf.mxu0
    %3858 = vdwg.mxu0
    %3859 = vmatpush.bf16.msra.mxu0 %v1034
    %3860 = vmatpush.bf16.msra.mxu0 %v1030
    %3861 = vmatpush.bf16.msra.mxu0 %v1026
    %3862 = vmatpush.bf16.msra.mxu0 %v1022
    %3863 = vmatpush.bf16.msra.mxu0 %v1018
    %3864 = vmatpush.bf16.msra.mxu0 %v1014
    %3865 = vmatpush.bf16.msra.mxu0 %v1010
    %3866 = vmatpush.bf16.msra.mxu0 %v1006
    %3867 = vmatmul.bf16.gmra.mxu0 %v3817
    %v3868 = vpop.f32.mrf.mxu0
    %v3869 = vadd.f32 %v3856, %v3868
    %v3870 = vpop.f32.mrf.mxu0
    %3871 = vdwg.mxu0
    %3872 = vmatpush.bf16.msra.mxu0 %v1003
    %3873 = vmatpush.bf16.msra.mxu0 %v999
    %3874 = vmatpush.bf16.msra.mxu0 %v995
    %3875 = vmatpush.bf16.msra.mxu0 %v991
    %3876 = vmatpush.bf16.msra.mxu0 %v987
    %3877 = vmatpush.bf16.msra.mxu0 %v983
    %3878 = vmatpush.bf16.msra.mxu0 %v979
    %3879 = vmatpush.bf16.msra.mxu0 %v975
    %3880 = vmatmul.bf16.gmra.mxu0 %v3816
    %v3881 = vpop.f32.mrf.mxu0
    %v3882 = vadd.f32 0.0, %v3881
    %v3883 = vpop.f32.mrf.mxu0
    %3884 = vdwg.mxu0
    %3885 = vmatpush.bf16.msra.mxu0 %v1035
    %3886 = vmatpush.bf16.msra.mxu0 %v1031
    %3887 = vmatpush.bf16.msra.mxu0 %v1027
    %3888 = vmatpush.bf16.msra.mxu0 %v1023
    %3889 = vmatpush.bf16.msra.mxu0 %v1019
    %3890 = vmatpush.bf16.msra.mxu0 %v1015
    %3891 = vmatpush.bf16.msra.mxu0 %v1011
    %3892 = vmatpush.bf16.msra.mxu0 %v1007
    %3893 = vmatmul.bf16.gmra.mxu0 %v3817
    %v3894 = vpop.f32.mrf.mxu0
    %v3895 = vadd.f32 %v3882, %v3894
    %v3896 = vpop.f32.mrf.mxu0
    %3897 = vdwg.mxu0
    %3898 = vmatpush.bf16.msra.mxu0 %v1004
    %3899 = vmatpush.bf16.msra.mxu0 %v1000
    %3900 = vmatpush.bf16.msra.mxu0 %v996
    %3901 = vmatpush.bf16.msra.mxu0 %v992
    %3902 = vmatpush.bf16.msra.mxu0 %v988
    %3903 = vmatpush.bf16.msra.mxu0 %v984
    %3904 = vmatpush.bf16.msra.mxu0 %v980
    %3905 = vmatpush.bf16.msra.mxu0 %v976
    %3906 = vmatmul.bf16.gmra.mxu0 %v3816
    %v3907 = vpop.f32.mrf.mxu0
    %v3908 = vadd.f32 0.0, %v3907
    %v3909 = vpop.f32.mrf.mxu0
    %3910 = vdwg.mxu0
    %3911 = vmatpush.bf16.msra.mxu0 %v1036
    %3912 = vmatpush.bf16.msra.mxu0 %v1032
    %3913 = vmatpush.bf16.msra.mxu0 %v1028
    %3914 = vmatpush.bf16.msra.mxu0 %v1024
    %3915 = vmatpush.bf16.msra.mxu0 %v1020
    %3916 = vmatpush.bf16.msra.mxu0 %v1016
    %3917 = vmatpush.bf16.msra.mxu0 %v1012
    %3918 = vmatpush.bf16.msra.mxu0 %v1008
    %3919 = vmatmul.bf16.gmra.mxu0 %v3817
    %v3920 = vpop.f32.mrf.mxu0
    %v3921 = vadd.f32 %v3908, %v3920
    %v3922 = vpop.f32.mrf.mxu0
    %3923 = vdwg.mxu0
    %3924 = vmatpush.bf16.msra.mxu0 %v1493
    %3925 = vmatpush.bf16.msra.mxu0 %v1489
    %3926 = vmatpush.bf16.msra.mxu0 %v1485
    %3927 = vmatpush.bf16.msra.mxu0 %v1481
    %3928 = vmatpush.bf16.msra.mxu0 %v1477
    %3929 = vmatpush.bf16.msra.mxu0 %v1473
    %3930 = vmatpush.bf16.msra.mxu0 %v1469
    %3931 = vmatpush.bf16.msra.mxu0 %v1465
    %3932 = vmatmul.bf16.gmra.mxu0 %v3816
    %v3933 = vpop.f32.mrf.mxu0
    %v3934 = vadd.f32 0.0, %v3933
    %v3935 = vpop.f32.mrf.mxu0
    %3936 = vdwg.mxu0
    %3937 = vmatpush.bf16.msra.mxu0 %v1525
    %3938 = vmatpush.bf16.msra.mxu0 %v1521
    %3939 = vmatpush.bf16.msra.mxu0 %v1517
    %3940 = vmatpush.bf16.msra.mxu0 %v1513
    %3941 = vmatpush.bf16.msra.mxu0 %v1509
    %3942 = vmatpush.bf16.msra.mxu0 %v1505
    %3943 = vmatpush.bf16.msra.mxu0 %v1501
    %3944 = vmatpush.bf16.msra.mxu0 %v1497
    %3945 = vmatmul.bf16.gmra.mxu0 %v3817
    %v3946 = vpop.f32.mrf.mxu0
    %v3947 = vadd.f32 %v3934, %v3946
    %v3948 = vpop.f32.mrf.mxu0
    %3949 = vdwg.mxu0
    %3950 = vmatpush.bf16.msra.mxu0 %v1494
    %3951 = vmatpush.bf16.msra.mxu0 %v1490
    %3952 = vmatpush.bf16.msra.mxu0 %v1486
    %3953 = vmatpush.bf16.msra.mxu0 %v1482
    %3954 = vmatpush.bf16.msra.mxu0 %v1478
    %3955 = vmatpush.bf16.msra.mxu0 %v1474
    %3956 = vmatpush.bf16.msra.mxu0 %v1470
    %3957 = vmatpush.bf16.msra.mxu0 %v1466
    %3958 = vmatmul.bf16.gmra.mxu0 %v3816
    %v3959 = vpop.f32.mrf.mxu0
    %v3960 = vadd.f32 0.0, %v3959
    %v3961 = vpop.f32.mrf.mxu0
    %3962 = vdwg.mxu0
    %3963 = vmatpush.bf16.msra.mxu0 %v1526
    %3964 = vmatpush.bf16.msra.mxu0 %v1522
    %3965 = vmatpush.bf16.msra.mxu0 %v1518
    %3966 = vmatpush.bf16.msra.mxu0 %v1514
    %3967 = vmatpush.bf16.msra.mxu0 %v1510
    %3968 = vmatpush.bf16.msra.mxu0 %v1506
    %3969 = vmatpush.bf16.msra.mxu0 %v1502
    %3970 = vmatpush.bf16.msra.mxu0 %v1498
    %3971 = vmatmul.bf16.gmra.mxu0 %v3817
    %v3972 = vpop.f32.mrf.mxu0
    %v3973 = vadd.f32 %v3960, %v3972
    %v3974 = vpop.f32.mrf.mxu0
    %3975 = vdwg.mxu0
    %3976 = vmatpush.bf16.msra.mxu0 %v1495
    %3977 = vmatpush.bf16.msra.mxu0 %v1491
    %3978 = vmatpush.bf16.msra.mxu0 %v1487
    %3979 = vmatpush.bf16.msra.mxu0 %v1483
    %3980 = vmatpush.bf16.msra.mxu0 %v1479
    %3981 = vmatpush.bf16.msra.mxu0 %v1475
    %3982 = vmatpush.bf16.msra.mxu0 %v1471
    %3983 = vmatpush.bf16.msra.mxu0 %v1467
    %3984 = vmatmul.bf16.gmra.mxu0 %v3816
    %v3985 = vpop.f32.mrf.mxu0
    %v3986 = vadd.f32 0.0, %v3985
    %v3987 = vpop.f32.mrf.mxu0
    %3988 = vdwg.mxu0
    %3989 = vmatpush.bf16.msra.mxu0 %v1527
    %3990 = vmatpush.bf16.msra.mxu0 %v1523
    %3991 = vmatpush.bf16.msra.mxu0 %v1519
    %3992 = vmatpush.bf16.msra.mxu0 %v1515
    %3993 = vmatpush.bf16.msra.mxu0 %v1511
    %3994 = vmatpush.bf16.msra.mxu0 %v1507
    %3995 = vmatpush.bf16.msra.mxu0 %v1503
    %3996 = vmatpush.bf16.msra.mxu0 %v1499
    %3997 = vmatmul.bf16.gmra.mxu0 %v3817
    %v3998 = vpop.f32.mrf.mxu0
    %v3999 = vadd.f32 %v3986, %v3998
    %v4000 = vpop.f32.mrf.mxu0
    %4001 = vdwg.mxu0
    %4002 = vmatpush.bf16.msra.mxu0 %v1496
    %4003 = vmatpush.bf16.msra.mxu0 %v1492
    %4004 = vmatpush.bf16.msra.mxu0 %v1488
    %4005 = vmatpush.bf16.msra.mxu0 %v1484
    %4006 = vmatpush.bf16.msra.mxu0 %v1480
    %4007 = vmatpush.bf16.msra.mxu0 %v1476
    %4008 = vmatpush.bf16.msra.mxu0 %v1472
    %4009 = vmatpush.bf16.msra.mxu0 %v1468
    %4010 = vmatmul.bf16.gmra.mxu0 %v3816
    %v4011 = vpop.f32.mrf.mxu0
    %v4012 = vadd.f32 0.0, %v4011
    %v4013 = vpop.f32.mrf.mxu0
    %4014 = vdwg.mxu0
    %4015 = vmatpush.bf16.msra.mxu0 %v1528
    %4016 = vmatpush.bf16.msra.mxu0 %v1524
    %4017 = vmatpush.bf16.msra.mxu0 %v1520
    %4018 = vmatpush.bf16.msra.mxu0 %v1516
    %4019 = vmatpush.bf16.msra.mxu0 %v1512
    %4020 = vmatpush.bf16.msra.mxu0 %v1508
    %4021 = vmatpush.bf16.msra.mxu0 %v1504
    %4022 = vmatpush.bf16.msra.mxu0 %v1500
    %4023 = vmatmul.bf16.gmra.mxu0 %v3817
    %v4024 = vpop.f32.mrf.mxu0
    %v4025 = vadd.f32 %v4012, %v4024
    %v4026 = vpop.f32.mrf.mxu0
    %4027 = vdwg.mxu0
    %v4028 = vadd.f32 %v3947, %v1802
    %v4029 = vadd.f32 %v3973, %v1803
    %v4030 = vadd.f32 %v3999, %v1804
    %v4031 = vadd.f32 %v4025, %v1805
    %v4032 = vxor.u32 %v4028, 2147483648
    %v4033 = vxor.u32 %v4029, 2147483648
    %v4034 = vxor.u32 %v4030, 2147483648
    %v4035 = vmul.f32 %v4032, 1.442695
    %v4036 = vpow.pop %v4035
    %v4037 = vmul.f32 %v4033, 1.442695
    %v4038 = vpow.pop %v4037
    %v4039 = vmul.f32 %v4034, 1.442695
    %v4040 = vpow.pop %v4039
    %v4041 = vadd.f32 %v4036, 1.0
    %v4042 = vadd.f32 %v4038, 1.0
    %v4043 = vadd.f32 %v4040, 1.0
    %v4044 = vrcp.pop %v4041
    %v4045 = vmul.f32 %v4041, %v4044
    %v4046 = vsub.f32 1.0, %v4045
    %v4047 = vmul.f32 %v4044, %v4046
    %v4048 = vadd.f32 %v4044, %v4047
    %vm4049 = vweird.f32 %v4041
    %vm4050 = vweird.f32 %v4044
    %vm4051 = vmor %vm4049, %vm4050
    %v4052 = vsel %vm4051, %v4044, %v4048
    %v4053 = vand.u32 2147483647, %v4041
    %vm4054 = vcmp.eq.f32.partialorder %v4053, 8.507059e+37
    %v4055 = vand.u32 %v4041, 2147483648
    %v4056 = vor.u32 1.1754944e-38, %v4055
    %v4057 = vsel %vm4054, %v4056, %v4052
    %v4058 = vmul.f32 1.0, %v4057
    %v4059 = vrcp.pop %v4042
    %v4060 = vmul.f32 %v4042, %v4059
    %v4061 = vsub.f32 1.0, %v4060
    %v4062 = vmul.f32 %v4059, %v4061
    %v4063 = vadd.f32 %v4059, %v4062
    %vm4064 = vweird.f32 %v4042
    %vm4065 = vweird.f32 %v4059
    %vm4066 = vmor %vm4064, %vm4065
    %v4067 = vsel %vm4066, %v4059, %v4063
    %v4068 = vand.u32 2147483647, %v4042
    %vm4069 = vcmp.eq.f32.partialorder %v4068, 8.507059e+37
    %v4070 = vand.u32 %v4042, 2147483648
    %v4071 = vor.u32 1.1754944e-38, %v4070
    %v4072 = vsel %vm4069, %v4071, %v4067
    %v4073 = vmul.f32 1.0, %v4072
    %v4074 = vrcp.pop %v4043
    %v4075 = vmul.f32 %v4043, %v4074
    %v4076 = vsub.f32 1.0, %v4075
    %v4077 = vmul.f32 %v4074, %v4076
    %v4078 = vadd.f32 %v4074, %v4077
    %vm4079 = vweird.f32 %v4043
    %vm4080 = vweird.f32 %v4074
    %vm4081 = vmor %vm4079, %vm4080
    %v4082 = vsel %vm4081, %v4074, %v4078
    %v4083 = vand.u32 2147483647, %v4043
    %vm4084 = vcmp.eq.f32.partialorder %v4083, 8.507059e+37
    %v4085 = vand.u32 %v4043, 2147483648
    %v4086 = vor.u32 1.1754944e-38, %v4085
    %v4087 = vsel %vm4084, %v4086, %v4082
    %v4088 = vmul.f32 1.0, %v4087
    %v4089 = vtanh.pop %v4031
    %v4090 = vmul.f32 %v4073, %v3724
    %v4091 = vmul.f32 %v4058, %v4089
    %v4092 = vadd.f32 %v4090, %v4091
    %v4093 = vtanh.pop %v4092
    %v4094 = vmul.f32 %v4088, %v4093
    %v4099 = vrot.slane %v3843, 1
    %v4100 = vrot.slane %v3869, 1
    %v4101 = vrot.slane %v3895, 1
    %v4102 = vrot.slane %v3921, 1
    %v4107 = vadd.f32 %v604, %v4099
    %v4108 = vadd.f32 %v617, %v4100
    %v4109 = vadd.f32 %v630, %v4101
    %v4110 = vadd.f32 %v643, %v4102
    %v4111 = vxor.u32 %v4107, 2147483648
    %v4112 = vxor.u32 %v4108, 2147483648
    %v4113 = vxor.u32 %v4109, 2147483648
    %v4114 = vmul.f32 %v4111, 1.442695
    %v4115 = vpow.pop %v4114
    %v4116 = vmul.f32 %v4112, 1.442695
    %v4117 = vpow.pop %v4116
    %v4118 = vmul.f32 %v4113, 1.442695
    %v4119 = vpow.pop %v4118
    %v4120 = vadd.f32 %v4115, 1.0
    %v4121 = vadd.f32 %v4117, 1.0
    %v4122 = vadd.f32 %v4119, 1.0
    %v4123 = vrcp.pop %v4120
    %v4124 = vmul.f32 %v4120, %v4123
    %v4125 = vsub.f32 1.0, %v4124
    %v4126 = vmul.f32 %v4123, %v4125
    %v4127 = vadd.f32 %v4123, %v4126
    %vm4128 = vweird.f32 %v4120
    %vm4129 = vweird.f32 %v4123
    %vm4130 = vmor %vm4128, %vm4129
    %v4131 = vsel %vm4130, %v4123, %v4127
    %v4132 = vand.u32 2147483647, %v4120
    %vm4133 = vcmp.eq.f32.partialorder %v4132, 8.507059e+37
    %v4134 = vand.u32 %v4120, 2147483648
    %v4135 = vor.u32 1.1754944e-38, %v4134
    %v4136 = vsel %vm4133, %v4135, %v4131
    %v4137 = vmul.f32 1.0, %v4136
    %v4138 = vrcp.pop %v4121
    %v4139 = vmul.f32 %v4121, %v4138
    %v4140 = vsub.f32 1.0, %v4139
    %v4141 = vmul.f32 %v4138, %v4140
    %v4142 = vadd.f32 %v4138, %v4141
    %vm4143 = vweird.f32 %v4121
    %vm4144 = vweird.f32 %v4138
    %vm4145 = vmor %vm4143, %vm4144
    %v4146 = vsel %vm4145, %v4138, %v4142
    %v4147 = vand.u32 2147483647, %v4121
    %vm4148 = vcmp.eq.f32.partialorder %v4147, 8.507059e+37
    %v4149 = vand.u32 %v4121, 2147483648
    %v4150 = vor.u32 1.1754944e-38, %v4149
    %v4151 = vsel %vm4148, %v4150, %v4146
    %v4152 = vmul.f32 1.0, %v4151
    %v4153 = vrcp.pop %v4122
    %v4154 = vmul.f32 %v4122, %v4153
    %v4155 = vsub.f32 1.0, %v4154
    %v4156 = vmul.f32 %v4153, %v4155
    %v4157 = vadd.f32 %v4153, %v4156
    %vm4158 = vweird.f32 %v4122
    %vm4159 = vweird.f32 %v4153
    %vm4160 = vmor %vm4158, %vm4159
    %v4161 = vsel %vm4160, %v4153, %v4157
    %v4162 = vand.u32 2147483647, %v4122
    %vm4163 = vcmp.eq.f32.partialorder %v4162, 8.507059e+37
    %v4164 = vand.u32 %v4122, 2147483648
    %v4165 = vor.u32 1.1754944e-38, %v4164
    %v4166 = vsel %vm4163, %v4165, %v4161
    %v4167 = vmul.f32 1.0, %v4166
    %v4168 = vtanh.pop %v4110
    %v4170 = vrot.slane %v3806, 7
    %v4172 = vmul.f32 %v4152, %v4170
    %v4173 = vmul.f32 %v4137, %v4168
    %v4174 = vadd.f32 %v4172, %v4173
    %v4175 = vtanh.pop %v4174
    %v4176 = vmul.f32 %v4167, %v4175
    %v4178 = vrot.slane %v4094, 1
    %v4180 = vpack.c.bf16 %v4176, %v4176
    %v4181 = vpack.c.bf16 %v4178, %v4178
    %v4183 = vshrl.u32 %v4180, 16
    %v4185 = vrot.slane %v4183, 3
    %v4187 = vshrl.u32 %v4181, 16
    %v4189 = vrot.slane %v4187, 3
    %4192 = vmatpush.bf16.msra.mxu0 %v1493
    %4193 = vmatpush.bf16.msra.mxu0 %v1489
    %4194 = vmatpush.bf16.msra.mxu0 %v1485
    %4195 = vmatpush.bf16.msra.mxu0 %v1481
    %4196 = vmatpush.bf16.msra.mxu0 %v1477
    %4197 = vmatpush.bf16.msra.mxu0 %v1473
    %4198 = vmatpush.bf16.msra.mxu0 %v1469
    %4199 = vmatpush.bf16.msra.mxu0 %v1465
    %4200 = vmatmul.bf16.gmra.mxu0 %v4185
    %v4201 = vpop.f32.mrf.mxu0
    %v4202 = vadd.f32 0.0, %v4201
    %v4203 = vpop.f32.mrf.mxu0
    %4204 = vdwg.mxu0
    %4205 = vmatpush.bf16.msra.mxu0 %v1525
    %4206 = vmatpush.bf16.msra.mxu0 %v1521
    %4207 = vmatpush.bf16.msra.mxu0 %v1517
    %4208 = vmatpush.bf16.msra.mxu0 %v1513
    %4209 = vmatpush.bf16.msra.mxu0 %v1509
    %4210 = vmatpush.bf16.msra.mxu0 %v1505
    %4211 = vmatpush.bf16.msra.mxu0 %v1501
    %4212 = vmatpush.bf16.msra.mxu0 %v1497
    %4213 = vmatmul.bf16.gmra.mxu0 %v4189
    %v4214 = vpop.f32.mrf.mxu0
    %v4215 = vadd.f32 %v4202, %v4214
    %v4216 = vpop.f32.mrf.mxu0
    %4217 = vdwg.mxu0
    %4218 = vmatpush.bf16.msra.mxu0 %v1494
    %4219 = vmatpush.bf16.msra.mxu0 %v1490
    %4220 = vmatpush.bf16.msra.mxu0 %v1486
    %4221 = vmatpush.bf16.msra.mxu0 %v1482
    %4222 = vmatpush.bf16.msra.mxu0 %v1478
    %4223 = vmatpush.bf16.msra.mxu0 %v1474
    %4224 = vmatpush.bf16.msra.mxu0 %v1470
    %4225 = vmatpush.bf16.msra.mxu0 %v1466
    %4226 = vmatmul.bf16.gmra.mxu0 %v4185
    %v4227 = vpop.f32.mrf.mxu0
    %v4228 = vadd.f32 0.0, %v4227
    %v4229 = vpop.f32.mrf.mxu0
    %4230 = vdwg.mxu0
    %4231 = vmatpush.bf16.msra.mxu0 %v1526
    %4232 = vmatpush.bf16.msra.mxu0 %v1522
    %4233 = vmatpush.bf16.msra.mxu0 %v1518
    %4234 = vmatpush.bf16.msra.mxu0 %v1514
    %4235 = vmatpush.bf16.msra.mxu0 %v1510
    %4236 = vmatpush.bf16.msra.mxu0 %v1506
    %4237 = vmatpush.bf16.msra.mxu0 %v1502
    %4238 = vmatpush.bf16.msra.mxu0 %v1498
    %4239 = vmatmul.bf16.gmra.mxu0 %v4189
    %v4240 = vpop.f32.mrf.mxu0
    %v4241 = vadd.f32 %v4228, %v4240
    %v4242 = vpop.f32.mrf.mxu0
    %4243 = vdwg.mxu0
    %4244 = vmatpush.bf16.msra.mxu0 %v1495
    %4245 = vmatpush.bf16.msra.mxu0 %v1491
    %4246 = vmatpush.bf16.msra.mxu0 %v1487
    %4247 = vmatpush.bf16.msra.mxu0 %v1483
    %4248 = vmatpush.bf16.msra.mxu0 %v1479
    %4249 = vmatpush.bf16.msra.mxu0 %v1475
    %4250 = vmatpush.bf16.msra.mxu0 %v1471
    %4251 = vmatpush.bf16.msra.mxu0 %v1467
    %4252 = vmatmul.bf16.gmra.mxu0 %v4185
    %v4253 = vpop.f32.mrf.mxu0
    %v4254 = vadd.f32 0.0, %v4253
    %v4255 = vpop.f32.mrf.mxu0
    %4256 = vdwg.mxu0
    %4257 = vmatpush.bf16.msra.mxu0 %v1527
    %4258 = vmatpush.bf16.msra.mxu0 %v1523
    %4259 = vmatpush.bf16.msra.mxu0 %v1519
    %4260 = vmatpush.bf16.msra.mxu0 %v1515
    %4261 = vmatpush.bf16.msra.mxu0 %v1511
    %4262 = vmatpush.bf16.msra.mxu0 %v1507
    %4263 = vmatpush.bf16.msra.mxu0 %v1503
    %4264 = vmatpush.bf16.msra.mxu0 %v1499
    %4265 = vmatmul.bf16.gmra.mxu0 %v4189
    %v4266 = vpop.f32.mrf.mxu0
    %v4267 = vadd.f32 %v4254, %v4266
    %v4268 = vpop.f32.mrf.mxu0
    %4269 = vdwg.mxu0
    %4270 = vmatpush.bf16.msra.mxu0 %v1496
    %4271 = vmatpush.bf16.msra.mxu0 %v1492
    %4272 = vmatpush.bf16.msra.mxu0 %v1488
    %4273 = vmatpush.bf16.msra.mxu0 %v1484
    %4274 = vmatpush.bf16.msra.mxu0 %v1480
    %4275 = vmatpush.bf16.msra.mxu0 %v1476
    %4276 = vmatpush.bf16.msra.mxu0 %v1472
    %4277 = vmatpush.bf16.msra.mxu0 %v1468
    %4278 = vmatmul.bf16.gmra.mxu0 %v4185
    %v4279 = vpop.f32.mrf.mxu0
    %v4280 = vadd.f32 0.0, %v4279
    %v4281 = vpop.f32.mrf.mxu0
    %4282 = vdwg.mxu0
    %4283 = vmatpush.bf16.msra.mxu0 %v1528
    %4284 = vmatpush.bf16.msra.mxu0 %v1524
    %4285 = vmatpush.bf16.msra.mxu0 %v1520
    %4286 = vmatpush.bf16.msra.mxu0 %v1516
    %4287 = vmatpush.bf16.msra.mxu0 %v1512
    %4288 = vmatpush.bf16.msra.mxu0 %v1508
    %4289 = vmatpush.bf16.msra.mxu0 %v1504
    %4290 = vmatpush.bf16.msra.mxu0 %v1500
    %4291 = vmatmul.bf16.gmra.mxu0 %v4189
    %v4292 = vpop.f32.mrf.mxu0
    %v4293 = vadd.f32 %v4280, %v4292
    %v4294 = vpop.f32.mrf.mxu0
    %4295 = vdwg.mxu0
    %v4296 = vadd.f32 %v4215, %v1802
    %v4297 = vadd.f32 %v4241, %v1803
    %v4298 = vadd.f32 %v4267, %v1804
    %v4299 = vadd.f32 %v4293, %v1805
    %v4300 = vxor.u32 %v4296, 2147483648
    %v4301 = vxor.u32 %v4297, 2147483648
    %v4302 = vxor.u32 %v4298, 2147483648
    %v4303 = vmul.f32 %v4300, 1.442695
    %v4304 = vpow.pop %v4303
    %v4305 = vmul.f32 %v4301, 1.442695
    %v4306 = vpow.pop %v4305
    %v4307 = vmul.f32 %v4302, 1.442695
    %v4308 = vpow.pop %v4307
    %v4309 = vadd.f32 %v4304, 1.0
    %v4310 = vadd.f32 %v4306, 1.0
    %v4311 = vadd.f32 %v4308, 1.0
    %v4312 = vrcp.pop %v4309
    %v4313 = vmul.f32 %v4309, %v4312
    %v4314 = vsub.f32 1.0, %v4313
    %v4315 = vmul.f32 %v4312, %v4314
    %v4316 = vadd.f32 %v4312, %v4315
    %vm4317 = vweird.f32 %v4309
    %vm4318 = vweird.f32 %v4312
    %vm4319 = vmor %vm4317, %vm4318
    %v4320 = vsel %vm4319, %v4312, %v4316
    %v4321 = vand.u32 2147483647, %v4309
    %vm4322 = vcmp.eq.f32.partialorder %v4321, 8.507059e+37
    %v4323 = vand.u32 %v4309, 2147483648
    %v4324 = vor.u32 1.1754944e-38, %v4323
    %v4325 = vsel %vm4322, %v4324, %v4320
    %v4326 = vmul.f32 1.0, %v4325
    %v4327 = vrcp.pop %v4310
    %v4328 = vmul.f32 %v4310, %v4327
    %v4329 = vsub.f32 1.0, %v4328
    %v4330 = vmul.f32 %v4327, %v4329
    %v4331 = vadd.f32 %v4327, %v4330
    %vm4332 = vweird.f32 %v4310
    %vm4333 = vweird.f32 %v4327
    %vm4334 = vmor %vm4332, %vm4333
    %v4335 = vsel %vm4334, %v4327, %v4331
    %v4336 = vand.u32 2147483647, %v4310
    %vm4337 = vcmp.eq.f32.partialorder %v4336, 8.507059e+37
    %v4338 = vand.u32 %v4310, 2147483648
    %v4339 = vor.u32 1.1754944e-38, %v4338
    %v4340 = vsel %vm4337, %v4339, %v4335
    %v4341 = vmul.f32 1.0, %v4340
    %v4342 = vrcp.pop %v4311
    %v4343 = vmul.f32 %v4311, %v4342
    %v4344 = vsub.f32 1.0, %v4343
    %v4345 = vmul.f32 %v4342, %v4344
    %v4346 = vadd.f32 %v4342, %v4345
    %vm4347 = vweird.f32 %v4311
    %vm4348 = vweird.f32 %v4342
    %vm4349 = vmor %vm4347, %vm4348
    %v4350 = vsel %vm4349, %v4342, %v4346
    %v4351 = vand.u32 2147483647, %v4311
    %vm4352 = vcmp.eq.f32.partialorder %v4351, 8.507059e+37
    %v4353 = vand.u32 %v4311, 2147483648
    %v4354 = vor.u32 1.1754944e-38, %v4353
    %v4355 = vsel %vm4352, %v4354, %v4350
    %v4356 = vmul.f32 1.0, %v4355
    %v4357 = vtanh.pop %v4299
    %v4358 = vmul.f32 %v4341, %v4092
    %v4359 = vmul.f32 %v4326, %v4357
    %v4360 = vadd.f32 %v4358, %v4359
    %v4361 = vtanh.pop %v4360
    %v4362 = vmul.f32 %v4356, %v4361
    %v4364 = vrot.slane %v4176, 7
    %v4367 = vrot.slane %v4362, 7
    %v4370 = vrot.slane %v4174, 5
    %v4373 = vrot.slane %v4360, 5
    %vm4375 = vcmask 1040384
    %v4376 = vsel %vm4375, %v4364, %v4367
    %vm4377 = vcmask 1041408
    %v4378 = vsel %vm4377, %v4376, %v4370
    %vm4379 = vcmask 1042432
    %v4380 = vsel %vm4379, %v4378, %v4373
    %4381 = vst [vmem:[#allocation23] sm:$0xf] %v4380
    %s4382 = smul.u32 4, 32
    %s4383 = smul.u32 %s4382, 1
    %s4384 = sshll.u32 %s4383, 4
    %4385 = dma.done [#allocation8], %s4384
    %s4386 = sshll.u32 %s4383, 4
    %4387 = dma.done %s294, %s4386
    %s4388 = smul.u32 8, 1
    %s4389 = smul.u32 %s4388, 2
    %s4390 = sshll.u32 %s4389, 4
    %4391 = dma.done %s308, %s4390
    %s4392 = smul.u32 4, 16
    %s4393 = smul.u32 %s4392, 3
    %s4394 = sshll.u32 %s4393, 4
    %4395 = dma.done %s322, %s4394
    %v4396 = vld [vmem:[%s9] sm:$0x1]
    %v4397 = vld [vmem:[%s10] sm:$0x1]
    %v4398 = vrot.slane %v4362, 1
    %v4400 = vpack.c.bf16 %v4398, %v4398
    %v4401 = vld [vmem:[#allocation3] sm:$0xf]
    %v4402 = vld [vmem:[#allocation3 + $0x4] sm:$0xf]
    %v4403 = vld [vmem:[#allocation3 + $0x8] sm:$0xf]
    %v4404 = vld [vmem:[#allocation3 + $0xc] sm:$0xf]
    %v4405 = vld [vmem:[#allocation3 + $0x10] sm:$0xf]
    %v4406 = vld [vmem:[#allocation3 + $0x14] sm:$0xf]
    %v4407 = vld [vmem:[#allocation3 + $0x18] sm:$0xf]
    %v4408 = vld [vmem:[#allocation3 + $0x1c] sm:$0xf]
    %v4409 = vld [vmem:[#allocation3 + $0x20] sm:$0xf]
    %v4410 = vld [vmem:[#allocation3 + $0x24] sm:$0xf]
    %v4411 = vld [vmem:[#allocation3 + $0x28] sm:$0xf]
    %v4412 = vld [vmem:[#allocation3 + $0x2c] sm:$0xf]
    %v4413 = vld [vmem:[#allocation3 + $0x30] sm:$0xf]
    %v4414 = vld [vmem:[#allocation3 + $0x34] sm:$0xf]
    %v4415 = vld [vmem:[#allocation3 + $0x38] sm:$0xf]
    %v4416 = vld [vmem:[#allocation3 + $0x3c] sm:$0xf]
    %v4417 = vld [vmem:[#allocation3 + $0x40] sm:$0xf]
    %v4418 = vld [vmem:[#allocation3 + $0x44] sm:$0xf]
    %v4419 = vld [vmem:[#allocation3 + $0x48] sm:$0xf]
    %v4420 = vld [vmem:[#allocation3 + $0x4c] sm:$0xf]
    %v4421 = vld [vmem:[#allocation3 + $0x50] sm:$0xf]
    %v4422 = vld [vmem:[#allocation3 + $0x54] sm:$0xf]
    %v4423 = vld [vmem:[#allocation3 + $0x58] sm:$0xf]
    %v4424 = vld [vmem:[#allocation3 + $0x5c] sm:$0xf]
    %v4425 = vld [vmem:[#allocation3 + $0x60] sm:$0xf]
    %v4426 = vld [vmem:[#allocation3 + $0x64] sm:$0xf]
    %v4427 = vld [vmem:[#allocation3 + $0x68] sm:$0xf]
    %v4428 = vld [vmem:[#allocation3 + $0x6c] sm:$0xf]
    %v4429 = vld [vmem:[#allocation3 + $0x70] sm:$0xf]
    %v4430 = vld [vmem:[#allocation3 + $0x74] sm:$0xf]
    %v4431 = vld [vmem:[#allocation3 + $0x78] sm:$0xf]
    %v4432 = vld [vmem:[#allocation3 + $0x7c] sm:$0xf]
    %v4434 = vshrl.u32 %v4400, 16
    %v4436 = vrot.slane %v4434, 3
    %v4470 = vunpack.c.l.b16 %v4401
    %v4471 = vunpack.c.l.b16 %v4402
    %v4472 = vunpack.c.l.b16 %v4403
    %v4473 = vunpack.c.l.b16 %v4404
    %v4474 = vunpack.c.l.b16 %v4405
    %v4475 = vunpack.c.l.b16 %v4406
    %v4476 = vunpack.c.l.b16 %v4407
    %v4477 = vunpack.c.l.b16 %v4408
    %v4478 = vunpack.c.l.b16 %v4409
    %v4479 = vunpack.c.l.b16 %v4410
    %v4480 = vunpack.c.l.b16 %v4411
    %v4481 = vunpack.c.l.b16 %v4412
    %v4482 = vunpack.c.l.b16 %v4413
    %v4483 = vunpack.c.l.b16 %v4414
    %v4484 = vunpack.c.l.b16 %v4415
    %v4485 = vunpack.c.l.b16 %v4416
    %v4486 = vunpack.c.l.b16 %v4417
    %v4487 = vunpack.c.l.b16 %v4418
    %v4488 = vunpack.c.l.b16 %v4419
    %v4489 = vunpack.c.l.b16 %v4420
    %v4490 = vunpack.c.l.b16 %v4421
    %v4491 = vunpack.c.l.b16 %v4422
    %v4492 = vunpack.c.l.b16 %v4423
    %v4493 = vunpack.c.l.b16 %v4424
    %v4494 = vunpack.c.l.b16 %v4425
    %v4495 = vunpack.c.l.b16 %v4426
    %v4496 = vunpack.c.l.b16 %v4427
    %v4497 = vunpack.c.l.b16 %v4428
    %v4498 = vunpack.c.l.b16 %v4429
    %v4499 = vunpack.c.l.b16 %v4430
    %v4500 = vunpack.c.l.b16 %v4431
    %v4501 = vunpack.c.l.b16 %v4432
    %v4502 = vpack.c.b16 %v4471, %v4470
    %v4503 = vpack.c.b16 %v4473, %v4472
    %v4504 = vpack.c.b16 %v4475, %v4474
    %v4505 = vpack.c.b16 %v4477, %v4476
    %v4506 = vpack.c.b16 %v4479, %v4478
    %v4507 = vpack.c.b16 %v4481, %v4480
    %v4508 = vpack.c.b16 %v4483, %v4482
    %v4509 = vpack.c.b16 %v4485, %v4484
    %v4510 = vpack.c.b16 %v4487, %v4486
    %v4511 = vpack.c.b16 %v4489, %v4488
    %v4512 = vpack.c.b16 %v4491, %v4490
    %v4513 = vpack.c.b16 %v4493, %v4492
    %v4514 = vpack.c.b16 %v4495, %v4494
    %v4515 = vpack.c.b16 %v4497, %v4496
    %v4516 = vpack.c.b16 %v4499, %v4498
    %v4517 = vpack.c.b16 %v4501, %v4500
    %4534 = vmatpush.bf16.msra.mxu0 %v4509
    %4535 = vmatpush.bf16.msra.mxu0 %v4508
    %4536 = vmatpush.bf16.msra.mxu0 %v4507
    %4537 = vmatpush.bf16.msra.mxu0 %v4506
    %4538 = vmatpush.bf16.msra.mxu0 %v4505
    %4539 = vmatpush.bf16.msra.mxu0 %v4504
    %4540 = vmatpush.bf16.msra.mxu0 %v4503
    %4541 = vmatpush.bf16.msra.mxu0 %v4502
    %4542 = vmatmul.bf16.gmra.mxu0 %v4185
    %v4543 = vpop.f32.mrf.mxu0
    %v4544 = vadd.f32 0.0, %v4543
    %v4545 = vpop.f32.mrf.mxu0
    %4546 = vdwg.mxu0
    %4547 = vmatpush.bf16.msra.mxu0 %v4517
    %4548 = vmatpush.bf16.msra.mxu0 %v4516
    %4549 = vmatpush.bf16.msra.mxu0 %v4515
    %4550 = vmatpush.bf16.msra.mxu0 %v4514
    %4551 = vmatpush.bf16.msra.mxu0 %v4513
    %4552 = vmatpush.bf16.msra.mxu0 %v4512
    %4553 = vmatpush.bf16.msra.mxu0 %v4511
    %4554 = vmatpush.bf16.msra.mxu0 %v4510
    %4555 = vmatmul.bf16.gmra.mxu0 %v4436
    %v4556 = vpop.f32.mrf.mxu0
    %v4557 = vadd.f32 %v4544, %v4556
    %v4558 = vpop.f32.mrf.mxu0
    %4559 = vdwg.mxu0
    %v4560 = vsel %vm4375, %v4557, 0.0
    %4561 = vadd.xlane.f32.xlu0 %v4560
    %v4562 = vpop.xlane.xlu0 %4561
    %v4563 = vmul.f32 %v4562, %v364
    %v4564 = vsub.f32 %v4557, %v4563
    %v4565 = vmul.f32 %v4564, %v4564
    %v4566 = vsel %vm4375, %v4565, 0.0
    %4567 = vadd.xlane.f32.xlu0 %v4566
    %v4568 = vpop.xlane.xlu0 %4567
    %v4569 = vmul.f32 %v4568, %v364
    %v4570 = vadd.f32 %v4569, 1e-05
    %v4571 = vrsqrt.pop %v4570
    %v4572 = vmul.f32 %v4571, %v4570
    %v4573 = vmul.f32 %v4572, %v4571
    %v4574 = vmul.f32 0.5, %v4573
    %v4575 = vsub.f32 1.5, %v4574
    %v4576 = vmul.f32 %v4571, %v4575
    %vm4577 = vweird.f32 %v4570
    %vm4578 = vweird.f32 %v4571
    %vm4579 = vmor %vm4577, %vm4578
    %v4580 = vsel %vm4579, %v4571, %v4576
    %v4581 = vmul.f32 %v4564, %v4580
    %v4582 = vmul.f32 %v4581, %v4396
    %v4583 = vadd.f32 %v4582, %v4397
    %v4584 = vld [vmem:[#allocation5] sm:$0xff]
    %v4585 = vld [vmem:[#allocation5 + $0x8] sm:$0xff]
    %v4586 = vpack.c.bf16 %v4584, %v4584
    %v4587 = vpack.c.bf16 %v4585, %v4585
    %v4588 = vld [vmem:[#allocation4] sm:$0xf]
    %v4589 = vld [vmem:[#allocation4 + $0x4] sm:$0xf]
    %v4590 = vld [vmem:[#allocation4 + $0x8] sm:$0xf]
    %v4591 = vld [vmem:[#allocation4 + $0xc] sm:$0xf]
    %v4592 = vld [vmem:[#allocation4 + $0x10] sm:$0xf]
    %v4593 = vld [vmem:[#allocation4 + $0x14] sm:$0xf]
    %v4594 = vld [vmem:[#allocation4 + $0x18] sm:$0xf]
    %v4595 = vld [vmem:[#allocation4 + $0x1c] sm:$0xf]
    %v4596 = vld [vmem:[#allocation4 + $0x20] sm:$0xf]
    %v4597 = vld [vmem:[#allocation4 + $0x24] sm:$0xf]
    %v4598 = vld [vmem:[#allocation4 + $0x28] sm:$0xf]
    %v4599 = vld [vmem:[#allocation4 + $0x2c] sm:$0xf]
    %v4600 = vld [vmem:[#allocation4 + $0x30] sm:$0xf]
    %v4601 = vld [vmem:[#allocation4 + $0x34] sm:$0xf]
    %v4602 = vld [vmem:[#allocation4 + $0x38] sm:$0xf]
    %v4603 = vld [vmem:[#allocation4 + $0x3c] sm:$0xf]
    %v4604 = vld [vmem:[#allocation4 + $0x40] sm:$0xf]
    %v4605 = vld [vmem:[#allocation4 + $0x44] sm:$0xf]
    %v4606 = vld [vmem:[#allocation4 + $0x48] sm:$0xf]
    %v4607 = vld [vmem:[#allocation4 + $0x4c] sm:$0xf]
    %v4608 = vld [vmem:[#allocation4 + $0x50] sm:$0xf]
    %v4609 = vld [vmem:[#allocation4 + $0x54] sm:$0xf]
    %v4610 = vld [vmem:[#allocation4 + $0x58] sm:$0xf]
    %v4611 = vld [vmem:[#allocation4 + $0x5c] sm:$0xf]
    %v4612 = vld [vmem:[#allocation4 + $0x60] sm:$0xf]
    %v4613 = vld [vmem:[#allocation4 + $0x64] sm:$0xf]
    %v4614 = vld [vmem:[#allocation4 + $0x68] sm:$0xf]
    %v4615 = vld [vmem:[#allocation4 + $0x6c] sm:$0xf]
    %v4616 = vld [vmem:[#allocation4 + $0x70] sm:$0xf]
    %v4617 = vld [vmem:[#allocation4 + $0x74] sm:$0xf]
    %v4618 = vld [vmem:[#allocation4 + $0x78] sm:$0xf]
    %v4619 = vld [vmem:[#allocation4 + $0x7c] sm:$0xf]
    %v4652 = vunpack.c.l.b16 %v4588
    %v4653 = vunpack.c.l.b16 %v4589
    %v4654 = vunpack.c.l.b16 %v4590
    %v4655 = vunpack.c.l.b16 %v4591
    %v4656 = vunpack.c.l.b16 %v4592
    %v4657 = vunpack.c.l.b16 %v4593
    %v4658 = vunpack.c.l.b16 %v4594
    %v4659 = vunpack.c.l.b16 %v4595
    %v4660 = vunpack.c.l.b16 %v4596
    %v4661 = vunpack.c.l.b16 %v4597
    %v4662 = vunpack.c.l.b16 %v4598
    %v4663 = vunpack.c.l.b16 %v4599
    %v4664 = vunpack.c.l.b16 %v4600
    %v4665 = vunpack.c.l.b16 %v4601
    %v4666 = vunpack.c.l.b16 %v4602
    %v4667 = vunpack.c.l.b16 %v4603
    %v4668 = vunpack.c.l.b16 %v4604
    %v4669 = vunpack.c.l.b16 %v4605
    %v4670 = vunpack.c.l.b16 %v4606
    %v4671 = vunpack.c.l.b16 %v4607
    %v4672 = vunpack.c.l.b16 %v4608
    %v4673 = vunpack.c.l.b16 %v4609
    %v4674 = vunpack.c.l.b16 %v4610
    %v4675 = vunpack.c.l.b16 %v4611
    %v4676 = vunpack.c.l.b16 %v4612
    %v4677 = vunpack.c.l.b16 %v4613
    %v4678 = vunpack.c.l.b16 %v4614
    %v4679 = vunpack.c.l.b16 %v4615
    %v4680 = vunpack.c.l.b16 %v4616
    %v4681 = vunpack.c.l.b16 %v4617
    %v4682 = vunpack.c.l.b16 %v4618
    %v4683 = vunpack.c.l.b16 %v4619
    %v4684 = vpack.c.b16 %v4653, %v4652
    %v4685 = vpack.c.b16 %v4655, %v4654
    %v4686 = vpack.c.b16 %v4657, %v4656
    %v4687 = vpack.c.b16 %v4659, %v4658
    %v4688 = vpack.c.b16 %v4661, %v4660
    %v4689 = vpack.c.b16 %v4663, %v4662
    %v4690 = vpack.c.b16 %v4665, %v4664
    %v4691 = vpack.c.b16 %v4667, %v4666
    %v4692 = vpack.c.b16 %v4669, %v4668
    %v4693 = vpack.c.b16 %v4671, %v4670
    %v4694 = vpack.c.b16 %v4673, %v4672
    %v4695 = vpack.c.b16 %v4675, %v4674
    %v4696 = vpack.c.b16 %v4677, %v4676
    %v4697 = vpack.c.b16 %v4679, %v4678
    %v4698 = vpack.c.b16 %v4681, %v4680
    %v4699 = vpack.c.b16 %v4683, %v4682
    %4716 = vmatpush.bf16.msra.mxu0 %v4691
    %4717 = vmatpush.bf16.msra.mxu0 %v4690
    %4718 = vmatpush.bf16.msra.mxu0 %v4689
    %4719 = vmatpush.bf16.msra.mxu0 %v4688
    %4720 = vmatpush.bf16.msra.mxu0 %v4687
    %4721 = vmatpush.bf16.msra.mxu0 %v4686
    %4722 = vmatpush.bf16.msra.mxu0 %v4685
    %4723 = vmatpush.bf16.msra.mxu0 %v4684
    %4724 = vmatmul.bf16.gmra.mxu0 %v4586
    %v4725 = vpop.f32.mrf.mxu0
    %v4726 = vadd.f32 0.0, %v4725
    %v4727 = vpop.f32.mrf.mxu0
    %4728 = vdwg.mxu0
    %4729 = vmatpush.bf16.msra.mxu0 %v4699
    %4730 = vmatpush.bf16.msra.mxu0 %v4698
    %4731 = vmatpush.bf16.msra.mxu0 %v4697
    %4732 = vmatpush.bf16.msra.mxu0 %v4696
    %4733 = vmatpush.bf16.msra.mxu0 %v4695
    %4734 = vmatpush.bf16.msra.mxu0 %v4694
    %4735 = vmatpush.bf16.msra.mxu0 %v4693
    %4736 = vmatpush.bf16.msra.mxu0 %v4692
    %4737 = vmatmul.bf16.gmra.mxu0 %v4587
    %v4738 = vpop.f32.mrf.mxu0
    %v4739 = vadd.f32 %v4726, %v4738
    %v4740 = vpop.f32.mrf.mxu0
    %4741 = vdwg.mxu0
    %4742 = vadd.xlane.f32.xlu0 %v4739
    %v4743 = vpop.xlane.xlu0 %4742
    %v4744 = vmul.f32 %v4743, %v364
    %v4745 = vsub.f32 %v4739, %v4744
    %v4746 = vmul.f32 %v4745, %v4745
    %4747 = vadd.xlane.f32.xlu0 %v4746
    %v4748 = vpop.xlane.xlu0 %4747
    %v4749 = vmul.f32 %v4748, %v364
    %v4750 = vadd.f32 %v4749, 1e-05
    %v4751 = vrsqrt.pop %v4750
    %v4752 = vmul.f32 %v4751, %v4750
    %v4753 = vmul.f32 %v4752, %v4751
    %v4754 = vmul.f32 0.5, %v4753
    %v4755 = vsub.f32 1.5, %v4754
    %v4756 = vmul.f32 %v4751, %v4755
    %vm4757 = vweird.f32 %v4750
    %vm4758 = vweird.f32 %v4751
    %vm4759 = vmor %vm4757, %vm4758
    %v4760 = vsel %vm4759, %v4751, %v4756
    %v4761 = vmul.f32 %v4745, %v4760
    %v4763 = vperm.slane %v4396, 0
    %v4765 = vmul.f32 %v4761, %v4763
    %v4767 = vperm.slane %v4397, 0
    %v4769 = vadd.f32 %v4765, %v4767
    %v4770 = vmul.f32 %v4583, 0.088388346
    %4771 = vmatpush.xpose.msra.mxu0 0.0
    %4772 = vmatpush.xpose.msra.mxu0 0.0
    %4773 = vmatpush.xpose.msra.mxu0 0.0
    %4774 = vmatpush.xpose.msra.mxu0 0.0
    %4775 = vmatpush.xpose.msra.mxu0 0.0
    %4776 = vmatpush.xpose.msra.mxu0 0.0
    %4777 = vmatpush.xpose.msra.mxu0 0.0
    %4778 = vmatpush.xpose.msra.mxu0 0.0
    %4779 = vmatpush.xpose.msra.mxu0 0.0
    %4780 = vmatpush.xpose.msra.mxu0 0.0
    %4781 = vmatpush.xpose.msra.mxu0 0.0
    %4782 = vmatpush.xpose.msra.mxu0 0.0
    %4783 = vmatpush.xpose.msra.mxu0 0.0
    %4784 = vmatpush.xpose.msra.mxu0 0.0
    %4785 = vmatpush.xpose.msra.mxu0 0.0
    %4786 = vmatpush.xpose.msra.mxu0 %v4769
    %4787 = vmatmul.f32.gmra.mxu0 %v4770
    %v4788 = vpop.f32.mrf.mxu0
    %v4789 = vadd.f32 0.0, %v4788
    %4790 = vdwg.mxu0
    %vm4791 = vcmask 57344
    %v4792 = vsel %vm4791, %v4789, -inf
    %4793 = vmax.xlane.f32.xlu0 %v4792
    %v4794 = vpop.xlane.xlu0 %4793
    %v4795 = vsub.f32 %v4789, %v4794
    %v4796 = vmul.f32 %v4795, 1.442695
    %v4797 = vpow.pop %v4796
    %v4798 = vsel %vm4791, %v4797, 0.0
    %4799 = vadd.xlane.f32.xlu0 %v4798
    %v4800 = vpop.xlane.xlu0 %4799
    %v4801 = vrcp.pop %v4800
    %v4802 = vmul.f32 %v4800, %v4801
    %v4803 = vsub.f32 1.0, %v4802
    %v4804 = vmul.f32 %v4801, %v4803
    %v4805 = vadd.f32 %v4801, %v4804
    %vm4806 = vweird.f32 %v4800
    %vm4807 = vweird.f32 %v4801
    %vm4808 = vmor %vm4806, %vm4807
    %v4809 = vsel %vm4808, %v4801, %v4805
    %v4810 = vand.u32 2147483647, %v4800
    %vm4811 = vcmp.eq.f32.partialorder %v4810, 8.507059e+37
    %v4812 = vand.u32 %v4800, 2147483648
    %v4813 = vor.u32 1.1754944e-38, %v4812
    %v4814 = vsel %vm4811, %v4813, %v4809
    %v4815 = vmul.f32 %v4797, %v4814
    %vm4816 = vcmask 64512
    %v4817 = vsel %vm4816, %v4815, 0.0
    %4818 = vst [vmem:[#allocation25] sm:$0x1] %v4817
    %v4820 = vsel %vm4816, %v4815, 0
    %4822 = vmatpush.msra.mxu0 0.0
    %4823 = vmatpush.msra.mxu0 0.0
    %4824 = vmatpush.msra.mxu0 0.0
    %4825 = vmatpush.msra.mxu0 0.0
    %4826 = vmatpush.msra.mxu0 0.0
    %4827 = vmatpush.msra.mxu0 0.0
    %4828 = vmatpush.msra.mxu0 0.0
    %4829 = vmatpush.msra.mxu0 0.0
    %4830 = vmatpush.msra.mxu0 0.0
    %4831 = vmatpush.msra.mxu0 0.0
    %4832 = vmatpush.msra.mxu0 0.0
    %4833 = vmatpush.msra.mxu0 0.0
    %4834 = vmatpush.msra.mxu0 0.0
    %4835 = vmatpush.msra.mxu0 0.0
    %4836 = vmatpush.msra.mxu0 0.0
    %4837 = vmatpush.msra.mxu0 %v4769
    %4838 = vmatmul.f32.gmra.mxu0 %v4820
    %v4839 = vpop.f32.mrf.mxu0
    %v4840 = vadd.f32 0.0, %v4839
    %4841 = vdwg.mxu0
    %v4842 = vpack.c.bf16 %v4840, %v4840
    %v4843 = vld [vmem:[#allocation6] sm:$0xff]
    %v4844 = vld [vmem:[#allocation6 + $0x8] sm:$0xf]
    %v4845 = vld [vmem:[#allocation6 + $0xc] sm:$0xff]
    %v4846 = vld [vmem:[#allocation6 + $0x14] sm:$0xf]
    %v4847 = vld [vmem:[#allocation6 + $0x18] sm:$0xff]
    %v4848 = vld [vmem:[#allocation6 + $0x20] sm:$0xf]
    %v4849 = vld [vmem:[#allocation6 + $0x24] sm:$0xff]
    %v4850 = vld [vmem:[#allocation6 + $0x2c] sm:$0xf]
    %v4851 = vld [vmem:[#allocation6 + $0x30] sm:$0xff]
    %v4852 = vld [vmem:[#allocation6 + $0x38] sm:$0xf]
    %v4853 = vld [vmem:[#allocation6 + $0x3c] sm:$0xff]
    %v4854 = vld [vmem:[#allocation6 + $0x44] sm:$0xf]
    %v4855 = vld [vmem:[#allocation6 + $0x48] sm:$0xff]
    %v4856 = vld [vmem:[#allocation6 + $0x50] sm:$0xf]
    %v4857 = vld [vmem:[#allocation6 + $0x54] sm:$0xff]
    %v4858 = vld [vmem:[#allocation6 + $0x5c] sm:$0xf]
    %v4859 = vld [vmem:[#allocation6 + $0x60] sm:$0xff]
    %v4860 = vld [vmem:[#allocation6 + $0x68] sm:$0xf]
    %v4861 = vld [vmem:[#allocation6 + $0x6c] sm:$0xff]
    %v4862 = vld [vmem:[#allocation6 + $0x74] sm:$0xf]
    %v4863 = vld [vmem:[#allocation6 + $0x78] sm:$0xff]
    %v4864 = vld [vmem:[#allocation6 + $0x80] sm:$0xf]
    %v4865 = vld [vmem:[#allocation6 + $0x84] sm:$0xff]
    %v4866 = vld [vmem:[#allocation6 + $0x8c] sm:$0xf]
    %v4867 = vld [vmem:[#allocation6 + $0x90] sm:$0xff]
    %v4868 = vld [vmem:[#allocation6 + $0x98] sm:$0xf]
    %v4869 = vld [vmem:[#allocation6 + $0x9c] sm:$0xff]
    %v4870 = vld [vmem:[#allocation6 + $0xa4] sm:$0xf]
    %v4871 = vld [vmem:[#allocation6 + $0xa8] sm:$0xff]
    %v4872 = vld [vmem:[#allocation6 + $0xb0] sm:$0xf]
    %v4873 = vld [vmem:[#allocation6 + $0xb4] sm:$0xff]
    %v4874 = vld [vmem:[#allocation6 + $0xbc] sm:$0xf]
    %v4875 = vld [vmem:[%s11] sm:$0x7]
    %v4908 = vunpack.c.l.b16 %v4843
    %v4909 = vunpack.c.h.b16 %v4843
    %v4910 = vunpack.c.l.b16 %v4844
    %v4911 = vunpack.c.l.b16 %v4845
    %v4912 = vunpack.c.h.b16 %v4845
    %v4913 = vunpack.c.l.b16 %v4846
    %v4914 = vunpack.c.l.b16 %v4847
    %v4915 = vunpack.c.h.b16 %v4847
    %v4916 = vunpack.c.l.b16 %v4848
    %v4917 = vunpack.c.l.b16 %v4849
    %v4918 = vunpack.c.h.b16 %v4849
    %v4919 = vunpack.c.l.b16 %v4850
    %v4920 = vunpack.c.l.b16 %v4851
    %v4921 = vunpack.c.h.b16 %v4851
    %v4922 = vunpack.c.l.b16 %v4852
    %v4923 = vunpack.c.l.b16 %v4853
    %v4924 = vunpack.c.h.b16 %v4853
    %v4925 = vunpack.c.l.b16 %v4854
    %v4926 = vunpack.c.l.b16 %v4855
    %v4927 = vunpack.c.h.b16 %v4855
    %v4928 = vunpack.c.l.b16 %v4856
    %v4929 = vunpack.c.l.b16 %v4857
    %v4930 = vunpack.c.h.b16 %v4857
    %v4931 = vunpack.c.l.b16 %v4858
    %v4932 = vunpack.c.l.b16 %v4859
    %v4933 = vunpack.c.h.b16 %v4859
    %v4934 = vunpack.c.l.b16 %v4860
    %v4935 = vunpack.c.l.b16 %v4861
    %v4936 = vunpack.c.h.b16 %v4861
    %v4937 = vunpack.c.l.b16 %v4862
    %v4938 = vunpack.c.l.b16 %v4863
    %v4939 = vunpack.c.h.b16 %v4863
    %v4940 = vunpack.c.l.b16 %v4864
    %v4941 = vunpack.c.l.b16 %v4865
    %v4942 = vunpack.c.h.b16 %v4865
    %v4943 = vunpack.c.l.b16 %v4866
    %v4944 = vunpack.c.l.b16 %v4867
    %v4945 = vunpack.c.h.b16 %v4867
    %v4946 = vunpack.c.l.b16 %v4868
    %v4947 = vunpack.c.l.b16 %v4869
    %v4948 = vunpack.c.h.b16 %v4869
    %v4949 = vunpack.c.l.b16 %v4870
    %v4950 = vunpack.c.l.b16 %v4871
    %v4951 = vunpack.c.h.b16 %v4871
    %v4952 = vunpack.c.l.b16 %v4872
    %v4953 = vunpack.c.l.b16 %v4873
    %v4954 = vunpack.c.h.b16 %v4873
    %v4955 = vunpack.c.l.b16 %v4874
    %v4956 = vpack.c.b16 %v4911, %v4908
    %v4957 = vpack.c.b16 %v4912, %v4909
    %v4958 = vpack.c.b16 %v4913, %v4910
    %v4959 = vpack.c.b16 %v4917, %v4914
    %v4960 = vpack.c.b16 %v4918, %v4915
    %v4961 = vpack.c.b16 %v4919, %v4916
    %v4962 = vpack.c.b16 %v4923, %v4920
    %v4963 = vpack.c.b16 %v4924, %v4921
    %v4964 = vpack.c.b16 %v4925, %v4922
    %v4965 = vpack.c.b16 %v4929, %v4926
    %v4966 = vpack.c.b16 %v4930, %v4927
    %v4967 = vpack.c.b16 %v4931, %v4928
    %v4968 = vpack.c.b16 %v4935, %v4932
    %v4969 = vpack.c.b16 %v4936, %v4933
    %v4970 = vpack.c.b16 %v4937, %v4934
    %v4971 = vpack.c.b16 %v4941, %v4938
    %v4972 = vpack.c.b16 %v4942, %v4939
    %v4973 = vpack.c.b16 %v4943, %v4940
    %v4974 = vpack.c.b16 %v4947, %v4944
    %v4975 = vpack.c.b16 %v4948, %v4945
    %v4976 = vpack.c.b16 %v4949, %v4946
    %v4977 = vpack.c.b16 %v4953, %v4950
    %v4978 = vpack.c.b16 %v4954, %v4951
    %v4979 = vpack.c.b16 %v4955, %v4952
    %v5005 = vperm.slane %v4875, 0
    %v5006 = vperm.slane %v4875, 1
    %v5007 = vperm.slane %v4875, 2
    %5011 = vmatpush.bf16.msra.mxu0 %v4977
    %5012 = vmatpush.bf16.msra.mxu0 %v4974
    %5013 = vmatpush.bf16.msra.mxu0 %v4971
    %5014 = vmatpush.bf16.msra.mxu0 %v4968
    %5015 = vmatpush.bf16.msra.mxu0 %v4965
    %5016 = vmatpush.bf16.msra.mxu0 %v4962
    %5017 = vmatpush.bf16.msra.mxu0 %v4959
    %5018 = vmatpush.bf16.msra.mxu0 %v4956
    %5019 = vmatmul.bf16.gmra.mxu0 %v4842
    %v5020 = vpop.f32.mrf.mxu0
    %v5021 = vadd.f32 %v5005, %v5020
    %v5022 = vpop.f32.mrf.mxu0
    %5023 = vdwg.mxu0
    %5024 = vmatpush.bf16.msra.mxu0 %v4978
    %5025 = vmatpush.bf16.msra.mxu0 %v4975
    %5026 = vmatpush.bf16.msra.mxu0 %v4972
    %5027 = vmatpush.bf16.msra.mxu0 %v4969
    %5028 = vmatpush.bf16.msra.mxu0 %v4966
    %5029 = vmatpush.bf16.msra.mxu0 %v4963
    %5030 = vmatpush.bf16.msra.mxu0 %v4960
    %5031 = vmatpush.bf16.msra.mxu0 %v4957
    %5032 = vmatmul.bf16.gmra.mxu0 %v4842
    %v5033 = vpop.f32.mrf.mxu0
    %v5034 = vadd.f32 %v5006, %v5033
    %v5035 = vpop.f32.mrf.mxu0
    %5036 = vdwg.mxu0
    %5037 = vmatpush.bf16.msra.mxu0 %v4979
    %5038 = vmatpush.bf16.msra.mxu0 %v4976
    %5039 = vmatpush.bf16.msra.mxu0 %v4973
    %5040 = vmatpush.bf16.msra.mxu0 %v4970
    %5041 = vmatpush.bf16.msra.mxu0 %v4967
    %5042 = vmatpush.bf16.msra.mxu0 %v4964
    %5043 = vmatpush.bf16.msra.mxu0 %v4961
    %5044 = vmatpush.bf16.msra.mxu0 %v4958
    %5045 = vmatmul.bf16.gmra.mxu0 %v4842
    %v5046 = vpop.f32.mrf.mxu0
    %v5047 = vadd.f32 %v5007, %v5046
    %v5048 = vpop.f32.mrf.mxu0
    %5049 = vdwg.mxu0
    %v5053 = vrot.slane %v5034, 7
    %v5054 = vrot.slane %v5047, 6
    %v5055 = vsel %vm4375, %v5021, %v5053
    %v5056 = vsel %vm4377, %v5055, %v5054
    %v5058 = vlaneseq
    %vm5059 = vcmp.ge.s32.totalorder %v5058, 0
    %vm5060 = vcmp.lt.s32.totalorder %v5058, 384
    %vm5061 = vmand %vm5059, %vm5060
    %5062 = vst.msk [vmem:[#allocation22] sm:$0x7] %vm5061, %v5056
    // Predicated region
    $region122: #{tpu_custom_call.1} parent=1 // pred_check
      _
    $region123: #{tpu_custom_call.1} parent=1 // pred_check_branch
      %5064 = sbr.rel (0) target = $region125
    $region124: #{tpu_custom_call.1} parent=1 // pred_region
      %5066 = vsyncadd [#allocation11], 0
      %s5068 = sshll.u32 [#allocation22], 4
      %s5069 = int_to_ptr.vmem [resolvable:$true] %s5068
      %s5070 = sshll.u32 %s16, 4
      %s5071 = int_to_ptr.hbm [resolvable:$true] %s5070
      %5073 = dma.vmem_to_hbm [thread:$0]  %s5069, 48, %s5071, [#allocation11]
    $region125: #{tpu_custom_call.1} parent=1 // pred_fallthru
      _
    // Predicated region
    $region126: #{tpu_custom_call.1} parent=1 // pred_check
      _
    $region127: #{tpu_custom_call.1} parent=1 // pred_check_branch
      %5075 = sbr.rel (0) target = $region129
    $region128: #{tpu_custom_call.1} parent=1 // pred_region
      %5077 = vsyncadd [#allocation24], 0
      %s5079 = sshll.u32 [#allocation23], 4
      %s5080 = int_to_ptr.vmem [resolvable:$true] %s5079
      %s5081 = sshll.u32 %s17, 4
      %s5082 = int_to_ptr.hbm [resolvable:$true] %s5081
      %5084 = dma.vmem_to_hbm [thread:$0]  %s5080, 64, %s5082, [#allocation24]
    $region129: #{tpu_custom_call.1} parent=1 // pred_fallthru
      _
    // Predicated region
    $region130: #{tpu_custom_call.1} parent=1 // pred_check
      _
    $region131: #{tpu_custom_call.1} parent=1 // pred_check_branch
      %5086 = sbr.rel (0) target = $region133
    $region132: #{tpu_custom_call.1} parent=1 // pred_region
      %5088 = vsyncadd [#allocation24], 0
      %s5090 = sshll.u32 [#allocation25], 4
      %s5091 = int_to_ptr.vmem [resolvable:$true] %s5090
      %s5092 = sshll.u32 %s18, 4
      %s5093 = int_to_ptr.hbm [resolvable:$true] %s5092
      %5095 = dma.vmem_to_hbm [thread:$0]  %s5091, 16, %s5093, [#allocation24]
    $region133: #{tpu_custom_call.1} parent=1 // pred_fallthru
      _
    // Predicated region
    $region134: #{tpu_custom_call.1} parent=1 // pred_check
      _
    $region135: #{tpu_custom_call.1} parent=1 // pred_check_branch
      %5097 = sbr.rel (0) target = $region137
    $region136: #{tpu_custom_call.1} parent=1 // pred_region
      %5099 = dma.done [#allocation11], 48
    $region137: #{tpu_custom_call.1} parent=1 // pred_fallthru
      _
    // Predicated region
    $region138: #{tpu_custom_call.1} parent=1 // pred_check
      _
    $region139: #{tpu_custom_call.1} parent=1 // pred_check_branch
      %5101 = sbr.rel (0) target = $region141
    $region140: #{tpu_custom_call.1} parent=1 // pred_region
      %5103 = dma.done [#allocation24], 64
    $region141: #{tpu_custom_call.1} parent=1 // pred_fallthru
      _
    // Predicated region
    $region142: #{tpu_custom_call.1} parent=1 // pred_check
      _
    $region143: #{tpu_custom_call.1} parent=1 // pred_check_branch
      %5105 = sbr.rel (0) target = $region145
    $region144: #{tpu_custom_call.1} parent=1 // pred_region
      %5107 = dma.done [#allocation24], 16
    $region145: #{tpu_custom_call.1} parent=1 // pred_fallthru
      _
    %5108 = vsyncpa [#allocation10], 1
    %5109 = vsyncpa [#allocation15], 1
    %5110 = vsyncpa [#allocation18], 1
    %5111 = vsyncpa [#allocation21], 1
    %5112 = vsyncpa [#allocation11], 1
    %5113 = vsyncpa [#allocation24], 1
    %5114 = vsyncpa [#allocation12], 1
  %5115 = vsyncmov [#allocation7]
  %s5116 = vpop.sfrf %5115
  %p5117 = scmp.eq.s32.totalorder %s5116, 0
  %p5118 = pneg %p5117
  %5120 = shalt.err (%p5118)
  %s5121 = scalar_lea.sflag [#allocation7], 1
  %5122 = vsyncmov %s5121
  %s5123 = vpop.sfrf %5122
  %p5124 = scmp.eq.s32.totalorder %s5123, 0
  %p5125 = pneg %p5124
  %5127 = shalt.err (%p5125)
  %s5128 = scalar_lea.sflag [#allocation7], 2
  %5129 = vsyncmov %s5128
  %s5130 = vpop.sfrf %5129
  %p5131 = scmp.eq.s32.totalorder %s5130, 0
  %p5132 = pneg %p5131
  %5134 = shalt.err (%p5132)
  %s5135 = scalar_lea.sflag [#allocation7], 3
  %5136 = vsyncmov %s5135
  %s5137 = vpop.sfrf %5136
  %p5138 = scmp.eq.s32.totalorder %s5137, 0
  %p5139 = pneg %p5138
  %5141 = shalt.err (%p5139)
  %s5142 = scalar_lea.sflag [#allocation7], 4
  %5143 = vsyncmov %s5142
  %s5144 = vpop.sfrf %5143
  %p5145 = scmp.eq.s32.totalorder %s5144, 0
  %p5146 = pneg %p5145
  %5148 = shalt.err (%p5146)
  %s5149 = scalar_lea.sflag [#allocation7], 5
  %5150 = vsyncmov %s5149
  %s5151 = vpop.sfrf %5150
  %p5152 = scmp.eq.s32.totalorder %s5151, 0
  %p5153 = pneg %p5152
  %5155 = shalt.err (%p5153)
  %s5156 = scalar_lea.sflag [#allocation7], 6
  %5157 = vsyncmov %s5156
  %s5158 = vpop.sfrf %5157
  %p5159 = scmp.eq.s32.totalorder %s5158, 0
  %p5160 = pneg %p5159
  %5162 = shalt.err (%p5160)
  %s5163 = scalar_lea.sflag [#allocation7], 7
  %5164 = vsyncmov %s5163
  %s5165 = vpop.sfrf %5164
  %p5166 = scmp.eq.s32.totalorder %s5165, 0
  %p5167 = pneg %p5166
  %5169 = shalt.err (%p5167)
  %5170 = vsyncmov [#allocation8]
  %s5171 = vpop.sfrf %5170
  %p5172 = scmp.eq.s32.totalorder %s5171, 0
  %p5173 = pneg %p5172
  %5175 = shalt.err (%p5173)
  %s5176 = scalar_lea.sflag [#allocation8], 1
  %5177 = vsyncmov %s5176
  %s5178 = vpop.sfrf %5177
  %p5179 = scmp.eq.s32.totalorder %s5178, 0
  %p5180 = pneg %p5179
  %5182 = shalt.err (%p5180)
  %s5183 = scalar_lea.sflag [#allocation8], 2
  %5184 = vsyncmov %s5183
  %s5185 = vpop.sfrf %5184
  %p5186 = scmp.eq.s32.totalorder %s5185, 0
  %p5187 = pneg %p5186
  %5189 = shalt.err (%p5187)
  %s5190 = scalar_lea.sflag [#allocation8], 3
  %5191 = vsyncmov %s5190
  %s5192 = vpop.sfrf %5191
  %p5193 = scmp.eq.s32.totalorder %s5192, 0
  %p5194 = pneg %p5193
  %5196 = shalt.err (%p5194)

</llo_original>
